<compile_context>
chip_gen: v7x
topology: tpu7x:2x2x1
jax: 0.10.0
libtpu: 0.0.40
codegen_flags: <defaults>
</compile_context>

<pallas_src>
import functools

import jax
import jax.numpy as jnp
from jax import lax
from jax.experimental import pallas as pl
from jax.experimental.pallas import tpu as pltpu

_LANE = 128
_SUB = 8


def _round_up(x, m):
    return ((x + m - 1) // m) * m


@functools.lru_cache(maxsize=1)
def _vmem_limit_bytes():
    cap = None
    try:
        cap = getattr(pltpu.get_tpu_info(), "vmem_capacity_bytes", None)
    except Exception:
        cap = None
    if not isinstance(cap, int) or cap <= 0:
        cap = 64 * 1024 * 1024          # assume the smallest per-TC VMEM (v7x)
    return int(min(cap * 5 // 8, 100 * 1024 * 1024))


def _fold_bn(gamma, beta, mean, var, eps=1e-5):
    scale = gamma / jnp.sqrt(var + eps)
    shift = beta - mean * scale
    return scale.reshape(1, -1), shift.reshape(1, -1)


# ---------------------------------------------------------------------------
# Fused kernel: one grid step == Nb batch elements, everything stays in VMEM.
# mode: "fused_sc"  conv shortcut, stride==1 (shortcut fused into conv1 matmul)
#       "conv_sc"   conv shortcut, stride!=1
#       "identity"  identity shortcut
# ---------------------------------------------------------------------------
def _make_fused_kernel(Nb, H, W, stride, mode):
    Ho = (H + 2 - 3) // stride + 1
    Wo = (W + 2 - 3) // stride + 1

    def kernel(*refs):
        if mode == "conv_sc":
            (x_ref, w1_ref, w2_ref, w3_ref, wsc_ref,
             s1_ref, b1_ref, b2_ref, b3_ref, o_ref, a2p_ref) = refs
        else:
            (x_ref, w1_ref, w2_ref, w3_ref,
             s1_ref, b1_ref, b2_ref, b3_ref, o_ref, a2p_ref) = refs
            wsc_ref = None

        Cin = x_ref.shape[-1]
        P = b2_ref.shape[-1]            # padded planes
        Cout = o_ref.shape[-1]          # padded out_planes
        M = Nb * H * W
        Mo = Nb * Ho * Wo

        # ---- stage 1: a1 = relu(bn1(x))   (f32 elementwise; x may be bf16 I/O)
        xf = x_ref[...].astype(jnp.float32)                     # (Nb, H, W, Cin)
        a1 = jnp.maximum(xf * s1_ref[...] + b1_ref[...], 0.0)
        a1_bf = a1.reshape(M, Cin).astype(jnp.bfloat16)         # single cast, reused

        # ---- conv1 (1x1); bn2 scale folded into w1 cols.  In "fused_sc" mode the
        #      shortcut 1x1 conv shares this matmul (w1 ‖ wsc concatenated in N).
        z = jnp.dot(a1_bf, w1_ref[...], preferred_element_type=jnp.float32)
        if mode == "fused_sc":
            z1, sc = z[:, :P], z[:, P:]
        else:
            z1, sc = z, None
        a2 = jnp.maximum(z1 + b2_ref[...], 0.0)

        # ---- park a2 in the halo scratch.
        # Zero only the 1-wide halo strips (rows 0 / H+1, cols 0 / W+1); the
        # interior is fully overwritten each step.  Per-step strips (instead of a
        # once-only full zero) stay correct under megacore grid splitting.
        zrow = jnp.zeros((Nb, 1, W + 2, P), a2p_ref.dtype)
        zcol = jnp.zeros((Nb, H, 1, P), a2p_ref.dtype)
        a2p_ref[:, 0:1, 0:W + 2, :] = zrow
        a2p_ref[:, H + 1:H + 2, 0:W + 2, :] = zrow
        a2p_ref[:, 1:H + 1, 0:1, :] = zcol
        a2p_ref[:, 1:H + 1, W + 1:W + 2, :] = zcol
        a2p_ref[:, 1:H + 1, 1:W + 1, :] = (
            a2.reshape(Nb, H, W, P).astype(a2p_ref.dtype))

        # ---- conv2 (3x3, pad=1, stride); bn3 scale folded into w2 cols
        acc = jnp.zeros((Mo, P), jnp.float32)
        if stride == 1:
            # K-stacked: 3 matmuls with K = 3*P (fills 256-deep MXU on v6e/v7x)
            for kh in range(3):
                tap = jnp.concatenate(
                    [a2p_ref[:, kh:kh + Ho, kw:kw + Wo, :] for kw in range(3)],
                    axis=-1)
                acc = acc + jnp.dot(tap.reshape(Mo, 3 * P), w2_ref[kh],
                                    preferred_element_type=jnp.float32)
        else:
            # TODO(synk): deinterleave even/odd columns once at the a2 store
            #             instead of 9 sublane-strided tap reads.
            for kh in range(3):
                for kw in range(3):
                    tap = a2p_ref[:, pl.ds(kh, Ho, stride),
                                  pl.ds(kw, Wo, stride), :]
                    acc = acc + jnp.dot(tap.reshape(Mo, P), w2_ref[kh, kw],
                                        preferred_element_type=jnp.float32)

        # ---- conv3 (1x1) after relu(+b3)
        a3 = jnp.maximum(acc + b3_ref[...], 0.0)
        y = jnp.dot(a3.astype(jnp.bfloat16), w3_ref[...],
                    preferred_element_type=jnp.float32)          # (Mo, Cout)

        # ---- shortcut + residual add
        if mode == "fused_sc":
            out = y + sc
        elif mode == "conv_sc":
            xs = x_ref[:, pl.ds(0, Ho, stride), pl.ds(0, Wo, stride), :]
            a1s = jnp.maximum(xs.astype(jnp.float32) * s1_ref[...] + b1_ref[...],
                              0.0)
            out = y + jnp.dot(a1s.reshape(Mo, Cin).astype(jnp.bfloat16),
                              wsc_ref[...], preferred_element_type=jnp.float32)
        else:  # identity: Cin == Cout (both padded to the same lane width)
            out = y + xf.reshape(M, Cin)

        o_ref[...] = out.reshape(Nb, Ho, Wo, Cout).astype(o_ref.dtype)

    return kernel


# ---------------------------------------------------------------------------
# Wrapper: BN folding, lane padding, Nb selection, pallas_call plumbing
# ---------------------------------------------------------------------------
def preact_bottleneck_forward_nhwc(x, params, *, stride, io_dtype=jnp.float32):
    """x: [N, H, W, Cin] -> [N, Ho, Wo, out_planes] (NHWC end to end)."""
    N, H, W, Cin = x.shape
    planes = params["w1"].shape[0]
    out_planes = params["w3"].shape[0]
    has_sc = "wsc" in params

    Pp = _round_up(planes, _LANE)
    Coutp = _round_up(out_planes, _LANE)
    Ho = (H + 2 - 3) // stride + 1
    Wo = (W + 2 - 3) // stride + 1
    Wp2 = _round_up(W + 2, _SUB)

    s1, b1 = _fold_bn(*params["bn1"])
    s2, b2 = _fold_bn(*params["bn2"])
    s3, b3 = _fold_bn(*params["bn3"])

    if has_sc:
        # lane-pad Cin only when it is large enough that dense bn1 vregs and
        # MXU K-fill outweigh the extra x DMA bytes.
        Cin_k = _round_up(Cin, _LANE) if Cin >= 64 else Cin
    else:
        # identity shortcut (stride==1, Cin==out_planes): share the padded output
        # lane width so the in-kernel residual add is lane-dense.
        Cin_k = Coutp
    pad_c = Cin_k - Cin
    if pad_c:
        x_k = jnp.pad(x, ((0, 0), (0, 0), (0, 0), (0, pad_c)))
        s1k = jnp.pad(s1, ((0, 0), (0, pad_c)))
        b1k = jnp.pad(b1, ((0, 0), (0, pad_c)))
    else:
        x_k, s1k, b1k = x, s1, b1
    x_k = x_k.astype(io_dtype)   # bf16 I/O halves activation HBM traffic (v5e/v6e)

    # PyTorch conv weights are [out, in, kh, kw]; fold output-side BN scales into
    # weight columns, zero-pad to lane multiples, cast to bf16 (exact padding).
    w1 = params["w1"][:, :, 0, 0].T * s2                              # (Cin, planes)
    w1 = jnp.pad(w1, ((0, Cin_k - Cin), (0, Pp - planes)))
    mode = "identity"
    wsc = None
    if has_sc:
        wsc = params["wsc"][:, :, 0, 0].T                             # (Cin, out_planes)
        wsc = jnp.pad(wsc, ((0, Cin_k - Cin), (0, Coutp - out_planes)))
        if stride == 1:
            mode = "fused_sc"       # conv1 and shortcut share one matmul
            w1 = jnp.concatenate([w1, wsc], axis=1)
        else:
            mode = "conv_sc"
    w1 = w1.astype(jnp.bfloat16)

    w2 = jnp.transpose(params["w2"], (2, 3, 1, 0)) * s3.reshape(1, 1, 1, -1)
    w2 = jnp.pad(w2, ((0, 0), (0, 0),
                      (0, Pp - planes), (0, Pp - planes))).astype(jnp.bfloat16)
    if stride == 1:
        w2 = w2.reshape(3, 3 * Pp, Pp)   # kw taps stacked along K (matches tap concat)

    w3 = params["w3"][:, :, 0, 0].T
    w3 = jnp.pad(w3, ((0, Pp - planes), (0, Coutp - out_planes))).astype(jnp.bfloat16)

    b2p = jnp.pad(b2, ((0, 0), (0, Pp - planes)))
    b3p = jnp.pad(b3, ((0, 0), (0, Pp - planes)))

    # ---- multi-image grid blocks: fill MXU rows when the spatial map is small
    vmem_limit = _vmem_limit_bytes()
    io_bytes = jnp.dtype(io_dtype).itemsize
    per_img = (2 * H * W * Cin_k * io_bytes            # x block, double-buffered
               + 2 * Ho * Wo * Coutp * io_bytes        # out block, double-buffered
               + (H + 2) * Wp2 * Pp * 2                # a2 halo scratch (bf16)
               + H * W * (Cin_k + Pp + Coutp) * 4      # f32 temporaries
               + Ho * Wo * 4 * Pp * 4)
    budget = vmem_limit // 2
    Nb = 1
    for cand in range(1, N + 1):
        if N % cand:
            continue
        if cand * per_img > budget:
            break
        Nb = cand
        if cand * Ho * Wo >= 256:       # enough MXU rows
            break

    kernel = _make_fused_kernel(Nb, H, W, stride, mode)

    def _const_spec(shape):
        idx = lambda n, _nd=len(shape): (0,) * _nd
        buffered = getattr(pl, "Buffered", None)
        if buffered is not None:
            try:
                # resident weights / BN rows: no point double-buffering them
                return pl.BlockSpec(shape, idx, pipeline_mode=buffered(1))
            except TypeError:
                pass
        return pl.BlockSpec(shape, idx)

    inputs = [x_k, w1, w2, w3]
    in_specs = [
        pl.BlockSpec((Nb, H, W, Cin_k), lambda n: (n, 0, 0, 0)),
        _const_spec(tuple(w1.shape)),
        _const_spec(tuple(w2.shape)),
        _const_spec(tuple(w3.shape)),
    ]
    if mode == "conv_sc":
        inputs.append(wsc.astype(jnp.bfloat16))
        in_specs.append(_const_spec(tuple(wsc.shape)))
    inputs += [s1k, b1k, b2p, b3p]
    in_specs += [_const_spec((1, Cin_k)), _const_spec((1, Cin_k)),
                 _const_spec((1, Pp)), _const_spec((1, Pp))]

    out_p = pl.pallas_call(
        kernel,
        out_shape=jax.ShapeDtypeStruct((N, Ho, Wo, Coutp), io_dtype),
        grid_spec=pltpu.PrefetchScalarGridSpec(
            num_scalar_prefetch=0,
            grid=(N // Nb,),
            in_specs=in_specs,
            out_specs=pl.BlockSpec((Nb, Ho, Wo, Coutp), lambda n: (n, 0, 0, 0)),
            scratch_shapes=[pltpu.VMEM((Nb, H + 2, Wp2, Pp), jnp.bfloat16)],
        ),
        compiler_params=pltpu.CompilerParams(
            dimension_semantics=("parallel",),   # megacore split on v7x
            vmem_limit_bytes=vmem_limit,
        ),
    )(*inputs)

    if Coutp == out_planes:
        return out_p                      # no trailing slice -> no extra HBM pass
    return out_p[..., :out_planes]        # padded cols are exact zeros


def preact_bottleneck_forward(x_nchw, params, *, stride, io_dtype=jnp.float32):
    """NCHW convenience wrapper matching the PyTorch module's layout."""
    x = jnp.transpose(x_nchw, (0, 2, 3, 1))
    out = preact_bottleneck_forward_nhwc(x, params, stride=stride,
                                         io_dtype=io_dtype)
    return jnp.transpose(out, (0, 3, 1, 2))


# ---------------------------------------------------------------------------
# Parameter init (PyTorch layouts) + plain-JAX reference
# ---------------------------------------------------------------------------
def init_params(key, in_planes, planes, stride, expansion=4):
    ks = jax.random.split(key, 8)

    def bn(k, c):
        k1, k2, k3, k4 = jax.random.split(k, 4)
        gamma = 1.0 + 0.1 * jax.random.normal(k1, (c,), jnp.float32)
        beta = 0.1 * jax.random.normal(k2, (c,), jnp.float32)
        mean = 0.1 * jax.random.normal(k3, (c,), jnp.float32)
        var = 0.5 + 0.5 * jnp.abs(jax.random.normal(k4, (c,), jnp.float32))
        return (gamma, beta, mean, var)

    out_planes = expansion * planes
    p = {
        "bn1": bn(ks[0], in_planes),
        "bn2": bn(ks[1], planes),
        "bn3": bn(ks[2], planes),
        "w1": 0.1 * jax.random.normal(ks[3], (planes, in_planes, 1, 1), jnp.float32),
        "w2": 0.1 * jax.random.normal(ks[4], (planes, planes, 3, 3), jnp.float32),
        "w3": 0.1 * jax.random.normal(ks[5], (out_planes, planes, 1, 1), jnp.float32),
    }
    if stride != 1 or in_planes != out_planes:
        p["wsc"] = 0.1 * jax.random.normal(
            ks[6], (out_planes, in_planes, 1, 1), jnp.float32)
    return p


def ref_forward(x_nchw, params, *, stride):
    x = jnp.transpose(x_nchw, (0, 2, 3, 1))

    def bnrelu(t, bnp):
        g, b, m, v = bnp
        return jnp.maximum((t - m) / jnp.sqrt(v + 1e-5) * g + b, 0.0)

    def conv(t, w_torch, s, pad):
        w = jnp.transpose(w_torch, (2, 3, 1, 0))  # HWIO
        return lax.conv_general_dilated(
            t, w, (s, s), ((pad, pad), (pad, pad)),
            dimension_numbers=("NHWC", "HWIO", "NHWC"),
            precision=lax.Precision.HIGHEST)

    a1 = bnrelu(x, params["bn1"])
    sc = conv(a1, params["wsc"], stride, 0) if "wsc" in params else x
    z1 = conv(a1, params["w1"], 1, 0)
    z2 = conv(bnrelu(z1, params["bn2"]), params["w2"], stride, 1)
    out = conv(bnrelu(z2, params["bn3"]), params["w3"], 1, 0) + sc
    return jnp.transpose(out, (0, 3, 1, 2))


if __name__ == "__main__":
    key = jax.random.PRNGKey(0)
    N = 2

    configs = [
        # (in_planes, planes, stride, H, io_dtype, tol)
        (4, 4, 1, 16, jnp.float32, 2e-2),    # conv shortcut fused into conv1 matmul
        (16, 4, 1, 16, jnp.float32, 2e-2),   # identity shortcut
        (16, 4, 1, 8, jnp.float32, 2e-2),    # small map -> multi-image block (Nb=2)
        (16, 4, 1, 16, jnp.bfloat16, 3e-2),  # bf16 activation I/O (HBM-bound chips)
    ]

    for in_planes, planes, stride, H, io_dtype, tol in configs:
        key, kx, kp = jax.random.split(key, 3)
        x = jax.random.normal(kx, (N, in_planes, H, H), jnp.float32)
        params = init_params(kp, in_planes, planes, stride)

        fwd = jax.jit(functools.partial(preact_bottleneck_forward,
                                        stride=stride, io_dtype=io_dtype))
        out = jax.block_until_ready(fwd(x, params))

        # reference sees the same (possibly bf16-quantized) activations
        x_ref_in = x.astype(io_dtype).astype(jnp.float32)
        ref = jax.block_until_ready(ref_forward(x_ref_in, params, stride=stride))

        Ho = (H + 2 - 3) // stride + 1
        assert out.shape == (N, 4 * planes, Ho, Ho), out.shape
        outf = out.astype(jnp.float32)
        err = float(jnp.max(jnp.abs(outf - ref)))
        assert jnp.allclose(outf, ref, rtol=tol, atol=tol), err

    print("KERNEL_OK")
</pallas_src>

<mosaic_0001>
module attributes {stable_mosaic.version = 11 : i64} {
  func.func @kernel(%arg0: i32, %arg1: memref<1x16x16x4xf32, #tpu.memory_space<vmem>>, %arg2: memref<4x256xbf16, #tpu.memory_space<vmem>>, %arg3: memref<3x384x128xbf16, #tpu.memory_space<vmem>>, %arg4: memref<128x128xbf16, #tpu.memory_space<vmem>>, %arg5: memref<1x4xf32, #tpu.memory_space<vmem>>, %arg6: memref<1x4xf32, #tpu.memory_space<vmem>>, %arg7: memref<1x128xf32, #tpu.memory_space<vmem>>, %arg8: memref<1x128xf32, #tpu.memory_space<vmem>>, %arg9: memref<1x16x16x128xf32, #tpu.memory_space<vmem>>, %arg10: memref<1x18x24x128xbf16, #tpu.memory_space<vmem>>) attributes {dimension_semantics = [#tpu.dimension_semantics<parallel>], iteration_bounds = array<i64: 2>, scalar_prefetch = 0 : i64, scratch_operands = 1 : i64, tpu.core_type = #tpu.core_type<tc>, window_params = [{transform_indices = @transform_0, window_bounds = array<i64: 1, 16, 16, 4>}, {pipeline_mode = #tpu.pipeline_mode<synchronous>, transform_indices = @transform_1, window_bounds = array<i64: 4, 256>}, {pipeline_mode = #tpu.pipeline_mode<synchronous>, transform_indices = @transform_2, window_bounds = array<i64: 3, 384, 128>}, {pipeline_mode = #tpu.pipeline_mode<synchronous>, transform_indices = @transform_3, window_bounds = array<i64: 128, 128>}, {pipeline_mode = #tpu.pipeline_mode<synchronous>, transform_indices = @transform_4, window_bounds = array<i64: 1, 4>}, {pipeline_mode = #tpu.pipeline_mode<synchronous>, transform_indices = @transform_5, window_bounds = array<i64: 1, 4>}, {pipeline_mode = #tpu.pipeline_mode<synchronous>, transform_indices = @transform_6, window_bounds = array<i64: 1, 128>}, {pipeline_mode = #tpu.pipeline_mode<synchronous>, transform_indices = @transform_7, window_bounds = array<i64: 1, 128>}, {transform_indices = @transform_8, window_bounds = array<i64: 1, 16, 16, 128>}]} {
    %c0 = arith.constant 0 : index
    %c0_0 = arith.constant 0 : index
    %c0_1 = arith.constant 0 : index
    %c0_2 = arith.constant 0 : index
    %0 = vector.load %arg1[%c0, %c0_0, %c0_1, %c0_2] : memref<1x16x16x4xf32, #tpu.memory_space<vmem>>, vector<1x16x16x4xf32>
    %c0_3 = arith.constant 0 : index
    %c0_4 = arith.constant 0 : index
    %1 = vector.load %arg5[%c0_3, %c0_4] : memref<1x4xf32, #tpu.memory_space<vmem>>, vector<1x4xf32>
    %2 = vector.shape_cast %1 : vector<1x4xf32> to vector<1x1x1x4xf32>
    %3 = vector.broadcast %2 : vector<1x1x1x4xf32> to vector<1x16x16x4xf32>
    %4 = arith.mulf %0, %3 : vector<1x16x16x4xf32>
    %c0_5 = arith.constant 0 : index
    %c0_6 = arith.constant 0 : index
    %5 = vector.load %arg6[%c0_5, %c0_6] : memref<1x4xf32, #tpu.memory_space<vmem>>, vector<1x4xf32>
    %6 = vector.shape_cast %5 : vector<1x4xf32> to vector<1x1x1x4xf32>
    %7 = vector.broadcast %6 : vector<1x1x1x4xf32> to vector<1x16x16x4xf32>
    %8 = arith.addf %4, %7 : vector<1x16x16x4xf32>
    %cst = arith.constant 0.000000e+00 : f32
    %9 = vector.broadcast %cst : f32 to vector<1x16x16x4xf32>
    %10 = arith.maximumf %8, %9 : vector<1x16x16x4xf32>
    %11 = vector.shape_cast %10 : vector<1x16x16x4xf32> to vector<256x4xf32>
    %12 = arith.truncf %11 : vector<256x4xf32> to vector<256x4xbf16>
    %c0_7 = arith.constant 0 : index
    %c0_8 = arith.constant 0 : index
    %13 = vector.load %arg2[%c0_7, %c0_8] : memref<4x256xbf16, #tpu.memory_space<vmem>>, vector<4x256xbf16>
    %cst_9 = arith.constant dense<0.000000e+00> : vector<256x256xf32>
    %14 = tpu.matmul %12, %13, %cst_9 {dimension_numbers = #tpu.dot_dimension_numbers<[1], [0], [0], [1], [0, 0, 1, 1], [], []>} : vector<256x4xbf16>, vector<4x256xbf16>, vector<256x256xf32> -> vector<256x256xf32>
    %15 = vector.extract_strided_slice %14 {offsets = [0, 0], sizes = [256, 128], strides = [1, 1]} : vector<256x256xf32> to vector<256x128xf32>
    %16 = vector.extract_strided_slice %14 {offsets = [0, 128], sizes = [256, 128], strides = [1, 1]} : vector<256x256xf32> to vector<256x128xf32>
    %c0_10 = arith.constant 0 : index
    %c0_11 = arith.constant 0 : index
    %17 = vector.load %arg7[%c0_10, %c0_11] : memref<1x128xf32, #tpu.memory_space<vmem>>, vector<1x128xf32>
    %18 = vector.broadcast %17 : vector<1x128xf32> to vector<256x128xf32>
    %19 = arith.addf %15, %18 : vector<256x128xf32>
    %cst_12 = arith.constant 0.000000e+00 : f32
    %20 = vector.broadcast %cst_12 : f32 to vector<256x128xf32>
    %21 = arith.maximumf %19, %20 : vector<256x128xf32>
    %cst_13 = arith.constant 0.000000e+00 : bf16
    %22 = vector.broadcast %cst_13 : bf16 to vector<1x1x18x128xbf16>
    %cst_14 = arith.constant 0.000000e+00 : bf16
    %23 = vector.broadcast %cst_14 : bf16 to vector<1x16x1x128xbf16>
    %c0_15 = arith.constant 0 : index
    %c0_16 = arith.constant 0 : index
    %c0_17 = arith.constant 0 : index
    %c0_18 = arith.constant 0 : index
    %24 = vector.load %arg10[%c0_15, %c0_16, %c0_17, %c0_18] : memref<1x18x24x128xbf16, #tpu.memory_space<vmem>>, vector<1x1x18x128xbf16>
    tpu.vector_store %arg10[%c0_15, %c0_16, %c0_17, %c0_18], %22 {strides = array<i32>} : memref<1x18x24x128xbf16, #tpu.memory_space<vmem>>, vector<1x1x18x128xbf16>,
    %c0_19 = arith.constant 0 : index
    %c17 = arith.constant 17 : index
    %c0_20 = arith.constant 0 : index
    %c0_21 = arith.constant 0 : index
    %25 = vector.load %arg10[%c0_19, %c17, %c0_20, %c0_21] : memref<1x18x24x128xbf16, #tpu.memory_space<vmem>>, vector<1x1x18x128xbf16>
    tpu.vector_store %arg10[%c0_19, %c17, %c0_20, %c0_21], %22 {strides = array<i32>} : memref<1x18x24x128xbf16, #tpu.memory_space<vmem>>, vector<1x1x18x128xbf16>,
    %c0_22 = arith.constant 0 : index
    %c1 = arith.constant 1 : index
    %c0_23 = arith.constant 0 : index
    %c0_24 = arith.constant 0 : index
    %26 = vector.load %arg10[%c0_22, %c1, %c0_23, %c0_24] : memref<1x18x24x128xbf16, #tpu.memory_space<vmem>>, vector<1x16x1x128xbf16>
    tpu.vector_store %arg10[%c0_22, %c1, %c0_23, %c0_24], %23 {strides = array<i32>} : memref<1x18x24x128xbf16, #tpu.memory_space<vmem>>, vector<1x16x1x128xbf16>,
    %c0_25 = arith.constant 0 : index
    %c1_26 = arith.constant 1 : index
    %c17_27 = arith.constant 17 : index
    %c0_28 = arith.constant 0 : index
    %27 = vector.load %arg10[%c0_25, %c1_26, %c17_27, %c0_28] : memref<1x18x24x128xbf16, #tpu.memory_space<vmem>>, vector<1x16x1x128xbf16>
    tpu.vector_store %arg10[%c0_25, %c1_26, %c17_27, %c0_28], %23 {strides = array<i32>} : memref<1x18x24x128xbf16, #tpu.memory_space<vmem>>, vector<1x16x1x128xbf16>,
    %28 = vector.shape_cast %21 : vector<256x128xf32> to vector<1x16x16x128xf32>
    %29 = arith.truncf %28 : vector<1x16x16x128xf32> to vector<1x16x16x128xbf16>
    %c0_29 = arith.constant 0 : index
    %c1_30 = arith.constant 1 : index
    %c1_31 = arith.constant 1 : index
    %c0_32 = arith.constant 0 : index
    %30 = vector.load %arg10[%c0_29, %c1_30, %c1_31, %c0_32] : memref<1x18x24x128xbf16, #tpu.memory_space<vmem>>, vector<1x16x16x128xbf16>
    tpu.vector_store %arg10[%c0_29, %c1_30, %c1_31, %c0_32], %29 {strides = array<i32>} : memref<1x18x24x128xbf16, #tpu.memory_space<vmem>>, vector<1x16x16x128xbf16>,
    %cst_33 = arith.constant 0.000000e+00 : f32
    %31 = vector.broadcast %cst_33 : f32 to vector<256x128xf32>
    %c0_34 = arith.constant 0 : index
    %c0_35 = arith.constant 0 : index
    %c0_36 = arith.constant 0 : index
    %c0_37 = arith.constant 0 : index
    %32 = vector.load %arg10[%c0_34, %c0_35, %c0_36, %c0_37] : memref<1x18x24x128xbf16, #tpu.memory_space<vmem>>, vector<1x16x16x128xbf16>
    %c0_38 = arith.constant 0 : index
    %c0_39 = arith.constant 0 : index
    %c1_40 = arith.constant 1 : index
    %c0_41 = arith.constant 0 : index
    %33 = vector.load %arg10[%c0_38, %c0_39, %c1_40, %c0_41] : memref<1x18x24x128xbf16, #tpu.memory_space<vmem>>, vector<1x16x16x128xbf16>
    %c0_42 = arith.constant 0 : index
    %c0_43 = arith.constant 0 : index
    %c2 = arith.constant 2 : index
    %c0_44 = arith.constant 0 : index
    %34 = vector.load %arg10[%c0_42, %c0_43, %c2, %c0_44] : memref<1x18x24x128xbf16, #tpu.memory_space<vmem>>, vector<1x16x16x128xbf16>
    %35 = tpu.concatenate %32, %33, %34 in 3 : vector<1x16x16x128xbf16>, vector<1x16x16x128xbf16>, vector<1x16x16x128xbf16> -> vector<1x16x16x384xbf16>
    %36 = vector.shape_cast %35 : vector<1x16x16x384xbf16> to vector<256x384xbf16>
    %c0_45 = arith.constant 0 : index
    %c0_46 = arith.constant 0 : index
    %c0_47 = arith.constant 0 : index
    %37 = vector.load %arg3[%c0_45, %c0_46, %c0_47] : memref<3x384x128xbf16, #tpu.memory_space<vmem>>, vector<1x384x128xbf16>
    %38 = vector.shape_cast %37 : vector<1x384x128xbf16> to vector<384x128xbf16>
    %cst_48 = arith.constant dense<0.000000e+00> : vector<256x128xf32>
    %39 = tpu.matmul %36, %38, %cst_48 {dimension_numbers = #tpu.dot_dimension_numbers<[1], [0], [0], [1], [0, 0, 1, 1], [], []>} : vector<256x384xbf16>, vector<384x128xbf16>, vector<256x128xf32> -> vector<256x128xf32>
    %40 = arith.addf %31, %39 : vector<256x128xf32>
    %c0_49 = arith.constant 0 : index
    %c1_50 = arith.constant 1 : index
    %c0_51 = arith.constant 0 : index
    %c0_52 = arith.constant 0 : index
    %41 = vector.load %arg10[%c0_49, %c1_50, %c0_51, %c0_52] : memref<1x18x24x128xbf16, #tpu.memory_space<vmem>>, vector<1x16x16x128xbf16>
    %c0_53 = arith.constant 0 : index
    %c1_54 = arith.constant 1 : index
    %c1_55 = arith.constant 1 : index
    %c0_56 = arith.constant 0 : index
    %42 = vector.load %arg10[%c0_53, %c1_54, %c1_55, %c0_56] : memref<1x18x24x128xbf16, #tpu.memory_space<vmem>>, vector<1x16x16x128xbf16>
    %c0_57 = arith.constant 0 : index
    %c1_58 = arith.constant 1 : index
    %c2_59 = arith.constant 2 : index
    %c0_60 = arith.constant 0 : index
    %43 = vector.load %arg10[%c0_57, %c1_58, %c2_59, %c0_60] : memref<1x18x24x128xbf16, #tpu.memory_space<vmem>>, vector<1x16x16x128xbf16>
    %44 = tpu.concatenate %41, %42, %43 in 3 : vector<1x16x16x128xbf16>, vector<1x16x16x128xbf16>, vector<1x16x16x128xbf16> -> vector<1x16x16x384xbf16>
    %45 = vector.shape_cast %44 : vector<1x16x16x384xbf16> to vector<256x384xbf16>
    %c1_61 = arith.constant 1 : index
    %c0_62 = arith.constant 0 : index
    %c0_63 = arith.constant 0 : index
    %46 = vector.load %arg3[%c1_61, %c0_62, %c0_63] : memref<3x384x128xbf16, #tpu.memory_space<vmem>>, vector<1x384x128xbf16>
    %47 = vector.shape_cast %46 : vector<1x384x128xbf16> to vector<384x128xbf16>
    %cst_64 = arith.constant dense<0.000000e+00> : vector<256x128xf32>
    %48 = tpu.matmul %45, %47, %cst_64 {dimension_numbers = #tpu.dot_dimension_numbers<[1], [0], [0], [1], [0, 0, 1, 1], [], []>} : vector<256x384xbf16>, vector<384x128xbf16>, vector<256x128xf32> -> vector<256x128xf32>
    %49 = arith.addf %40, %48 : vector<256x128xf32>
    %c0_65 = arith.constant 0 : index
    %c2_66 = arith.constant 2 : index
    %c0_67 = arith.constant 0 : index
    %c0_68 = arith.constant 0 : index
    %50 = vector.load %arg10[%c0_65, %c2_66, %c0_67, %c0_68] : memref<1x18x24x128xbf16, #tpu.memory_space<vmem>>, vector<1x16x16x128xbf16>
    %c0_69 = arith.constant 0 : index
    %c2_70 = arith.constant 2 : index
    %c1_71 = arith.constant 1 : index
    %c0_72 = arith.constant 0 : index
    %51 = vector.load %arg10[%c0_69, %c2_70, %c1_71, %c0_72] : memref<1x18x24x128xbf16, #tpu.memory_space<vmem>>, vector<1x16x16x128xbf16>
    %c0_73 = arith.constant 0 : index
    %c2_74 = arith.constant 2 : index
    %c2_75 = arith.constant 2 : index
    %c0_76 = arith.constant 0 : index
    %52 = vector.load %arg10[%c0_73, %c2_74, %c2_75, %c0_76] : memref<1x18x24x128xbf16, #tpu.memory_space<vmem>>, vector<1x16x16x128xbf16>
    %53 = tpu.concatenate %50, %51, %52 in 3 : vector<1x16x16x128xbf16>, vector<1x16x16x128xbf16>, vector<1x16x16x128xbf16> -> vector<1x16x16x384xbf16>
    %54 = vector.shape_cast %53 : vector<1x16x16x384xbf16> to vector<256x384xbf16>
    %c2_77 = arith.constant 2 : index
    %c0_78 = arith.constant 0 : index
    %c0_79 = arith.constant 0 : index
    %55 = vector.load %arg3[%c2_77, %c0_78, %c0_79] : memref<3x384x128xbf16, #tpu.memory_space<vmem>>, vector<1x384x128xbf16>
    %56 = vector.shape_cast %55 : vector<1x384x128xbf16> to vector<384x128xbf16>
    %cst_80 = arith.constant dense<0.000000e+00> : vector<256x128xf32>
    %57 = tpu.matmul %54, %56, %cst_80 {dimension_numbers = #tpu.dot_dimension_numbers<[1], [0], [0], [1], [0, 0, 1, 1], [], []>} : vector<256x384xbf16>, vector<384x128xbf16>, vector<256x128xf32> -> vector<256x128xf32>
    %58 = arith.addf %49, %57 : vector<256x128xf32>
    %c0_81 = arith.constant 0 : index
    %c0_82 = arith.constant 0 : index
    %59 = vector.load %arg8[%c0_81, %c0_82] : memref<1x128xf32, #tpu.memory_space<vmem>>, vector<1x128xf32>
    %60 = vector.broadcast %59 : vector<1x128xf32> to vector<256x128xf32>
    %61 = arith.addf %58, %60 : vector<256x128xf32>
    %cst_83 = arith.constant 0.000000e+00 : f32
    %62 = vector.broadcast %cst_83 : f32 to vector<256x128xf32>
    %63 = arith.maximumf %61, %62 : vector<256x128xf32>
    %64 = arith.truncf %63 : vector<256x128xf32> to vector<256x128xbf16>
    %c0_84 = arith.constant 0 : index
    %c0_85 = arith.constant 0 : index
    %65 = vector.load %arg4[%c0_84, %c0_85] : memref<128x128xbf16, #tpu.memory_space<vmem>>, vector<128x128xbf16>
    %cst_86 = arith.constant dense<0.000000e+00> : vector<256x128xf32>
    %66 = tpu.matmul %64, %65, %cst_86 {dimension_numbers = #tpu.dot_dimension_numbers<[1], [0], [0], [1], [0, 0, 1, 1], [], []>} : vector<256x128xbf16>, vector<128x128xbf16>, vector<256x128xf32> -> vector<256x128xf32>
    %67 = arith.addf %66, %16 : vector<256x128xf32>
    %68 = vector.shape_cast %67 : vector<256x128xf32> to vector<1x16x16x128xf32>
    %c0_87 = arith.constant 0 : index
    %c0_88 = arith.constant 0 : index
    %c0_89 = arith.constant 0 : index
    %c0_90 = arith.constant 0 : index
    %69 = vector.load %arg9[%c0_87, %c0_88, %c0_89, %c0_90] : memref<1x16x16x128xf32, #tpu.memory_space<vmem>>, vector<1x16x16x128xf32>
    tpu.vector_store %arg9[%c0_87, %c0_88, %c0_89, %c0_90], %68 {strides = array<i32>} : memref<1x16x16x128xf32, #tpu.memory_space<vmem>>, vector<1x16x16x128xf32>,
    return
  }
  func.func @transform_0(%arg0: i32) -> (i32, i32, i32, i32) {
    %c0_i32 = arith.constant 0 : i32
    %c0_i32_0 = arith.constant 0 : i32
    %c0_i32_1 = arith.constant 0 : i32
    %c0_i32_2 = arith.constant 0 : i32
    return %arg0, %c0_i32, %c0_i32_0, %c0_i32_1 : i32, i32, i32, i32
  }
  func.func @transform_1(%arg0: i32) -> (i32, i32) {
    %c0_i32 = arith.constant 0 : i32
    %c0_i32_0 = arith.constant 0 : i32
    %c0_i32_1 = arith.constant 0 : i32
    return %c0_i32, %c0_i32_0 : i32, i32
  }
  func.func @transform_2(%arg0: i32) -> (i32, i32, i32) {
    %c0_i32 = arith.constant 0 : i32
    %c0_i32_0 = arith.constant 0 : i32
    %c0_i32_1 = arith.constant 0 : i32
    %c0_i32_2 = arith.constant 0 : i32
    return %c0_i32, %c0_i32_0, %c0_i32_1 : i32, i32, i32
  }
  func.func @transform_3(%arg0: i32) -> (i32, i32) {
    %c0_i32 = arith.constant 0 : i32
    %c0_i32_0 = arith.constant 0 : i32
    %c0_i32_1 = arith.constant 0 : i32
    return %c0_i32, %c0_i32_0 : i32, i32
  }
  func.func @transform_4(%arg0: i32) -> (i32, i32) {
    %c0_i32 = arith.constant 0 : i32
    %c0_i32_0 = arith.constant 0 : i32
    %c0_i32_1 = arith.constant 0 : i32
    return %c0_i32, %c0_i32_0 : i32, i32
  }
  func.func @transform_5(%arg0: i32) -> (i32, i32) {
    %c0_i32 = arith.constant 0 : i32
    %c0_i32_0 = arith.constant 0 : i32
    %c0_i32_1 = arith.constant 0 : i32
    return %c0_i32, %c0_i32_0 : i32, i32
  }
  func.func @transform_6(%arg0: i32) -> (i32, i32) {
    %c0_i32 = arith.constant 0 : i32
    %c0_i32_0 = arith.constant 0 : i32
    %c0_i32_1 = arith.constant 0 : i32
    return %c0_i32, %c0_i32_0 : i32, i32
  }
  func.func @transform_7(%arg0: i32) -> (i32, i32) {
    %c0_i32 = arith.constant 0 : i32
    %c0_i32_0 = arith.constant 0 : i32
    %c0_i32_1 = arith.constant 0 : i32
    return %c0_i32, %c0_i32_0 : i32, i32
  }
  func.func @transform_8(%arg0: i32) -> (i32, i32, i32, i32) {
    %c0_i32 = arith.constant 0 : i32
    %c0_i32_0 = arith.constant 0 : i32
    %c0_i32_1 = arith.constant 0 : i32
    %c0_i32_2 = arith.constant 0 : i32
    return %arg0, %c0_i32, %c0_i32_0, %c0_i32_1 : i32, i32, i32, i32
  }
}

</mosaic_0001>

<llo_original>
// kernel: preact_bottleneck_forward.1
$region0: #{preact_bottleneck_forward.1}
  #allocation0 [shape = 'u32[]', space=smem, size = 0x4, offset = 0x4, fixed_abs, tag = 'smem constant byte address 0x4 - core index']
  #allocation1 [shape = 'u32[144,128]{1,0:T(1,128)}', space=vmem, size = 0x12000, scoped, tag = 'internal scratch']
  #allocation2 [shape = 'bf16[1,18,24,128]{3,2,1,0:T(8,128)(2,1)}', space=vmem, size = 0x1b000, scoped, tag = 'scratch operand']
  %s0 = inlined_call_operand.vmem [shape: f32[2,16,16,4], index: 0, kind: input, shape index: {}]
  %s1 = inlined_call_operand.vmem [shape: bf16[4,256], index: 1, kind: input, shape index: {}]
  %s2 = inlined_call_operand.vmem [shape: bf16[3,384,128], index: 2, kind: input, shape index: {}]
  %s3 = inlined_call_operand.vmem [shape: bf16[128,128], index: 3, kind: input, shape index: {}]
  %s4 = inlined_call_operand.vmem [shape: f32[1,4], index: 4, kind: input, shape index: {}]
  %s5 = inlined_call_operand.vmem [shape: f32[1,4], index: 5, kind: input, shape index: {}]
  %s6 = inlined_call_operand.vmem [shape: f32[1,128], index: 6, kind: input, shape index: {}]
  %s7 = inlined_call_operand.vmem [shape: f32[1,128], index: 7, kind: input, shape index: {}]
  %s8 = inlined_call_operand.vmem [shape: f32[2,16,16,128], index: 8, kind: output, shape index: {}]
  %s9 = sld [smem:[#allocation0]]
  $region65: #{preact_bottleneck_forward.1} parent=0
    _
  %s11 = ssub.s32 1, %s9
  %s12 = scalar_select 0, %s11, %s9
  loop: start=0, step=1, limit=4
  $region2: #{preact_bottleneck_forward.1} parent=0 // loop_pre_header
    _
  $region3: #{preact_bottleneck_forward.1} parent=0 // loop_header
    %s14 = sphi 0, %s18
    %p15 = scmp.ge.s32.totalorder %s14, 4
    %s24 = sphi 0, %s26
    %s27 = sphi 0, %s24
    %s28 = sphi 0, %s27
    %s44 = sphi 0, %s28
    %s48 = sphi 0, %s48
    %s50 = sphi 0, %s48
    %s51 = sphi 0, %s50
    %s65 = sphi 0, %s51
    %s69 = sphi 0, %s69
    %s71 = sphi 0, %s69
    %s72 = sphi 0, %s71
    %s86 = sphi 0, %s72
    %s90 = sphi 0, %s90
    %s92 = sphi 0, %s90
    %s93 = sphi 0, %s92
    %s107 = sphi 0, %s93
    %s111 = sphi 0, %s111
    %s113 = sphi 0, %s111
    %s114 = sphi 0, %s113
    %s128 = sphi 0, %s114
    %s132 = sphi 0, %s132
    %s134 = sphi 0, %s132
    %s135 = sphi 0, %s134
    %s149 = sphi 0, %s135
    %s153 = sphi 0, %s153
    %s155 = sphi 0, %s153
    %s156 = sphi 0, %s155
    %s170 = sphi 0, %s156
    %s174 = sphi 0, %s174
    %s176 = sphi 0, %s174
    %s177 = sphi 0, %s176
    %s191 = sphi 0, %s177
    %s197 = sphi 0, %s199
    %s200 = sphi 0, %s197
    %s201 = sphi 0, %s200
    %s217 = sphi 0, %s201
  $region4: #{preact_bottleneck_forward.1} parent=0 // loop_header_branch
    %17 = sbr.rel (%p15) target = $region8
  $region5: #{preact_bottleneck_forward.1} parent=0 // loop_body
    %s19 = ssub.s32 %s14, 1
    %s20 = ssub.s32 %s14, 2
    %s21 = sadd.s32 %s14, 1
    %s22 = ssub.s32 %s14, %s21
    %p23 = scmp.eq.s32.totalorder %s22, 0
    %s25 = sadd.s32 %s24, 1
    %s26 = scalar_select %p23, %s24, %s25
    %p29 = pneg %p23
    %p30 = scmp.eq.s32.totalorder %s14, 1
    %p31 = por %p29, %p30
    %p32 = scmp.ne.s32.totalorder %s24, %s27
    %p33 = scmp.eq.s32.totalorder %s14, 0
    %p34 = por %p32, %p33
    %p35 = scmp.ne.s32.totalorder %s24, %s27
    %p36 = scmp.eq.s32.totalorder %s19, 1
    %p37 = por %p35, %p36
    %p38 = scmp.ne.s32.totalorder %s27, %s28
    %p39 = scmp.eq.s32.totalorder %s19, 0
    %p40 = por %p38, %p39
    %p41 = scmp.ne.s32.totalorder %s27, %s28
    %p42 = scmp.eq.s32.totalorder %s20, 1
    %p43 = por %p41, %p42
    %p45 = scmp.ne.s32.totalorder %s28, %s44
    %p46 = scmp.eq.s32.totalorder %s20, 0
    %p47 = por %p45, %p46
    %s49 = sadd.s32 %s48, 1
    %p52 = scmp.eq.s32.totalorder %s14, 1
    %p53 = scmp.ne.s32.totalorder %s48, %s50
    %p54 = scmp.eq.s32.totalorder %s14, 0
    %p55 = por %p53, %p54
    %p56 = scmp.ne.s32.totalorder %s48, %s50
    %p57 = scmp.eq.s32.totalorder %s19, 1
    %p58 = por %p56, %p57
    %p59 = scmp.ne.s32.totalorder %s50, %s51
    %p60 = scmp.eq.s32.totalorder %s19, 0
    %p61 = por %p59, %p60
    %p62 = scmp.ne.s32.totalorder %s50, %s51
    %p63 = scmp.eq.s32.totalorder %s20, 1
    %p64 = por %p62, %p63
    %p66 = scmp.ne.s32.totalorder %s51, %s65
    %p67 = scmp.eq.s32.totalorder %s20, 0
    %p68 = por %p66, %p67
    %s70 = sadd.s32 %s69, 1
    %p73 = scmp.eq.s32.totalorder %s14, 1
    %p74 = scmp.ne.s32.totalorder %s69, %s71
    %p75 = scmp.eq.s32.totalorder %s14, 0
    %p76 = por %p74, %p75
    %p77 = scmp.ne.s32.totalorder %s69, %s71
    %p78 = scmp.eq.s32.totalorder %s19, 1
    %p79 = por %p77, %p78
    %p80 = scmp.ne.s32.totalorder %s71, %s72
    %p81 = scmp.eq.s32.totalorder %s19, 0
    %p82 = por %p80, %p81
    %p83 = scmp.ne.s32.totalorder %s71, %s72
    %p84 = scmp.eq.s32.totalorder %s20, 1
    %p85 = por %p83, %p84
    %p87 = scmp.ne.s32.totalorder %s72, %s86
    %p88 = scmp.eq.s32.totalorder %s20, 0
    %p89 = por %p87, %p88
    %s91 = sadd.s32 %s90, 1
    %p94 = scmp.eq.s32.totalorder %s14, 1
    %p95 = scmp.ne.s32.totalorder %s90, %s92
    %p96 = scmp.eq.s32.totalorder %s14, 0
    %p97 = por %p95, %p96
    %p98 = scmp.ne.s32.totalorder %s90, %s92
    %p99 = scmp.eq.s32.totalorder %s19, 1
    %p100 = por %p98, %p99
    %p101 = scmp.ne.s32.totalorder %s92, %s93
    %p102 = scmp.eq.s32.totalorder %s19, 0
    %p103 = por %p101, %p102
    %p104 = scmp.ne.s32.totalorder %s92, %s93
    %p105 = scmp.eq.s32.totalorder %s20, 1
    %p106 = por %p104, %p105
    %p108 = scmp.ne.s32.totalorder %s93, %s107
    %p109 = scmp.eq.s32.totalorder %s20, 0
    %p110 = por %p108, %p109
    %s112 = sadd.s32 %s111, 1
    %p115 = scmp.eq.s32.totalorder %s14, 1
    %p116 = scmp.ne.s32.totalorder %s111, %s113
    %p117 = scmp.eq.s32.totalorder %s14, 0
    %p118 = por %p116, %p117
    %p119 = scmp.ne.s32.totalorder %s111, %s113
    %p120 = scmp.eq.s32.totalorder %s19, 1
    %p121 = por %p119, %p120
    %p122 = scmp.ne.s32.totalorder %s113, %s114
    %p123 = scmp.eq.s32.totalorder %s19, 0
    %p124 = por %p122, %p123
    %p125 = scmp.ne.s32.totalorder %s113, %s114
    %p126 = scmp.eq.s32.totalorder %s20, 1
    %p127 = por %p125, %p126
    %p129 = scmp.ne.s32.totalorder %s114, %s128
    %p130 = scmp.eq.s32.totalorder %s20, 0
    %p131 = por %p129, %p130
    %s133 = sadd.s32 %s132, 1
    %p136 = scmp.eq.s32.totalorder %s14, 1
    %p137 = scmp.ne.s32.totalorder %s132, %s134
    %p138 = scmp.eq.s32.totalorder %s14, 0
    %p139 = por %p137, %p138
    %p140 = scmp.ne.s32.totalorder %s132, %s134
    %p141 = scmp.eq.s32.totalorder %s19, 1
    %p142 = por %p140, %p141
    %p143 = scmp.ne.s32.totalorder %s134, %s135
    %p144 = scmp.eq.s32.totalorder %s19, 0
    %p145 = por %p143, %p144
    %p146 = scmp.ne.s32.totalorder %s134, %s135
    %p147 = scmp.eq.s32.totalorder %s20, 1
    %p148 = por %p146, %p147
    %p150 = scmp.ne.s32.totalorder %s135, %s149
    %p151 = scmp.eq.s32.totalorder %s20, 0
    %p152 = por %p150, %p151
    %s154 = sadd.s32 %s153, 1
    %p157 = scmp.eq.s32.totalorder %s14, 1
    %p158 = scmp.ne.s32.totalorder %s153, %s155
    %p159 = scmp.eq.s32.totalorder %s14, 0
    %p160 = por %p158, %p159
    %p161 = scmp.ne.s32.totalorder %s153, %s155
    %p162 = scmp.eq.s32.totalorder %s19, 1
    %p163 = por %p161, %p162
    %p164 = scmp.ne.s32.totalorder %s155, %s156
    %p165 = scmp.eq.s32.totalorder %s19, 0
    %p166 = por %p164, %p165
    %p167 = scmp.ne.s32.totalorder %s155, %s156
    %p168 = scmp.eq.s32.totalorder %s20, 1
    %p169 = por %p167, %p168
    %p171 = scmp.ne.s32.totalorder %s156, %s170
    %p172 = scmp.eq.s32.totalorder %s20, 0
    %p173 = por %p171, %p172
    %s175 = sadd.s32 %s174, 1
    %p178 = scmp.eq.s32.totalorder %s14, 1
    %p179 = scmp.ne.s32.totalorder %s174, %s176
    %p180 = scmp.eq.s32.totalorder %s14, 0
    %p181 = por %p179, %p180
    %p182 = scmp.ne.s32.totalorder %s174, %s176
    %p183 = scmp.eq.s32.totalorder %s19, 1
    %p184 = por %p182, %p183
    %p185 = scmp.ne.s32.totalorder %s176, %s177
    %p186 = scmp.eq.s32.totalorder %s19, 0
    %p187 = por %p185, %p186
    %p188 = scmp.ne.s32.totalorder %s176, %s177
    %p189 = scmp.eq.s32.totalorder %s20, 1
    %p190 = por %p188, %p189
    %p192 = scmp.ne.s32.totalorder %s177, %s191
    %p193 = scmp.eq.s32.totalorder %s20, 0
    %p194 = por %p192, %p193
    %s195 = ssub.s32 %s14, %s21
    %p196 = scmp.eq.s32.totalorder %s195, 0
    %s198 = sadd.s32 %s197, 1
    %s199 = scalar_select %p196, %s197, %s198
    %p202 = pneg %p196
    %p203 = scmp.eq.s32.totalorder %s14, 1
    %p204 = por %p202, %p203
    %p205 = scmp.ne.s32.totalorder %s197, %s200
    %p206 = scmp.eq.s32.totalorder %s14, 0
    %p207 = por %p205, %p206
    %p208 = scmp.ne.s32.totalorder %s197, %s200
    %p209 = scmp.eq.s32.totalorder %s19, 1
    %p210 = por %p208, %p209
    %p211 = scmp.ne.s32.totalorder %s200, %s201
    %p212 = scmp.eq.s32.totalorder %s19, 0
    %p213 = por %p211, %p212
    %p214 = scmp.ne.s32.totalorder %s200, %s201
    %p215 = scmp.eq.s32.totalorder %s20, 1
    %p216 = por %p214, %p215
    %p218 = scmp.ne.s32.totalorder %s201, %s217
    %p219 = scmp.eq.s32.totalorder %s20, 0
    %p220 = por %p218, %p219
    %p221 = scmp.le.s32.totalorder 1, %s14
    %p222 = scmp.lt.s32.totalorder %s14, 3
    %p223 = pnand %p221, %p222
    %p224 = pneg %p223
    // Predicated region
    $region9: #{preact_bottleneck_forward.1} parent=5 // pred_check
      _
    $region10: #{preact_bottleneck_forward.1} parent=5 // pred_check_branch
      %226 = sbr.rel (%p223) target = $region12
    $region11: #{preact_bottleneck_forward.1} parent=5 // pred_region
      %s227 = ssub.s32 %s14, 1
      // Predicated region
      $region13: #{preact_bottleneck_forward.1} parent=11 // pred_check
        %p228 = pneg %p61
      $region14: #{preact_bottleneck_forward.1} parent=11 // pred_check_branch
        %230 = sbr.rel (%p228) target = $region16
      $region15: #{preact_bottleneck_forward.1} parent=11 // pred_region
        _
      $region16: #{preact_bottleneck_forward.1} parent=11 // pred_fallthru
        _
      // Predicated region
      $region17: #{preact_bottleneck_forward.1} parent=11 // pred_check
        %p231 = pneg %p82
      $region18: #{preact_bottleneck_forward.1} parent=11 // pred_check_branch
        %233 = sbr.rel (%p231) target = $region20
      $region19: #{preact_bottleneck_forward.1} parent=11 // pred_region
        _
      $region20: #{preact_bottleneck_forward.1} parent=11 // pred_fallthru
        _
      // Predicated region
      $region21: #{preact_bottleneck_forward.1} parent=11 // pred_check
        %p234 = pneg %p103
      $region22: #{preact_bottleneck_forward.1} parent=11 // pred_check_branch
        %236 = sbr.rel (%p234) target = $region24
      $region23: #{preact_bottleneck_forward.1} parent=11 // pred_region
        _
      $region24: #{preact_bottleneck_forward.1} parent=11 // pred_fallthru
        _
      // Predicated region
      $region25: #{preact_bottleneck_forward.1} parent=11 // pred_check
        %p237 = pneg %p124
      $region26: #{preact_bottleneck_forward.1} parent=11 // pred_check_branch
        %239 = sbr.rel (%p237) target = $region28
      $region27: #{preact_bottleneck_forward.1} parent=11 // pred_region
        _
      $region28: #{preact_bottleneck_forward.1} parent=11 // pred_fallthru
        _
      // Predicated region
      $region29: #{preact_bottleneck_forward.1} parent=11 // pred_check
        %p240 = pneg %p145
      $region30: #{preact_bottleneck_forward.1} parent=11 // pred_check_branch
        %242 = sbr.rel (%p240) target = $region32
      $region31: #{preact_bottleneck_forward.1} parent=11 // pred_region
        _
      $region32: #{preact_bottleneck_forward.1} parent=11 // pred_fallthru
        _
      // Predicated region
      $region33: #{preact_bottleneck_forward.1} parent=11 // pred_check
        %p243 = pneg %p166
      $region34: #{preact_bottleneck_forward.1} parent=11 // pred_check_branch
        %245 = sbr.rel (%p243) target = $region36
      $region35: #{preact_bottleneck_forward.1} parent=11 // pred_region
        _
      $region36: #{preact_bottleneck_forward.1} parent=11 // pred_fallthru
        _
      // Predicated region
      $region37: #{preact_bottleneck_forward.1} parent=11 // pred_check
        %p246 = pneg %p187
      $region38: #{preact_bottleneck_forward.1} parent=11 // pred_check_branch
        %248 = sbr.rel (%p246) target = $region40
      $region39: #{preact_bottleneck_forward.1} parent=11 // pred_region
        _
      $region40: #{preact_bottleneck_forward.1} parent=11 // pred_fallthru
        _
    $region12: #{preact_bottleneck_forward.1} parent=5 // pred_fallthru
      _
    %p249 = scmp.lt.s32.totalorder %s14, 2
    // Predicated region
    $region41: #{preact_bottleneck_forward.1} parent=5 // pred_check
      %p250 = pneg %p249
    $region42: #{preact_bottleneck_forward.1} parent=5 // pred_check_branch
      %252 = sbr.rel (%p250) target = $region44
    $region43: #{preact_bottleneck_forward.1} parent=5 // pred_region
      // Predicated region
      $region45: #{preact_bottleneck_forward.1} parent=43 // pred_check
        %p253 = pneg %p34
      $region46: #{preact_bottleneck_forward.1} parent=43 // pred_check_branch
        %255 = sbr.rel (%p253) target = $region48
      $region47: #{preact_bottleneck_forward.1} parent=43 // pred_region
        %p256 = scmp.lt.s32.totalorder %s14, 1
        %s257 = scalar_select %p256, %s14, 1
        %s258 = smul.addr %s257, 32
        %s259 = smul.addr %s258, 8
        %s260 = scalar_lea.vmem %s0, %s259
      $region48: #{preact_bottleneck_forward.1} parent=43 // pred_fallthru
        _
    $region44: #{preact_bottleneck_forward.1} parent=5 // pred_fallthru
      _
    %p261 = scmp.le.s32.totalorder 1, %s14
    %p262 = scmp.lt.s32.totalorder %s14, 3
    %p263 = pnand %p261, %p262
    %p264 = pneg %p263
    // Predicated region
    $region49: #{preact_bottleneck_forward.1} parent=5 // pred_check
      _
    $region50: #{preact_bottleneck_forward.1} parent=5 // pred_check_branch
      %266 = sbr.rel (%p263) target = $region52
    $region51: #{preact_bottleneck_forward.1} parent=5 // pred_region
      %s267 = ssub.s32 %s14, 1
      %p268 = scmp.lt.s32.totalorder %s19, 1
      %s269 = scalar_select %p268, %s19, 1
      %s270 = smul.addr %s269, 32
      %s271 = smul.addr %s270, 8
      %s272 = scalar_lea.vmem %s0, %s271
      %p273 = pneg %p40
      %p274 = pneg %p37
      %p275 = pneg %p61
      %p276 = pneg %p58
      %p277 = pneg %p82
      %p278 = pneg %p79
      %p279 = pneg %p103
      %p280 = pneg %p100
      %p281 = pneg %p124
      %p282 = pneg %p121
      %p283 = pneg %p145
      %p284 = pneg %p142
      %p285 = pneg %p166
      %p286 = pneg %p163
      %p287 = pneg %p187
      %p288 = pneg %p184
      %p289 = pneg %p213
      %p290 = pneg %p210
      %p291 = scmp.lt.s32.totalorder %s19, 1
      %s292 = scalar_select %p291, %s19, 1
      %s293 = smul.addr %s292, 32
      %s294 = smul.addr %s293, 8
      %s295 = scalar_lea.vmem %s8, %s294
      %p296 = scmp.lt.s32.totalorder %s19, 1
      %s297 = scalar_select %p296, %s19, 1
      %s298 = smul.addr %s297, 32
      %s299 = smul.addr %s298, 8
      %s300 = scalar_lea.vmem %s0, %s299
      %p301 = scmp.lt.s32.totalorder %s19, 1
      %s302 = scalar_select %p301, %s19, 1
      %s303 = smul.addr %s302, 32
      %s304 = smul.addr %s303, 8
      %s305 = scalar_lea.vmem %s8, %s304
      %v307 = vld [vmem:[%s300] sm:$0xff]
      %v308 = vld [vmem:[%s300 + $0x8] sm:$0xff]
      %v309 = vld [vmem:[%s300 + $0x10] sm:$0xff]
      %v310 = vld [vmem:[%s300 + $0x18] sm:$0xff]
      %v311 = vld [vmem:[%s300 + $0x20] sm:$0xff]
      %v312 = vld [vmem:[%s300 + $0x28] sm:$0xff]
      %v313 = vld [vmem:[%s300 + $0x30] sm:$0xff]
      %v314 = vld [vmem:[%s300 + $0x38] sm:$0xff]
      %v315 = vld [vmem:[%s300 + $0x40] sm:$0xff]
      %v316 = vld [vmem:[%s300 + $0x48] sm:$0xff]
      %v317 = vld [vmem:[%s300 + $0x50] sm:$0xff]
      %v318 = vld [vmem:[%s300 + $0x58] sm:$0xff]
      %v319 = vld [vmem:[%s300 + $0x60] sm:$0xff]
      %v320 = vld [vmem:[%s300 + $0x68] sm:$0xff]
      %v321 = vld [vmem:[%s300 + $0x70] sm:$0xff]
      %v322 = vld [vmem:[%s300 + $0x78] sm:$0xff]
      %v323 = vld [vmem:[%s300 + $0x80] sm:$0xff]
      %v324 = vld [vmem:[%s300 + $0x88] sm:$0xff]
      %v325 = vld [vmem:[%s300 + $0x90] sm:$0xff]
      %v326 = vld [vmem:[%s300 + $0x98] sm:$0xff]
      %v327 = vld [vmem:[%s300 + $0xa0] sm:$0xff]
      %v328 = vld [vmem:[%s300 + $0xa8] sm:$0xff]
      %v329 = vld [vmem:[%s300 + $0xb0] sm:$0xff]
      %v330 = vld [vmem:[%s300 + $0xb8] sm:$0xff]
      %v331 = vld [vmem:[%s300 + $0xc0] sm:$0xff]
      %v332 = vld [vmem:[%s300 + $0xc8] sm:$0xff]
      %v333 = vld [vmem:[%s300 + $0xd0] sm:$0xff]
      %v334 = vld [vmem:[%s300 + $0xd8] sm:$0xff]
      %v335 = vld [vmem:[%s300 + $0xe0] sm:$0xff]
      %v336 = vld [vmem:[%s300 + $0xe8] sm:$0xff]
      %v337 = vld [vmem:[%s300 + $0xf0] sm:$0xff]
      %v338 = vld [vmem:[%s300 + $0xf8] sm:$0xff]
      %v339 = vld [vmem:[%s4] sm:$0x1]
      %v341 = vlaneseq
      %v342 = vshrl.u32 %v341, 7
      %v343 = vsub.s32 0, %v342
      %v344 = vrot.slane %v339, %v343
      %v346 = vmul.f32 %v307, %v344
      %v347 = vmul.f32 %v308, %v344
      %v348 = vmul.f32 %v309, %v344
      %v349 = vmul.f32 %v310, %v344
      %v350 = vmul.f32 %v311, %v344
      %v351 = vmul.f32 %v312, %v344
      %v352 = vmul.f32 %v313, %v344
      %v353 = vmul.f32 %v314, %v344
      %v354 = vmul.f32 %v315, %v344
      %v355 = vmul.f32 %v316, %v344
      %v356 = vmul.f32 %v317, %v344
      %v357 = vmul.f32 %v318, %v344
      %v358 = vmul.f32 %v319, %v344
      %v359 = vmul.f32 %v320, %v344
      %v360 = vmul.f32 %v321, %v344
      %v361 = vmul.f32 %v322, %v344
      %v362 = vmul.f32 %v323, %v344
      %v363 = vmul.f32 %v324, %v344
      %v364 = vmul.f32 %v325, %v344
      %v365 = vmul.f32 %v326, %v344
      %v366 = vmul.f32 %v327, %v344
      %v367 = vmul.f32 %v328, %v344
      %v368 = vmul.f32 %v329, %v344
      %v369 = vmul.f32 %v330, %v344
      %v370 = vmul.f32 %v331, %v344
      %v371 = vmul.f32 %v332, %v344
      %v372 = vmul.f32 %v333, %v344
      %v373 = vmul.f32 %v334, %v344
      %v374 = vmul.f32 %v335, %v344
      %v375 = vmul.f32 %v336, %v344
      %v376 = vmul.f32 %v337, %v344
      %v377 = vmul.f32 %v338, %v344
      %v378 = vld [vmem:[%s5] sm:$0x1]
      %v380 = vlaneseq
      %v381 = vshrl.u32 %v380, 7
      %v382 = vsub.s32 0, %v381
      %v383 = vrot.slane %v378, %v382
      %v385 = vadd.f32 %v346, %v383
      %v386 = vadd.f32 %v347, %v383
      %v387 = vadd.f32 %v348, %v383
      %v388 = vadd.f32 %v349, %v383
      %v389 = vadd.f32 %v350, %v383
      %v390 = vadd.f32 %v351, %v383
      %v391 = vadd.f32 %v352, %v383
      %v392 = vadd.f32 %v353, %v383
      %v393 = vadd.f32 %v354, %v383
      %v394 = vadd.f32 %v355, %v383
      %v395 = vadd.f32 %v356, %v383
      %v396 = vadd.f32 %v357, %v383
      %v397 = vadd.f32 %v358, %v383
      %v398 = vadd.f32 %v359, %v383
      %v399 = vadd.f32 %v360, %v383
      %v400 = vadd.f32 %v361, %v383
      %v401 = vadd.f32 %v362, %v383
      %v402 = vadd.f32 %v363, %v383
      %v403 = vadd.f32 %v364, %v383
      %v404 = vadd.f32 %v365, %v383
      %v405 = vadd.f32 %v366, %v383
      %v406 = vadd.f32 %v367, %v383
      %v407 = vadd.f32 %v368, %v383
      %v408 = vadd.f32 %v369, %v383
      %v409 = vadd.f32 %v370, %v383
      %v410 = vadd.f32 %v371, %v383
      %v411 = vadd.f32 %v372, %v383
      %v412 = vadd.f32 %v373, %v383
      %v413 = vadd.f32 %v374, %v383
      %v414 = vadd.f32 %v375, %v383
      %v415 = vadd.f32 %v376, %v383
      %v416 = vadd.f32 %v377, %v383
      %v417 = vmax.f32 %v385, 0.0
      %v418 = vmax.f32 %v386, 0.0
      %v419 = vmax.f32 %v387, 0.0
      %v420 = vmax.f32 %v388, 0.0
      %v421 = vmax.f32 %v389, 0.0
      %v422 = vmax.f32 %v390, 0.0
      %v423 = vmax.f32 %v391, 0.0
      %v424 = vmax.f32 %v392, 0.0
      %v425 = vmax.f32 %v393, 0.0
      %v426 = vmax.f32 %v394, 0.0
      %v427 = vmax.f32 %v395, 0.0
      %v428 = vmax.f32 %v396, 0.0
      %v429 = vmax.f32 %v397, 0.0
      %v430 = vmax.f32 %v398, 0.0
      %v431 = vmax.f32 %v399, 0.0
      %v432 = vmax.f32 %v400, 0.0
      %v433 = vmax.f32 %v401, 0.0
      %v434 = vmax.f32 %v402, 0.0
      %v435 = vmax.f32 %v403, 0.0
      %v436 = vmax.f32 %v404, 0.0
      %v437 = vmax.f32 %v405, 0.0
      %v438 = vmax.f32 %v406, 0.0
      %v439 = vmax.f32 %v407, 0.0
      %v440 = vmax.f32 %v408, 0.0
      %v441 = vmax.f32 %v409, 0.0
      %v442 = vmax.f32 %v410, 0.0
      %v443 = vmax.f32 %v411, 0.0
      %v444 = vmax.f32 %v412, 0.0
      %v445 = vmax.f32 %v413, 0.0
      %v446 = vmax.f32 %v414, 0.0
      %v447 = vmax.f32 %v415, 0.0
      %v448 = vmax.f32 %v416, 0.0
      %v449 = vpack.c.bf16 %v418, %v417
      %v450 = vpack.c.bf16 %v420, %v419
      %v451 = vpack.c.bf16 %v422, %v421
      %v452 = vpack.c.bf16 %v424, %v423
      %v453 = vpack.c.bf16 %v426, %v425
      %v454 = vpack.c.bf16 %v428, %v427
      %v455 = vpack.c.bf16 %v430, %v429
      %v456 = vpack.c.bf16 %v432, %v431
      %v457 = vpack.c.bf16 %v434, %v433
      %v458 = vpack.c.bf16 %v436, %v435
      %v459 = vpack.c.bf16 %v438, %v437
      %v460 = vpack.c.bf16 %v440, %v439
      %v461 = vpack.c.bf16 %v442, %v441
      %v462 = vpack.c.bf16 %v444, %v443
      %v463 = vpack.c.bf16 %v446, %v445
      %v464 = vpack.c.bf16 %v448, %v447
      %v465 = vld [vmem:[%s1] sm:$0xf]
      %v468 = vunpack.c.l.s4 1983009808
      %v469 = vunpack.c.0.s8 %v468
      %v470 = vlaneseq
      %v471 = vshrl.u32 %v470, 7
      %v472 = vsub.s32 %v469, %v471
      %v473 = vrot.slane %v465, %v472
      %v474 = vcombine.high %v473, %v473
      %vm475 = vcmask 31744
      %v477 = vsel %vm475, %v449, 0
      %v480 = vsel %vm475, %v450, 0
      %v483 = vsel %vm475, %v451, 0
      %v486 = vsel %vm475, %v452, 0
      %v489 = vsel %vm475, %v453, 0
      %v492 = vsel %vm475, %v454, 0
      %v495 = vsel %vm475, %v455, 0
      %v498 = vsel %vm475, %v456, 0
      %v501 = vsel %vm475, %v457, 0
      %v504 = vsel %vm475, %v458, 0
      %v507 = vsel %vm475, %v459, 0
      %v510 = vsel %vm475, %v460, 0
      %v513 = vsel %vm475, %v461, 0
      %v516 = vsel %vm475, %v462, 0
      %v519 = vsel %vm475, %v463, 0
      %v522 = vsel %vm475, %v464, 0
      %vm524 = vcmask 1041408
      %v526 = vsel %vm524, %v473, 0
      %v529 = vsel %vm524, %v474, 0
      %531 = vmatprep.subr.bf16.mxu0 %v529
      %532 = vmatpush1.bf16.msra.mxu0 %v526
      %533 = vmatprep.subr.bf16.mxu0 0
      %534 = vmatpush1.bf16.msra.mxu0 0
      %535 = vmatprep.subr.bf16.mxu0 0
      %536 = vmatpush1.bf16.msra.mxu0 0
      %537 = vmatprep.subr.bf16.mxu0 0
      %538 = vmatpush1.bf16.msra.mxu0 0
      %539 = vmatprep.subr.bf16.mxu0 0
      %540 = vmatpush1.bf16.msra.mxu0 0
      %541 = vmatprep.subr.bf16.mxu0 0
      %542 = vmatpush1.bf16.msra.mxu0 0
      %543 = vmatprep.subr.bf16.mxu0 0
      %544 = vmatpush1.bf16.msra.mxu0 0
      %545 = vmatprep.subr.bf16.mxu0 0
      %546 = vmatpush1.bf16.msra.mxu0 0
      %547 = vmatprep.subr.bf16.mxu0 0
      %548 = vmatpush1.bf16.msra.mxu0 0
      %549 = vmatprep.subr.bf16.mxu0 0
      %550 = vmatpush1.bf16.msra.mxu0 0
      %551 = vmatprep.subr.bf16.mxu0 0
      %552 = vmatpush1.bf16.msra.mxu0 0
      %553 = vmatprep.subr.bf16.mxu0 0
      %554 = vmatpush1.bf16.msra.mxu0 0
      %555 = vmatprep.subr.bf16.mxu0 0
      %556 = vmatpush1.bf16.msra.mxu0 0
      %557 = vmatprep.subr.bf16.mxu0 0
      %558 = vmatpush1.bf16.msra.mxu0 0
      %559 = vmatprep.subr.bf16.mxu0 0
      %560 = vmatpush1.bf16.msra.mxu0 0
      %561 = vmatprep.subr.bf16.mxu0 0
      %562 = vmatpush1.bf16.msra.mxu0 0
      %563 = vmatprep.mubr.bf16.mxu0 0
      %564 = vmatmul.mubr.bf16.gmra.mrb[0].mxu0 %v477
      %v565 = vpop.f32.mrb[0].mxu0
      %v566 = vadd.f32 0.0, %v565
      %v567 = vpop.f32.mrb[0].mxu0
      %v568 = vadd.f32 0.0, %v567
      %v569 = vpop.f32.mrb[0].mxu0
      %v570 = vadd.f32 0.0, %v569
      %v571 = vpop.f32.mrb[0].mxu0
      %v572 = vadd.f32 0.0, %v571
      %573 = vmatprep.mubr.bf16.mxu0 0
      %574 = vmatmul.mubr.bf16.gmra.mrb[0].mxu0 %v480
      %v575 = vpop.f32.mrb[0].mxu0
      %v576 = vadd.f32 0.0, %v575
      %v577 = vpop.f32.mrb[0].mxu0
      %v578 = vadd.f32 0.0, %v577
      %v579 = vpop.f32.mrb[0].mxu0
      %v580 = vadd.f32 0.0, %v579
      %v581 = vpop.f32.mrb[0].mxu0
      %v582 = vadd.f32 0.0, %v581
      %583 = vmatprep.mubr.bf16.mxu0 0
      %584 = vmatmul.mubr.bf16.gmra.mrb[0].mxu0 %v483
      %v585 = vpop.f32.mrb[0].mxu0
      %v586 = vadd.f32 0.0, %v585
      %v587 = vpop.f32.mrb[0].mxu0
      %v588 = vadd.f32 0.0, %v587
      %v589 = vpop.f32.mrb[0].mxu0
      %v590 = vadd.f32 0.0, %v589
      %v591 = vpop.f32.mrb[0].mxu0
      %v592 = vadd.f32 0.0, %v591
      %593 = vmatprep.mubr.bf16.mxu0 0
      %594 = vmatmul.mubr.bf16.gmra.mrb[0].mxu0 %v486
      %v595 = vpop.f32.mrb[0].mxu0
      %v596 = vadd.f32 0.0, %v595
      %v597 = vpop.f32.mrb[0].mxu0
      %v598 = vadd.f32 0.0, %v597
      %v599 = vpop.f32.mrb[0].mxu0
      %v600 = vadd.f32 0.0, %v599
      %v601 = vpop.f32.mrb[0].mxu0
      %v602 = vadd.f32 0.0, %v601
      %603 = vmatprep.mubr.bf16.mxu0 0
      %604 = vmatmul.mubr.bf16.gmra.mrb[0].mxu0 %v489
      %v605 = vpop.f32.mrb[0].mxu0
      %v606 = vadd.f32 0.0, %v605
      %v607 = vpop.f32.mrb[0].mxu0
      %v608 = vadd.f32 0.0, %v607
      %v609 = vpop.f32.mrb[0].mxu0
      %v610 = vadd.f32 0.0, %v609
      %v611 = vpop.f32.mrb[0].mxu0
      %v612 = vadd.f32 0.0, %v611
      %613 = vmatprep.mubr.bf16.mxu0 0
      %614 = vmatmul.mubr.bf16.gmra.mrb[0].mxu0 %v492
      %v615 = vpop.f32.mrb[0].mxu0
      %v616 = vadd.f32 0.0, %v615
      %v617 = vpop.f32.mrb[0].mxu0
      %v618 = vadd.f32 0.0, %v617
      %v619 = vpop.f32.mrb[0].mxu0
      %v620 = vadd.f32 0.0, %v619
      %v621 = vpop.f32.mrb[0].mxu0
      %v622 = vadd.f32 0.0, %v621
      %623 = vmatprep.mubr.bf16.mxu0 0
      %624 = vmatmul.mubr.bf16.gmra.mrb[0].mxu0 %v495
      %v625 = vpop.f32.mrb[0].mxu0
      %v626 = vadd.f32 0.0, %v625
      %v627 = vpop.f32.mrb[0].mxu0
      %v628 = vadd.f32 0.0, %v627
      %v629 = vpop.f32.mrb[0].mxu0
      %v630 = vadd.f32 0.0, %v629
      %v631 = vpop.f32.mrb[0].mxu0
      %v632 = vadd.f32 0.0, %v631
      %633 = vmatprep.mubr.bf16.mxu0 0
      %634 = vmatmul.mubr.bf16.gmra.mrb[0].mxu0 %v498
      %v635 = vpop.f32.mrb[0].mxu0
      %v636 = vadd.f32 0.0, %v635
      %v637 = vpop.f32.mrb[0].mxu0
      %v638 = vadd.f32 0.0, %v637
      %v639 = vpop.f32.mrb[0].mxu0
      %v640 = vadd.f32 0.0, %v639
      %v641 = vpop.f32.mrb[0].mxu0
      %v642 = vadd.f32 0.0, %v641
      %643 = vmatprep.mubr.bf16.mxu0 0
      %644 = vmatmul.mubr.bf16.gmra.mrb[0].mxu0 %v501
      %v645 = vpop.f32.mrb[0].mxu0
      %v646 = vadd.f32 0.0, %v645
      %v647 = vpop.f32.mrb[0].mxu0
      %v648 = vadd.f32 0.0, %v647
      %v649 = vpop.f32.mrb[0].mxu0
      %v650 = vadd.f32 0.0, %v649
      %v651 = vpop.f32.mrb[0].mxu0
      %v652 = vadd.f32 0.0, %v651
      %653 = vmatprep.mubr.bf16.mxu0 0
      %654 = vmatmul.mubr.bf16.gmra.mrb[0].mxu0 %v504
      %v655 = vpop.f32.mrb[0].mxu0
      %v656 = vadd.f32 0.0, %v655
      %v657 = vpop.f32.mrb[0].mxu0
      %v658 = vadd.f32 0.0, %v657
      %v659 = vpop.f32.mrb[0].mxu0
      %v660 = vadd.f32 0.0, %v659
      %v661 = vpop.f32.mrb[0].mxu0
      %v662 = vadd.f32 0.0, %v661
      %663 = vmatprep.mubr.bf16.mxu0 0
      %664 = vmatmul.mubr.bf16.gmra.mrb[0].mxu0 %v507
      %v665 = vpop.f32.mrb[0].mxu0
      %v666 = vadd.f32 0.0, %v665
      %v667 = vpop.f32.mrb[0].mxu0
      %v668 = vadd.f32 0.0, %v667
      %v669 = vpop.f32.mrb[0].mxu0
      %v670 = vadd.f32 0.0, %v669
      %v671 = vpop.f32.mrb[0].mxu0
      %v672 = vadd.f32 0.0, %v671
      %673 = vmatprep.mubr.bf16.mxu0 0
      %674 = vmatmul.mubr.bf16.gmra.mrb[0].mxu0 %v510
      %v675 = vpop.f32.mrb[0].mxu0
      %v676 = vadd.f32 0.0, %v675
      %v677 = vpop.f32.mrb[0].mxu0
      %v678 = vadd.f32 0.0, %v677
      %v679 = vpop.f32.mrb[0].mxu0
      %v680 = vadd.f32 0.0, %v679
      %v681 = vpop.f32.mrb[0].mxu0
      %v682 = vadd.f32 0.0, %v681
      %683 = vmatprep.mubr.bf16.mxu0 0
      %684 = vmatmul.mubr.bf16.gmra.mrb[0].mxu0 %v513
      %v685 = vpop.f32.mrb[0].mxu0
      %v686 = vadd.f32 0.0, %v685
      %v687 = vpop.f32.mrb[0].mxu0
      %v688 = vadd.f32 0.0, %v687
      %v689 = vpop.f32.mrb[0].mxu0
      %v690 = vadd.f32 0.0, %v689
      %v691 = vpop.f32.mrb[0].mxu0
      %v692 = vadd.f32 0.0, %v691
      %693 = vmatprep.mubr.bf16.mxu0 0
      %694 = vmatmul.mubr.bf16.gmra.mrb[0].mxu0 %v516
      %v695 = vpop.f32.mrb[0].mxu0
      %v696 = vadd.f32 0.0, %v695
      %v697 = vpop.f32.mrb[0].mxu0
      %v698 = vadd.f32 0.0, %v697
      %v699 = vpop.f32.mrb[0].mxu0
      %v700 = vadd.f32 0.0, %v699
      %v701 = vpop.f32.mrb[0].mxu0
      %v702 = vadd.f32 0.0, %v701
      %703 = vmatprep.mubr.bf16.mxu0 0
      %704 = vmatmul.mubr.bf16.gmra.mrb[0].mxu0 %v519
      %v705 = vpop.f32.mrb[0].mxu0
      %v706 = vadd.f32 0.0, %v705
      %v707 = vpop.f32.mrb[0].mxu0
      %v708 = vadd.f32 0.0, %v707
      %v709 = vpop.f32.mrb[0].mxu0
      %v710 = vadd.f32 0.0, %v709
      %v711 = vpop.f32.mrb[0].mxu0
      %v712 = vadd.f32 0.0, %v711
      %713 = vmatprep.mubr.bf16.mxu0 0
      %714 = vmatmul.mubr.bf16.gmra.mrb[0].mxu0 %v522
      %v715 = vpop.f32.mrb[0].mxu0
      %v716 = vadd.f32 0.0, %v715
      %v717 = vpop.f32.mrb[0].mxu0
      %v718 = vadd.f32 0.0, %v717
      %v719 = vpop.f32.mrb[0].mxu0
      %v720 = vadd.f32 0.0, %v719
      %v721 = vpop.f32.mrb[0].mxu0
      %v722 = vadd.f32 0.0, %v721
      %723 = vdwg.mxu0
      %v724 = vld [vmem:[%s6] sm:$0x1]
      %v726 = vlaneseq
      %v727 = vshrl.u32 %v726, 7
      %v728 = vsub.s32 0, %v727
      %v729 = vrot.slane %v724, %v728
      %v731 = vadd.f32 %v566, %v729
      %v732 = vadd.f32 %v570, %v729
      %v733 = vadd.f32 %v576, %v729
      %v734 = vadd.f32 %v580, %v729
      %v735 = vadd.f32 %v586, %v729
      %v736 = vadd.f32 %v590, %v729
      %v737 = vadd.f32 %v596, %v729
      %v738 = vadd.f32 %v600, %v729
      %v739 = vadd.f32 %v606, %v729
      %v740 = vadd.f32 %v610, %v729
      %v741 = vadd.f32 %v616, %v729
      %v742 = vadd.f32 %v620, %v729
      %v743 = vadd.f32 %v626, %v729
      %v744 = vadd.f32 %v630, %v729
      %v745 = vadd.f32 %v636, %v729
      %v746 = vadd.f32 %v640, %v729
      %v747 = vadd.f32 %v646, %v729
      %v748 = vadd.f32 %v650, %v729
      %v749 = vadd.f32 %v656, %v729
      %v750 = vadd.f32 %v660, %v729
      %v751 = vadd.f32 %v666, %v729
      %v752 = vadd.f32 %v670, %v729
      %v753 = vadd.f32 %v676, %v729
      %v754 = vadd.f32 %v680, %v729
      %v755 = vadd.f32 %v686, %v729
      %v756 = vadd.f32 %v690, %v729
      %v757 = vadd.f32 %v696, %v729
      %v758 = vadd.f32 %v700, %v729
      %v759 = vadd.f32 %v706, %v729
      %v760 = vadd.f32 %v710, %v729
      %v761 = vadd.f32 %v716, %v729
      %v762 = vadd.f32 %v720, %v729
      %v763 = vmax.f32 %v731, 0.0
      %v764 = vmax.f32 %v732, 0.0
      %v765 = vmax.f32 %v733, 0.0
      %v766 = vmax.f32 %v734, 0.0
      %v767 = vmax.f32 %v735, 0.0
      %v768 = vmax.f32 %v736, 0.0
      %v769 = vmax.f32 %v737, 0.0
      %v770 = vmax.f32 %v738, 0.0
      %v771 = vmax.f32 %v739, 0.0
      %v772 = vmax.f32 %v740, 0.0
      %v773 = vmax.f32 %v741, 0.0
      %v774 = vmax.f32 %v742, 0.0
      %v775 = vmax.f32 %v743, 0.0
      %v776 = vmax.f32 %v744, 0.0
      %v777 = vmax.f32 %v745, 0.0
      %v778 = vmax.f32 %v746, 0.0
      %v779 = vmax.f32 %v747, 0.0
      %v780 = vmax.f32 %v748, 0.0
      %v781 = vmax.f32 %v749, 0.0
      %v782 = vmax.f32 %v750, 0.0
      %v783 = vmax.f32 %v751, 0.0
      %v784 = vmax.f32 %v752, 0.0
      %v785 = vmax.f32 %v753, 0.0
      %v786 = vmax.f32 %v754, 0.0
      %v787 = vmax.f32 %v755, 0.0
      %v788 = vmax.f32 %v756, 0.0
      %v789 = vmax.f32 %v757, 0.0
      %v790 = vmax.f32 %v758, 0.0
      %v791 = vmax.f32 %v759, 0.0
      %v792 = vmax.f32 %v760, 0.0
      %v793 = vmax.f32 %v761, 0.0
      %v794 = vmax.f32 %v762, 0.0
      %795 = vst [vmem:[#allocation2] sm:$0xf] 0
      %796 = vst [vmem:[#allocation2 + $0x4] sm:$0xf] 0
      %797 = vst [vmem:[#allocation2 + $0x8] sm:$0x1] 0
      %s798 = scalar_lea.vmem [#allocation2], 204
      %799 = vst [vmem:[%s798] sm:$0xf] 0
      %800 = vst [vmem:[%s798 + $0x4] sm:$0xf] 0
      %801 = vst [vmem:[%s798 + $0x8] sm:$0x1] 0
      %s802 = scalar_lea.vmem [#allocation2], 12
      %vm803 = vcmask 1040384
      %vm804 = vsmask.f32 256
      %vm805 = vmand %vm803, %vm804
      %v806 = vld [vmem:[%s802] sm:$0x1]
      %v807 = vsel %vm805, 0, %v806
      %808 = vst [vmem:[%s802] sm:$0x1] %v807
      %v809 = vld [vmem:[%s802 + $0xc] sm:$0x1]
      %v810 = vsel %vm805, 0, %v809
      %811 = vst [vmem:[%s802 + $0xc] sm:$0x1] %v810
      %v812 = vld [vmem:[%s802 + $0x18] sm:$0x1]
      %v813 = vsel %vm805, 0, %v812
      %814 = vst [vmem:[%s802 + $0x18] sm:$0x1] %v813
      %v815 = vld [vmem:[%s802 + $0x24] sm:$0x1]
      %v816 = vsel %vm805, 0, %v815
      %817 = vst [vmem:[%s802 + $0x24] sm:$0x1] %v816
      %v818 = vld [vmem:[%s802 + $0x30] sm:$0x1]
      %v819 = vsel %vm805, 0, %v818
      %820 = vst [vmem:[%s802 + $0x30] sm:$0x1] %v819
      %v821 = vld [vmem:[%s802 + $0x3c] sm:$0x1]
      %v822 = vsel %vm805, 0, %v821
      %823 = vst [vmem:[%s802 + $0x3c] sm:$0x1] %v822
      %v824 = vld [vmem:[%s802 + $0x48] sm:$0x1]
      %v825 = vsel %vm805, 0, %v824
      %826 = vst [vmem:[%s802 + $0x48] sm:$0x1] %v825
      %v827 = vld [vmem:[%s802 + $0x54] sm:$0x1]
      %v828 = vsel %vm805, 0, %v827
      %829 = vst [vmem:[%s802 + $0x54] sm:$0x1] %v828
      %v830 = vld [vmem:[%s802 + $0x60] sm:$0x1]
      %v831 = vsel %vm805, 0, %v830
      %832 = vst [vmem:[%s802 + $0x60] sm:$0x1] %v831
      %v833 = vld [vmem:[%s802 + $0x6c] sm:$0x1]
      %v834 = vsel %vm805, 0, %v833
      %835 = vst [vmem:[%s802 + $0x6c] sm:$0x1] %v834
      %v836 = vld [vmem:[%s802 + $0x78] sm:$0x1]
      %v837 = vsel %vm805, 0, %v836
      %838 = vst [vmem:[%s802 + $0x78] sm:$0x1] %v837
      %v839 = vld [vmem:[%s802 + $0x84] sm:$0x1]
      %v840 = vsel %vm805, 0, %v839
      %841 = vst [vmem:[%s802 + $0x84] sm:$0x1] %v840
      %v842 = vld [vmem:[%s802 + $0x90] sm:$0x1]
      %v843 = vsel %vm805, 0, %v842
      %844 = vst [vmem:[%s802 + $0x90] sm:$0x1] %v843
      %v845 = vld [vmem:[%s802 + $0x9c] sm:$0x1]
      %v846 = vsel %vm805, 0, %v845
      %847 = vst [vmem:[%s802 + $0x9c] sm:$0x1] %v846
      %v848 = vld [vmem:[%s802 + $0xa8] sm:$0x1]
      %v849 = vsel %vm805, 0, %v848
      %850 = vst [vmem:[%s802 + $0xa8] sm:$0x1] %v849
      %v851 = vld [vmem:[%s802 + $0xb4] sm:$0x1]
      %v852 = vsel %vm805, 0, %v851
      %853 = vst [vmem:[%s802 + $0xb4] sm:$0x1] %v852
      %vm854 = vsmask.f32 7938
      %vm855 = vmand %vm803, %vm854
      %v856 = vld [vmem:[%s802 + $0x8] sm:$0x1]
      %v857 = vsel %vm855, 0, %v856
      %858 = vst [vmem:[%s802 + $0x8] sm:$0x1] %v857
      %v859 = vld [vmem:[%s802 + $0x14] sm:$0x1]
      %v860 = vsel %vm855, 0, %v859
      %861 = vst [vmem:[%s802 + $0x14] sm:$0x1] %v860
      %v862 = vld [vmem:[%s802 + $0x20] sm:$0x1]
      %v863 = vsel %vm855, 0, %v862
      %864 = vst [vmem:[%s802 + $0x20] sm:$0x1] %v863
      %v865 = vld [vmem:[%s802 + $0x2c] sm:$0x1]
      %v866 = vsel %vm855, 0, %v865
      %867 = vst [vmem:[%s802 + $0x2c] sm:$0x1] %v866
      %v868 = vld [vmem:[%s802 + $0x38] sm:$0x1]
      %v869 = vsel %vm855, 0, %v868
      %870 = vst [vmem:[%s802 + $0x38] sm:$0x1] %v869
      %v871 = vld [vmem:[%s802 + $0x44] sm:$0x1]
      %v872 = vsel %vm855, 0, %v871
      %873 = vst [vmem:[%s802 + $0x44] sm:$0x1] %v872
      %v874 = vld [vmem:[%s802 + $0x50] sm:$0x1]
      %v875 = vsel %vm855, 0, %v874
      %876 = vst [vmem:[%s802 + $0x50] sm:$0x1] %v875
      %v877 = vld [vmem:[%s802 + $0x5c] sm:$0x1]
      %v878 = vsel %vm855, 0, %v877
      %879 = vst [vmem:[%s802 + $0x5c] sm:$0x1] %v878
      %v880 = vld [vmem:[%s802 + $0x68] sm:$0x1]
      %v881 = vsel %vm855, 0, %v880
      %882 = vst [vmem:[%s802 + $0x68] sm:$0x1] %v881
      %v883 = vld [vmem:[%s802 + $0x74] sm:$0x1]
      %v884 = vsel %vm855, 0, %v883
      %885 = vst [vmem:[%s802 + $0x74] sm:$0x1] %v884
      %v886 = vld [vmem:[%s802 + $0x80] sm:$0x1]
      %v887 = vsel %vm855, 0, %v886
      %888 = vst [vmem:[%s802 + $0x80] sm:$0x1] %v887
      %v889 = vld [vmem:[%s802 + $0x8c] sm:$0x1]
      %v890 = vsel %vm855, 0, %v889
      %891 = vst [vmem:[%s802 + $0x8c] sm:$0x1] %v890
      %v892 = vld [vmem:[%s802 + $0x98] sm:$0x1]
      %v893 = vsel %vm855, 0, %v892
      %894 = vst [vmem:[%s802 + $0x98] sm:$0x1] %v893
      %v895 = vld [vmem:[%s802 + $0xa4] sm:$0x1]
      %v896 = vsel %vm855, 0, %v895
      %897 = vst [vmem:[%s802 + $0xa4] sm:$0x1] %v896
      %v898 = vld [vmem:[%s802 + $0xb0] sm:$0x1]
      %v899 = vsel %vm855, 0, %v898
      %900 = vst [vmem:[%s802 + $0xb0] sm:$0x1] %v899
      %v901 = vld [vmem:[%s802 + $0xbc] sm:$0x1]
      %v902 = vsel %vm855, 0, %v901
      %903 = vst [vmem:[%s802 + $0xbc] sm:$0x1] %v902
      %v904 = vpack.c.bf16 %v764, %v763
      %v905 = vpack.c.bf16 %v766, %v765
      %v906 = vpack.c.bf16 %v768, %v767
      %v907 = vpack.c.bf16 %v770, %v769
      %v908 = vpack.c.bf16 %v772, %v771
      %v909 = vpack.c.bf16 %v774, %v773
      %v910 = vpack.c.bf16 %v776, %v775
      %v911 = vpack.c.bf16 %v778, %v777
      %v912 = vpack.c.bf16 %v780, %v779
      %v913 = vpack.c.bf16 %v782, %v781
      %v914 = vpack.c.bf16 %v784, %v783
      %v915 = vpack.c.bf16 %v786, %v785
      %v916 = vpack.c.bf16 %v788, %v787
      %v917 = vpack.c.bf16 %v790, %v789
      %v918 = vpack.c.bf16 %v792, %v791
      %v919 = vpack.c.bf16 %v794, %v793
      %v936 = vunpack.c.l.b16 %v904
      %v937 = vunpack.c.h.b16 %v904
      %v938 = vunpack.c.l.b16 %v905
      %v939 = vunpack.c.h.b16 %v905
      %v940 = vunpack.c.l.b16 %v906
      %v941 = vunpack.c.h.b16 %v906
      %v942 = vunpack.c.l.b16 %v907
      %v943 = vunpack.c.h.b16 %v907
      %v944 = vunpack.c.l.b16 %v908
      %v945 = vunpack.c.h.b16 %v908
      %v946 = vunpack.c.l.b16 %v909
      %v947 = vunpack.c.h.b16 %v909
      %v948 = vunpack.c.l.b16 %v910
      %v949 = vunpack.c.h.b16 %v910
      %v950 = vunpack.c.l.b16 %v911
      %v951 = vunpack.c.h.b16 %v911
      %v952 = vunpack.c.l.b16 %v912
      %v953 = vunpack.c.h.b16 %v912
      %v954 = vunpack.c.l.b16 %v913
      %v955 = vunpack.c.h.b16 %v913
      %v956 = vunpack.c.l.b16 %v914
      %v957 = vunpack.c.h.b16 %v914
      %v958 = vunpack.c.l.b16 %v915
      %v959 = vunpack.c.h.b16 %v915
      %v960 = vunpack.c.l.b16 %v916
      %v961 = vunpack.c.h.b16 %v916
      %v962 = vunpack.c.l.b16 %v917
      %v963 = vunpack.c.h.b16 %v917
      %v964 = vunpack.c.l.b16 %v918
      %v965 = vunpack.c.h.b16 %v918
      %v966 = vunpack.c.l.b16 %v919
      %v967 = vunpack.c.h.b16 %v919
      %v968 = vpack.c.b16 %v936, %v936
      %v969 = vpack.c.b16 %v937, %v937
      %v970 = vpack.c.b16 %v938, %v938
      %v971 = vpack.c.b16 %v939, %v939
      %v972 = vpack.c.b16 %v940, %v940
      %v973 = vpack.c.b16 %v941, %v941
      %v974 = vpack.c.b16 %v942, %v942
      %v975 = vpack.c.b16 %v943, %v943
      %v976 = vpack.c.b16 %v944, %v944
      %v977 = vpack.c.b16 %v945, %v945
      %v978 = vpack.c.b16 %v946, %v946
      %v979 = vpack.c.b16 %v947, %v947
      %v980 = vpack.c.b16 %v948, %v948
      %v981 = vpack.c.b16 %v949, %v949
      %v982 = vpack.c.b16 %v950, %v950
      %v983 = vpack.c.b16 %v951, %v951
      %v984 = vpack.c.b16 %v952, %v952
      %v985 = vpack.c.b16 %v953, %v953
      %v986 = vpack.c.b16 %v954, %v954
      %v987 = vpack.c.b16 %v955, %v955
      %v988 = vpack.c.b16 %v956, %v956
      %v989 = vpack.c.b16 %v957, %v957
      %v990 = vpack.c.b16 %v958, %v958
      %v991 = vpack.c.b16 %v959, %v959
      %v992 = vpack.c.b16 %v960, %v960
      %v993 = vpack.c.b16 %v961, %v961
      %v994 = vpack.c.b16 %v962, %v962
      %v995 = vpack.c.b16 %v963, %v963
      %v996 = vpack.c.b16 %v964, %v964
      %v997 = vpack.c.b16 %v965, %v965
      %v998 = vpack.c.b16 %v966, %v966
      %v999 = vpack.c.b16 %v967, %v967
      %vm1000 = vsmask.f32 4368
      %vm1001 = vmor %vm804, %vm1000
      %v1003 = vshrl.u32 %v968, 16
      %v1005 = vrot.slane %v1003, 7
      %v1006 = vshll.u32 %v968, 16
      %v1008 = vor.u32 %v1005, %v1006
      %v1009 = vrot.slane %v1005, 4
      %v1011 = vshrl.u32 %v969, 16
      %v1013 = vrot.slane %v1011, 7
      %v1014 = vshll.u32 %v969, 16
      %v1016 = vor.u32 %v1013, %v1014
      %v1017 = vsel %vm1001, %v1009, %v1016
      %v1018 = vrot.slane %v1013, 4
      %v1020 = vshrl.u32 %v970, 16
      %v1022 = vrot.slane %v1020, 7
      %v1023 = vshll.u32 %v970, 16
      %v1025 = vor.u32 %v1022, %v1023
      %v1026 = vrot.slane %v1022, 4
      %v1028 = vshrl.u32 %v971, 16
      %v1030 = vrot.slane %v1028, 7
      %v1031 = vshll.u32 %v971, 16
      %v1033 = vor.u32 %v1030, %v1031
      %v1034 = vsel %vm1001, %v1026, %v1033
      %v1035 = vrot.slane %v1030, 4
      %v1037 = vshrl.u32 %v972, 16
      %v1039 = vrot.slane %v1037, 7
      %v1040 = vshll.u32 %v972, 16
      %v1042 = vor.u32 %v1039, %v1040
      %v1043 = vrot.slane %v1039, 4
      %v1045 = vshrl.u32 %v973, 16
      %v1047 = vrot.slane %v1045, 7
      %v1048 = vshll.u32 %v973, 16
      %v1050 = vor.u32 %v1047, %v1048
      %v1051 = vsel %vm1001, %v1043, %v1050
      %v1052 = vrot.slane %v1047, 4
      %v1054 = vshrl.u32 %v974, 16
      %v1056 = vrot.slane %v1054, 7
      %v1057 = vshll.u32 %v974, 16
      %v1059 = vor.u32 %v1056, %v1057
      %v1060 = vrot.slane %v1056, 4
      %v1062 = vshrl.u32 %v975, 16
      %v1064 = vrot.slane %v1062, 7
      %v1065 = vshll.u32 %v975, 16
      %v1067 = vor.u32 %v1064, %v1065
      %v1068 = vsel %vm1001, %v1060, %v1067
      %v1069 = vrot.slane %v1064, 4
      %v1071 = vshrl.u32 %v976, 16
      %v1073 = vrot.slane %v1071, 7
      %v1074 = vshll.u32 %v976, 16
      %v1076 = vor.u32 %v1073, %v1074
      %v1077 = vrot.slane %v1073, 4
      %v1079 = vshrl.u32 %v977, 16
      %v1081 = vrot.slane %v1079, 7
      %v1082 = vshll.u32 %v977, 16
      %v1084 = vor.u32 %v1081, %v1082
      %v1085 = vsel %vm1001, %v1077, %v1084
      %v1086 = vrot.slane %v1081, 4
      %v1088 = vshrl.u32 %v978, 16
      %v1090 = vrot.slane %v1088, 7
      %v1091 = vshll.u32 %v978, 16
      %v1093 = vor.u32 %v1090, %v1091
      %v1094 = vrot.slane %v1090, 4
      %v1096 = vshrl.u32 %v979, 16
      %v1098 = vrot.slane %v1096, 7
      %v1099 = vshll.u32 %v979, 16
      %v1101 = vor.u32 %v1098, %v1099
      %v1102 = vsel %vm1001, %v1094, %v1101
      %v1103 = vrot.slane %v1098, 4
      %v1105 = vshrl.u32 %v980, 16
      %v1107 = vrot.slane %v1105, 7
      %v1108 = vshll.u32 %v980, 16
      %v1110 = vor.u32 %v1107, %v1108
      %v1111 = vrot.slane %v1107, 4
      %v1113 = vshrl.u32 %v981, 16
      %v1115 = vrot.slane %v1113, 7
      %v1116 = vshll.u32 %v981, 16
      %v1118 = vor.u32 %v1115, %v1116
      %v1119 = vsel %vm1001, %v1111, %v1118
      %v1120 = vrot.slane %v1115, 4
      %v1122 = vshrl.u32 %v982, 16
      %v1124 = vrot.slane %v1122, 7
      %v1125 = vshll.u32 %v982, 16
      %v1127 = vor.u32 %v1124, %v1125
      %v1128 = vrot.slane %v1124, 4
      %v1130 = vshrl.u32 %v983, 16
      %v1132 = vrot.slane %v1130, 7
      %v1133 = vshll.u32 %v983, 16
      %v1135 = vor.u32 %v1132, %v1133
      %v1136 = vsel %vm1001, %v1128, %v1135
      %v1137 = vrot.slane %v1132, 4
      %v1139 = vshrl.u32 %v984, 16
      %v1141 = vrot.slane %v1139, 7
      %v1142 = vshll.u32 %v984, 16
      %v1144 = vor.u32 %v1141, %v1142
      %v1145 = vrot.slane %v1141, 4
      %v1147 = vshrl.u32 %v985, 16
      %v1149 = vrot.slane %v1147, 7
      %v1150 = vshll.u32 %v985, 16
      %v1152 = vor.u32 %v1149, %v1150
      %v1153 = vsel %vm1001, %v1145, %v1152
      %v1154 = vrot.slane %v1149, 4
      %v1156 = vshrl.u32 %v986, 16
      %v1158 = vrot.slane %v1156, 7
      %v1159 = vshll.u32 %v986, 16
      %v1161 = vor.u32 %v1158, %v1159
      %v1162 = vrot.slane %v1158, 4
      %v1164 = vshrl.u32 %v987, 16
      %v1166 = vrot.slane %v1164, 7
      %v1167 = vshll.u32 %v987, 16
      %v1169 = vor.u32 %v1166, %v1167
      %v1170 = vsel %vm1001, %v1162, %v1169
      %v1171 = vrot.slane %v1166, 4
      %v1173 = vshrl.u32 %v988, 16
      %v1175 = vrot.slane %v1173, 7
      %v1176 = vshll.u32 %v988, 16
      %v1178 = vor.u32 %v1175, %v1176
      %v1179 = vrot.slane %v1175, 4
      %v1181 = vshrl.u32 %v989, 16
      %v1183 = vrot.slane %v1181, 7
      %v1184 = vshll.u32 %v989, 16
      %v1186 = vor.u32 %v1183, %v1184
      %v1187 = vsel %vm1001, %v1179, %v1186
      %v1188 = vrot.slane %v1183, 4
      %v1190 = vshrl.u32 %v990, 16
      %v1192 = vrot.slane %v1190, 7
      %v1193 = vshll.u32 %v990, 16
      %v1195 = vor.u32 %v1192, %v1193
      %v1196 = vrot.slane %v1192, 4
      %v1198 = vshrl.u32 %v991, 16
      %v1200 = vrot.slane %v1198, 7
      %v1201 = vshll.u32 %v991, 16
      %v1203 = vor.u32 %v1200, %v1201
      %v1204 = vsel %vm1001, %v1196, %v1203
      %v1205 = vrot.slane %v1200, 4
      %v1207 = vshrl.u32 %v992, 16
      %v1209 = vrot.slane %v1207, 7
      %v1210 = vshll.u32 %v992, 16
      %v1212 = vor.u32 %v1209, %v1210
      %v1213 = vrot.slane %v1209, 4
      %v1215 = vshrl.u32 %v993, 16
      %v1217 = vrot.slane %v1215, 7
      %v1218 = vshll.u32 %v993, 16
      %v1220 = vor.u32 %v1217, %v1218
      %v1221 = vsel %vm1001, %v1213, %v1220
      %v1222 = vrot.slane %v1217, 4
      %v1224 = vshrl.u32 %v994, 16
      %v1226 = vrot.slane %v1224, 7
      %v1227 = vshll.u32 %v994, 16
      %v1229 = vor.u32 %v1226, %v1227
      %v1230 = vrot.slane %v1226, 4
      %v1232 = vshrl.u32 %v995, 16
      %v1234 = vrot.slane %v1232, 7
      %v1235 = vshll.u32 %v995, 16
      %v1237 = vor.u32 %v1234, %v1235
      %v1238 = vsel %vm1001, %v1230, %v1237
      %v1239 = vrot.slane %v1234, 4
      %v1241 = vshrl.u32 %v996, 16
      %v1243 = vrot.slane %v1241, 7
      %v1244 = vshll.u32 %v996, 16
      %v1246 = vor.u32 %v1243, %v1244
      %v1247 = vrot.slane %v1243, 4
      %v1249 = vshrl.u32 %v997, 16
      %v1251 = vrot.slane %v1249, 7
      %v1252 = vshll.u32 %v997, 16
      %v1254 = vor.u32 %v1251, %v1252
      %v1255 = vsel %vm1001, %v1247, %v1254
      %v1256 = vrot.slane %v1251, 4
      %v1258 = vshrl.u32 %v998, 16
      %v1260 = vrot.slane %v1258, 7
      %v1261 = vshll.u32 %v998, 16
      %v1263 = vor.u32 %v1260, %v1261
      %v1264 = vrot.slane %v1260, 4
      %v1266 = vshrl.u32 %v999, 16
      %v1268 = vrot.slane %v1266, 7
      %v1269 = vshll.u32 %v999, 16
      %v1271 = vor.u32 %v1268, %v1269
      %v1272 = vsel %vm1001, %v1264, %v1271
      %v1273 = vrot.slane %v1268, 4
      %vm1322 = vcmask 1043456
      %vm1323 = vmand %vm1322, %vm854
      %v1324 = vld [vmem:[%s802] sm:$0xf]
      %v1325 = vsel %vm1323, %v1008, %v1324
      %1326 = vst [vmem:[%s802] sm:$0xf] %v1325
      %1327 = vst [vmem:[%s802 + $0x4] sm:$0xf] %v1017
      %v1328 = vld [vmem:[%s802 + $0x8] sm:$0x1]
      %v1329 = vsel %vm805, %v1018, %v1328
      %1330 = vst [vmem:[%s802 + $0x8] sm:$0x1] %v1329
      %v1331 = vld [vmem:[%s802 + $0xc] sm:$0xf]
      %v1332 = vsel %vm1323, %v1025, %v1331
      %1333 = vst [vmem:[%s802 + $0xc] sm:$0xf] %v1332
      %1334 = vst [vmem:[%s802 + $0x10] sm:$0xf] %v1034
      %v1335 = vld [vmem:[%s802 + $0x14] sm:$0x1]
      %v1336 = vsel %vm805, %v1035, %v1335
      %1337 = vst [vmem:[%s802 + $0x14] sm:$0x1] %v1336
      %v1338 = vld [vmem:[%s802 + $0x18] sm:$0xf]
      %v1339 = vsel %vm1323, %v1042, %v1338
      %1340 = vst [vmem:[%s802 + $0x18] sm:$0xf] %v1339
      %1341 = vst [vmem:[%s802 + $0x1c] sm:$0xf] %v1051
      %v1342 = vld [vmem:[%s802 + $0x20] sm:$0x1]
      %v1343 = vsel %vm805, %v1052, %v1342
      %1344 = vst [vmem:[%s802 + $0x20] sm:$0x1] %v1343
      %v1345 = vld [vmem:[%s802 + $0x24] sm:$0xf]
      %v1346 = vsel %vm1323, %v1059, %v1345
      %1347 = vst [vmem:[%s802 + $0x24] sm:$0xf] %v1346
      %1348 = vst [vmem:[%s802 + $0x28] sm:$0xf] %v1068
      %v1349 = vld [vmem:[%s802 + $0x2c] sm:$0x1]
      %v1350 = vsel %vm805, %v1069, %v1349
      %1351 = vst [vmem:[%s802 + $0x2c] sm:$0x1] %v1350
      %v1352 = vld [vmem:[%s802 + $0x30] sm:$0xf]
      %v1353 = vsel %vm1323, %v1076, %v1352
      %1354 = vst [vmem:[%s802 + $0x30] sm:$0xf] %v1353
      %1355 = vst [vmem:[%s802 + $0x34] sm:$0xf] %v1085
      %v1356 = vld [vmem:[%s802 + $0x38] sm:$0x1]
      %v1357 = vsel %vm805, %v1086, %v1356
      %1358 = vst [vmem:[%s802 + $0x38] sm:$0x1] %v1357
      %v1359 = vld [vmem:[%s802 + $0x3c] sm:$0xf]
      %v1360 = vsel %vm1323, %v1093, %v1359
      %1361 = vst [vmem:[%s802 + $0x3c] sm:$0xf] %v1360
      %1362 = vst [vmem:[%s802 + $0x40] sm:$0xf] %v1102
      %v1363 = vld [vmem:[%s802 + $0x44] sm:$0x1]
      %v1364 = vsel %vm805, %v1103, %v1363
      %1365 = vst [vmem:[%s802 + $0x44] sm:$0x1] %v1364
      %v1366 = vld [vmem:[%s802 + $0x48] sm:$0xf]
      %v1367 = vsel %vm1323, %v1110, %v1366
      %1368 = vst [vmem:[%s802 + $0x48] sm:$0xf] %v1367
      %1369 = vst [vmem:[%s802 + $0x4c] sm:$0xf] %v1119
      %v1370 = vld [vmem:[%s802 + $0x50] sm:$0x1]
      %v1371 = vsel %vm805, %v1120, %v1370
      %1372 = vst [vmem:[%s802 + $0x50] sm:$0x1] %v1371
      %v1373 = vld [vmem:[%s802 + $0x54] sm:$0xf]
      %v1374 = vsel %vm1323, %v1127, %v1373
      %1375 = vst [vmem:[%s802 + $0x54] sm:$0xf] %v1374
      %1376 = vst [vmem:[%s802 + $0x58] sm:$0xf] %v1136
      %v1377 = vld [vmem:[%s802 + $0x5c] sm:$0x1]
      %v1378 = vsel %vm805, %v1137, %v1377
      %1379 = vst [vmem:[%s802 + $0x5c] sm:$0x1] %v1378
      %v1380 = vld [vmem:[%s802 + $0x60] sm:$0xf]
      %v1381 = vsel %vm1323, %v1144, %v1380
      %1382 = vst [vmem:[%s802 + $0x60] sm:$0xf] %v1381
      %1383 = vst [vmem:[%s802 + $0x64] sm:$0xf] %v1153
      %v1384 = vld [vmem:[%s802 + $0x68] sm:$0x1]
      %v1385 = vsel %vm805, %v1154, %v1384
      %1386 = vst [vmem:[%s802 + $0x68] sm:$0x1] %v1385
      %v1387 = vld [vmem:[%s802 + $0x6c] sm:$0xf]
      %v1388 = vsel %vm1323, %v1161, %v1387
      %1389 = vst [vmem:[%s802 + $0x6c] sm:$0xf] %v1388
      %1390 = vst [vmem:[%s802 + $0x70] sm:$0xf] %v1170
      %v1391 = vld [vmem:[%s802 + $0x74] sm:$0x1]
      %v1392 = vsel %vm805, %v1171, %v1391
      %1393 = vst [vmem:[%s802 + $0x74] sm:$0x1] %v1392
      %v1394 = vld [vmem:[%s802 + $0x78] sm:$0xf]
      %v1395 = vsel %vm1323, %v1178, %v1394
      %1396 = vst [vmem:[%s802 + $0x78] sm:$0xf] %v1395
      %1397 = vst [vmem:[%s802 + $0x7c] sm:$0xf] %v1187
      %v1398 = vld [vmem:[%s802 + $0x80] sm:$0x1]
      %v1399 = vsel %vm805, %v1188, %v1398
      %1400 = vst [vmem:[%s802 + $0x80] sm:$0x1] %v1399
      %v1401 = vld [vmem:[%s802 + $0x84] sm:$0xf]
      %v1402 = vsel %vm1323, %v1195, %v1401
      %1403 = vst [vmem:[%s802 + $0x84] sm:$0xf] %v1402
      %1404 = vst [vmem:[%s802 + $0x88] sm:$0xf] %v1204
      %v1405 = vld [vmem:[%s802 + $0x8c] sm:$0x1]
      %v1406 = vsel %vm805, %v1205, %v1405
      %1407 = vst [vmem:[%s802 + $0x8c] sm:$0x1] %v1406
      %v1408 = vld [vmem:[%s802 + $0x90] sm:$0xf]
      %v1409 = vsel %vm1323, %v1212, %v1408
      %1410 = vst [vmem:[%s802 + $0x90] sm:$0xf] %v1409
      %1411 = vst [vmem:[%s802 + $0x94] sm:$0xf] %v1221
      %v1412 = vld [vmem:[%s802 + $0x98] sm:$0x1]
      %v1413 = vsel %vm805, %v1222, %v1412
      %1414 = vst [vmem:[%s802 + $0x98] sm:$0x1] %v1413
      %v1415 = vld [vmem:[%s802 + $0x9c] sm:$0xf]
      %v1416 = vsel %vm1323, %v1229, %v1415
      %1417 = vst [vmem:[%s802 + $0x9c] sm:$0xf] %v1416
      %1418 = vst [vmem:[%s802 + $0xa0] sm:$0xf] %v1238
      %v1419 = vld [vmem:[%s802 + $0xa4] sm:$0x1]
      %v1420 = vsel %vm805, %v1239, %v1419
      %1421 = vst [vmem:[%s802 + $0xa4] sm:$0x1] %v1420
      %v1422 = vld [vmem:[%s802 + $0xa8] sm:$0xf]
      %v1423 = vsel %vm1323, %v1246, %v1422
      %1424 = vst [vmem:[%s802 + $0xa8] sm:$0xf] %v1423
      %1425 = vst [vmem:[%s802 + $0xac] sm:$0xf] %v1255
      %v1426 = vld [vmem:[%s802 + $0xb0] sm:$0x1]
      %v1427 = vsel %vm805, %v1256, %v1426
      %1428 = vst [vmem:[%s802 + $0xb0] sm:$0x1] %v1427
      %v1429 = vld [vmem:[%s802 + $0xb4] sm:$0xf]
      %v1430 = vsel %vm1323, %v1263, %v1429
      %1431 = vst [vmem:[%s802 + $0xb4] sm:$0xf] %v1430
      %1432 = vst [vmem:[%s802 + $0xb8] sm:$0xf] %v1272
      %v1433 = vld [vmem:[%s802 + $0xbc] sm:$0x1]
      %v1434 = vsel %vm805, %v1273, %v1433
      %1435 = vst [vmem:[%s802 + $0xbc] sm:$0x1] %v1434
      %v1436 = vld [vmem:[#allocation2] sm:$0xf]
      %v1437 = vld [vmem:[#allocation2 + $0x4] sm:$0xf]
      %v1438 = vld [vmem:[#allocation2 + $0xc] sm:$0xf]
      %v1439 = vld [vmem:[#allocation2 + $0x10] sm:$0xf]
      %v1440 = vld [vmem:[#allocation2 + $0x18] sm:$0xf]
      %v1441 = vld [vmem:[#allocation2 + $0x1c] sm:$0xf]
      %v1442 = vld [vmem:[#allocation2 + $0x24] sm:$0xf]
      %v1443 = vld [vmem:[#allocation2 + $0x28] sm:$0xf]
      %v1444 = vld [vmem:[#allocation2 + $0x30] sm:$0xf]
      %v1445 = vld [vmem:[#allocation2 + $0x34] sm:$0xf]
      %v1446 = vld [vmem:[#allocation2 + $0x3c] sm:$0xf]
      %v1447 = vld [vmem:[#allocation2 + $0x40] sm:$0xf]
      %v1448 = vld [vmem:[#allocation2 + $0x48] sm:$0xf]
      %v1449 = vld [vmem:[#allocation2 + $0x4c] sm:$0xf]
      %v1450 = vld [vmem:[#allocation2 + $0x54] sm:$0xf]
      %v1451 = vld [vmem:[#allocation2 + $0x58] sm:$0xf]
      %v1452 = vld [vmem:[#allocation2 + $0x60] sm:$0xf]
      %v1453 = vld [vmem:[#allocation2 + $0x64] sm:$0xf]
      %v1454 = vld [vmem:[#allocation2 + $0x6c] sm:$0xf]
      %v1455 = vld [vmem:[#allocation2 + $0x70] sm:$0xf]
      %v1456 = vld [vmem:[#allocation2 + $0x78] sm:$0xf]
      %v1457 = vld [vmem:[#allocation2 + $0x7c] sm:$0xf]
      %v1458 = vld [vmem:[#allocation2 + $0x84] sm:$0xf]
      %v1459 = vld [vmem:[#allocation2 + $0x88] sm:$0xf]
      %v1460 = vld [vmem:[#allocation2 + $0x90] sm:$0xf]
      %v1461 = vld [vmem:[#allocation2 + $0x94] sm:$0xf]
      %v1462 = vld [vmem:[#allocation2 + $0x9c] sm:$0xf]
      %v1463 = vld [vmem:[#allocation2 + $0xa0] sm:$0xf]
      %v1464 = vld [vmem:[#allocation2 + $0xa8] sm:$0xf]
      %v1465 = vld [vmem:[#allocation2 + $0xac] sm:$0xf]
      %v1466 = vld [vmem:[#allocation2 + $0xb4] sm:$0xf]
      %v1467 = vld [vmem:[#allocation2 + $0xb8] sm:$0xf]
      %v1468 = vld [vmem:[#allocation2 + $0x8] sm:$0x1]
      %v1469 = vld [vmem:[#allocation2 + $0x14] sm:$0x1]
      %v1470 = vld [vmem:[#allocation2 + $0x20] sm:$0x1]
      %v1471 = vld [vmem:[#allocation2 + $0x2c] sm:$0x1]
      %v1472 = vld [vmem:[#allocation2 + $0x38] sm:$0x1]
      %v1473 = vld [vmem:[#allocation2 + $0x44] sm:$0x1]
      %v1474 = vld [vmem:[#allocation2 + $0x50] sm:$0x1]
      %v1475 = vld [vmem:[#allocation2 + $0x5c] sm:$0x1]
      %v1476 = vld [vmem:[#allocation2 + $0x68] sm:$0x1]
      %v1477 = vld [vmem:[#allocation2 + $0x74] sm:$0x1]
      %v1478 = vld [vmem:[#allocation2 + $0x80] sm:$0x1]
      %v1479 = vld [vmem:[#allocation2 + $0x8c] sm:$0x1]
      %v1480 = vld [vmem:[#allocation2 + $0x98] sm:$0x1]
      %v1481 = vld [vmem:[#allocation2 + $0xa4] sm:$0x1]
      %v1482 = vld [vmem:[#allocation2 + $0xb0] sm:$0x1]
      %v1483 = vld [vmem:[#allocation2 + $0xbc] sm:$0x1]
      %v1484 = vld [vmem:[#allocation2] sm:$0xe]
      %v1485 = vld [vmem:[#allocation2 + $0xc] sm:$0xe]
      %v1486 = vld [vmem:[#allocation2 + $0x18] sm:$0xe]
      %v1487 = vld [vmem:[#allocation2 + $0x24] sm:$0xe]
      %v1488 = vld [vmem:[#allocation2 + $0x30] sm:$0xe]
      %v1489 = vld [vmem:[#allocation2 + $0x3c] sm:$0xe]
      %v1490 = vld [vmem:[#allocation2 + $0x48] sm:$0xe]
      %v1491 = vld [vmem:[#allocation2 + $0x54] sm:$0xe]
      %v1492 = vld [vmem:[#allocation2 + $0x60] sm:$0xe]
      %v1493 = vld [vmem:[#allocation2 + $0x6c] sm:$0xe]
      %v1494 = vld [vmem:[#allocation2 + $0x78] sm:$0xe]
      %v1495 = vld [vmem:[#allocation2 + $0x84] sm:$0xe]
      %v1496 = vld [vmem:[#allocation2 + $0x90] sm:$0xe]
      %v1497 = vld [vmem:[#allocation2 + $0x9c] sm:$0xe]
      %v1498 = vld [vmem:[#allocation2 + $0xa8] sm:$0xe]
      %v1499 = vld [vmem:[#allocation2 + $0xb4] sm:$0xe]
      %v1532 = vunpack.c.l.b16 %v1436
      %v1533 = vunpack.c.l.b16 %v1437
      %v1534 = vunpack.c.l.b16 %v1438
      %v1535 = vunpack.c.l.b16 %v1439
      %v1536 = vunpack.c.l.b16 %v1440
      %v1537 = vunpack.c.l.b16 %v1441
      %v1538 = vunpack.c.l.b16 %v1442
      %v1539 = vunpack.c.l.b16 %v1443
      %v1540 = vunpack.c.l.b16 %v1444
      %v1541 = vunpack.c.l.b16 %v1445
      %v1542 = vunpack.c.l.b16 %v1446
      %v1543 = vunpack.c.l.b16 %v1447
      %v1544 = vunpack.c.l.b16 %v1448
      %v1545 = vunpack.c.l.b16 %v1449
      %v1546 = vunpack.c.l.b16 %v1450
      %v1547 = vunpack.c.l.b16 %v1451
      %v1548 = vunpack.c.l.b16 %v1452
      %v1549 = vunpack.c.l.b16 %v1453
      %v1550 = vunpack.c.l.b16 %v1454
      %v1551 = vunpack.c.l.b16 %v1455
      %v1552 = vunpack.c.l.b16 %v1456
      %v1553 = vunpack.c.l.b16 %v1457
      %v1554 = vunpack.c.l.b16 %v1458
      %v1555 = vunpack.c.l.b16 %v1459
      %v1556 = vunpack.c.l.b16 %v1460
      %v1557 = vunpack.c.l.b16 %v1461
      %v1558 = vunpack.c.l.b16 %v1462
      %v1559 = vunpack.c.l.b16 %v1463
      %v1560 = vunpack.c.l.b16 %v1464
      %v1561 = vunpack.c.l.b16 %v1465
      %v1562 = vunpack.c.l.b16 %v1466
      %v1563 = vunpack.c.l.b16 %v1467
      %v1564 = vpack.c.b16 %v1533, %v1532
      %v1565 = vpack.c.b16 %v1535, %v1534
      %v1566 = vpack.c.b16 %v1537, %v1536
      %v1567 = vpack.c.b16 %v1539, %v1538
      %v1568 = vpack.c.b16 %v1541, %v1540
      %v1569 = vpack.c.b16 %v1543, %v1542
      %v1570 = vpack.c.b16 %v1545, %v1544
      %v1571 = vpack.c.b16 %v1547, %v1546
      %v1572 = vpack.c.b16 %v1549, %v1548
      %v1573 = vpack.c.b16 %v1551, %v1550
      %v1574 = vpack.c.b16 %v1553, %v1552
      %v1575 = vpack.c.b16 %v1555, %v1554
      %v1576 = vpack.c.b16 %v1557, %v1556
      %v1577 = vpack.c.b16 %v1559, %v1558
      %v1578 = vpack.c.b16 %v1561, %v1560
      %v1579 = vpack.c.b16 %v1563, %v1562
      %v1612 = vunpack.c.l.b16 %v1468
      %v1613 = vunpack.c.l.b16 %v1469
      %v1614 = vunpack.c.l.b16 %v1470
      %v1615 = vunpack.c.l.b16 %v1471
      %v1616 = vunpack.c.l.b16 %v1472
      %v1617 = vunpack.c.l.b16 %v1473
      %v1618 = vunpack.c.l.b16 %v1474
      %v1619 = vunpack.c.l.b16 %v1475
      %v1620 = vunpack.c.l.b16 %v1476
      %v1621 = vunpack.c.l.b16 %v1477
      %v1622 = vunpack.c.l.b16 %v1478
      %v1623 = vunpack.c.l.b16 %v1479
      %v1624 = vunpack.c.l.b16 %v1480
      %v1625 = vunpack.c.l.b16 %v1481
      %v1626 = vunpack.c.l.b16 %v1482
      %v1627 = vunpack.c.l.b16 %v1483
      %v1628 = vpack.c.b16 %v1612, %v1612
      %v1629 = vpack.c.b16 %v1613, %v1613
      %v1630 = vpack.c.b16 %v1614, %v1614
      %v1631 = vpack.c.b16 %v1615, %v1615
      %v1632 = vpack.c.b16 %v1616, %v1616
      %v1633 = vpack.c.b16 %v1617, %v1617
      %v1634 = vpack.c.b16 %v1618, %v1618
      %v1635 = vpack.c.b16 %v1619, %v1619
      %v1636 = vpack.c.b16 %v1620, %v1620
      %v1637 = vpack.c.b16 %v1621, %v1621
      %v1638 = vpack.c.b16 %v1622, %v1622
      %v1639 = vpack.c.b16 %v1623, %v1623
      %v1640 = vpack.c.b16 %v1624, %v1624
      %v1641 = vpack.c.b16 %v1625, %v1625
      %v1642 = vpack.c.b16 %v1626, %v1626
      %v1643 = vpack.c.b16 %v1627, %v1627
      %vm1644 = vsmask.f32 7424
      %v1646 = vshrl.u32 %v1564, 16
      %v1648 = vshll.u32 %v1564, 16
      %v1650 = vrot.slane %v1648, 1
      %v1651 = vor.u32 %v1646, %v1650
      %v1653 = vshll.u32 %v1628, 16
      %v1655 = vrot.slane %v1653, 1
      %v1656 = vsel %vm1644, %v1651, %v1655
      %v1658 = vshrl.u32 %v1565, 16
      %v1660 = vshll.u32 %v1565, 16
      %v1662 = vrot.slane %v1660, 1
      %v1663 = vor.u32 %v1658, %v1662
      %v1665 = vshll.u32 %v1629, 16
      %v1667 = vrot.slane %v1665, 1
      %v1668 = vsel %vm1644, %v1663, %v1667
      %v1670 = vshrl.u32 %v1566, 16
      %v1672 = vshll.u32 %v1566, 16
      %v1674 = vrot.slane %v1672, 1
      %v1675 = vor.u32 %v1670, %v1674
      %v1677 = vshll.u32 %v1630, 16
      %v1679 = vrot.slane %v1677, 1
      %v1680 = vsel %vm1644, %v1675, %v1679
      %v1682 = vshrl.u32 %v1567, 16
      %v1684 = vshll.u32 %v1567, 16
      %v1686 = vrot.slane %v1684, 1
      %v1687 = vor.u32 %v1682, %v1686
      %v1689 = vshll.u32 %v1631, 16
      %v1691 = vrot.slane %v1689, 1
      %v1692 = vsel %vm1644, %v1687, %v1691
      %v1694 = vshrl.u32 %v1568, 16
      %v1696 = vshll.u32 %v1568, 16
      %v1698 = vrot.slane %v1696, 1
      %v1699 = vor.u32 %v1694, %v1698
      %v1701 = vshll.u32 %v1632, 16
      %v1703 = vrot.slane %v1701, 1
      %v1704 = vsel %vm1644, %v1699, %v1703
      %v1706 = vshrl.u32 %v1569, 16
      %v1708 = vshll.u32 %v1569, 16
      %v1710 = vrot.slane %v1708, 1
      %v1711 = vor.u32 %v1706, %v1710
      %v1713 = vshll.u32 %v1633, 16
      %v1715 = vrot.slane %v1713, 1
      %v1716 = vsel %vm1644, %v1711, %v1715
      %v1718 = vshrl.u32 %v1570, 16
      %v1720 = vshll.u32 %v1570, 16
      %v1722 = vrot.slane %v1720, 1
      %v1723 = vor.u32 %v1718, %v1722
      %v1725 = vshll.u32 %v1634, 16
      %v1727 = vrot.slane %v1725, 1
      %v1728 = vsel %vm1644, %v1723, %v1727
      %v1730 = vshrl.u32 %v1571, 16
      %v1732 = vshll.u32 %v1571, 16
      %v1734 = vrot.slane %v1732, 1
      %v1735 = vor.u32 %v1730, %v1734
      %v1737 = vshll.u32 %v1635, 16
      %v1739 = vrot.slane %v1737, 1
      %v1740 = vsel %vm1644, %v1735, %v1739
      %v1742 = vshrl.u32 %v1572, 16
      %v1744 = vshll.u32 %v1572, 16
      %v1746 = vrot.slane %v1744, 1
      %v1747 = vor.u32 %v1742, %v1746
      %v1749 = vshll.u32 %v1636, 16
      %v1751 = vrot.slane %v1749, 1
      %v1752 = vsel %vm1644, %v1747, %v1751
      %v1754 = vshrl.u32 %v1573, 16
      %v1756 = vshll.u32 %v1573, 16
      %v1758 = vrot.slane %v1756, 1
      %v1759 = vor.u32 %v1754, %v1758
      %v1761 = vshll.u32 %v1637, 16
      %v1763 = vrot.slane %v1761, 1
      %v1764 = vsel %vm1644, %v1759, %v1763
      %v1766 = vshrl.u32 %v1574, 16
      %v1768 = vshll.u32 %v1574, 16
      %v1770 = vrot.slane %v1768, 1
      %v1771 = vor.u32 %v1766, %v1770
      %v1773 = vshll.u32 %v1638, 16
      %v1775 = vrot.slane %v1773, 1
      %v1776 = vsel %vm1644, %v1771, %v1775
      %v1778 = vshrl.u32 %v1575, 16
      %v1780 = vshll.u32 %v1575, 16
      %v1782 = vrot.slane %v1780, 1
      %v1783 = vor.u32 %v1778, %v1782
      %v1785 = vshll.u32 %v1639, 16
      %v1787 = vrot.slane %v1785, 1
      %v1788 = vsel %vm1644, %v1783, %v1787
      %v1790 = vshrl.u32 %v1576, 16
      %v1792 = vshll.u32 %v1576, 16
      %v1794 = vrot.slane %v1792, 1
      %v1795 = vor.u32 %v1790, %v1794
      %v1797 = vshll.u32 %v1640, 16
      %v1799 = vrot.slane %v1797, 1
      %v1800 = vsel %vm1644, %v1795, %v1799
      %v1802 = vshrl.u32 %v1577, 16
      %v1804 = vshll.u32 %v1577, 16
      %v1806 = vrot.slane %v1804, 1
      %v1807 = vor.u32 %v1802, %v1806
      %v1809 = vshll.u32 %v1641, 16
      %v1811 = vrot.slane %v1809, 1
      %v1812 = vsel %vm1644, %v1807, %v1811
      %v1814 = vshrl.u32 %v1578, 16
      %v1816 = vshll.u32 %v1578, 16
      %v1818 = vrot.slane %v1816, 1
      %v1819 = vor.u32 %v1814, %v1818
      %v1821 = vshll.u32 %v1642, 16
      %v1823 = vrot.slane %v1821, 1
      %v1824 = vsel %vm1644, %v1819, %v1823
      %v1826 = vshrl.u32 %v1579, 16
      %v1828 = vshll.u32 %v1579, 16
      %v1830 = vrot.slane %v1828, 1
      %v1831 = vor.u32 %v1826, %v1830
      %v1833 = vshll.u32 %v1643, 16
      %v1835 = vrot.slane %v1833, 1
      %v1836 = vsel %vm1644, %v1831, %v1835
      %v1869 = vunpack.c.l.b16 %v1484
      %v1870 = vunpack.c.l.b16 %v1485
      %v1871 = vunpack.c.l.b16 %v1486
      %v1872 = vunpack.c.l.b16 %v1487
      %v1873 = vunpack.c.l.b16 %v1488
      %v1874 = vunpack.c.l.b16 %v1489
      %v1875 = vunpack.c.l.b16 %v1490
      %v1876 = vunpack.c.l.b16 %v1491
      %v1877 = vunpack.c.l.b16 %v1492
      %v1878 = vunpack.c.l.b16 %v1493
      %v1879 = vunpack.c.l.b16 %v1494
      %v1880 = vunpack.c.l.b16 %v1495
      %v1881 = vunpack.c.l.b16 %v1496
      %v1882 = vunpack.c.l.b16 %v1497
      %v1883 = vunpack.c.l.b16 %v1498
      %v1884 = vunpack.c.l.b16 %v1499
      %v1885 = vpack.c.b16 %v1533, %v1869
      %v1886 = vpack.c.b16 %v1535, %v1870
      %v1887 = vpack.c.b16 %v1537, %v1871
      %v1888 = vpack.c.b16 %v1539, %v1872
      %v1889 = vpack.c.b16 %v1541, %v1873
      %v1890 = vpack.c.b16 %v1543, %v1874
      %v1891 = vpack.c.b16 %v1545, %v1875
      %v1892 = vpack.c.b16 %v1547, %v1876
      %v1893 = vpack.c.b16 %v1549, %v1877
      %v1894 = vpack.c.b16 %v1551, %v1878
      %v1895 = vpack.c.b16 %v1553, %v1879
      %v1896 = vpack.c.b16 %v1555, %v1880
      %v1897 = vpack.c.b16 %v1557, %v1881
      %v1898 = vpack.c.b16 %v1559, %v1882
      %v1899 = vpack.c.b16 %v1561, %v1883
      %v1900 = vpack.c.b16 %v1563, %v1884
      %vm1901 = vcmask 1046528
      %v1902 = vrot.slane %v1885, 1
      %v1903 = vrot.slane %v1628, 1
      %v1904 = vsel %vm1901, %v1902, %v1903
      %v1905 = vrot.slane %v1886, 1
      %v1906 = vrot.slane %v1629, 1
      %v1907 = vsel %vm1901, %v1905, %v1906
      %v1908 = vrot.slane %v1887, 1
      %v1909 = vrot.slane %v1630, 1
      %v1910 = vsel %vm1901, %v1908, %v1909
      %v1911 = vrot.slane %v1888, 1
      %v1912 = vrot.slane %v1631, 1
      %v1913 = vsel %vm1901, %v1911, %v1912
      %v1914 = vrot.slane %v1889, 1
      %v1915 = vrot.slane %v1632, 1
      %v1916 = vsel %vm1901, %v1914, %v1915
      %v1917 = vrot.slane %v1890, 1
      %v1918 = vrot.slane %v1633, 1
      %v1919 = vsel %vm1901, %v1917, %v1918
      %v1920 = vrot.slane %v1891, 1
      %v1921 = vrot.slane %v1634, 1
      %v1922 = vsel %vm1901, %v1920, %v1921
      %v1923 = vrot.slane %v1892, 1
      %v1924 = vrot.slane %v1635, 1
      %v1925 = vsel %vm1901, %v1923, %v1924
      %v1926 = vrot.slane %v1893, 1
      %v1927 = vrot.slane %v1636, 1
      %v1928 = vsel %vm1901, %v1926, %v1927
      %v1929 = vrot.slane %v1894, 1
      %v1930 = vrot.slane %v1637, 1
      %v1931 = vsel %vm1901, %v1929, %v1930
      %v1932 = vrot.slane %v1895, 1
      %v1933 = vrot.slane %v1638, 1
      %v1934 = vsel %vm1901, %v1932, %v1933
      %v1935 = vrot.slane %v1896, 1
      %v1936 = vrot.slane %v1639, 1
      %v1937 = vsel %vm1901, %v1935, %v1936
      %v1938 = vrot.slane %v1897, 1
      %v1939 = vrot.slane %v1640, 1
      %v1940 = vsel %vm1901, %v1938, %v1939
      %v1941 = vrot.slane %v1898, 1
      %v1942 = vrot.slane %v1641, 1
      %v1943 = vsel %vm1901, %v1941, %v1942
      %v1944 = vrot.slane %v1899, 1
      %v1945 = vrot.slane %v1642, 1
      %v1946 = vsel %vm1901, %v1944, %v1945
      %v1947 = vrot.slane %v1900, 1
      %v1948 = vrot.slane %v1643, 1
      %v1949 = vsel %vm1901, %v1947, %v1948
      %v1966 = vld [vmem:[%s2] sm:$0xf]
      %v1967 = vld [vmem:[%s2 + $0x4] sm:$0xf]
      %v1968 = vld [vmem:[%s2 + $0x8] sm:$0xf]
      %v1969 = vld [vmem:[%s2 + $0xc] sm:$0xf]
      %v1970 = vld [vmem:[%s2 + $0x10] sm:$0xf]
      %v1971 = vld [vmem:[%s2 + $0x14] sm:$0xf]
      %v1972 = vld [vmem:[%s2 + $0x18] sm:$0xf]
      %v1973 = vld [vmem:[%s2 + $0x1c] sm:$0xf]
      %v1974 = vld [vmem:[%s2 + $0x20] sm:$0xf]
      %v1975 = vld [vmem:[%s2 + $0x24] sm:$0xf]
      %v1976 = vld [vmem:[%s2 + $0x28] sm:$0xf]
      %v1977 = vld [vmem:[%s2 + $0x2c] sm:$0xf]
      %v1978 = vld [vmem:[%s2 + $0x30] sm:$0xf]
      %v1979 = vld [vmem:[%s2 + $0x34] sm:$0xf]
      %v1980 = vld [vmem:[%s2 + $0x38] sm:$0xf]
      %v1981 = vld [vmem:[%s2 + $0x3c] sm:$0xf]
      %v1982 = vld [vmem:[%s2 + $0x40] sm:$0xf]
      %v1983 = vld [vmem:[%s2 + $0x44] sm:$0xf]
      %v1984 = vld [vmem:[%s2 + $0x48] sm:$0xf]
      %v1985 = vld [vmem:[%s2 + $0x4c] sm:$0xf]
      %v1986 = vld [vmem:[%s2 + $0x50] sm:$0xf]
      %v1987 = vld [vmem:[%s2 + $0x54] sm:$0xf]
      %v1988 = vld [vmem:[%s2 + $0x58] sm:$0xf]
      %v1989 = vld [vmem:[%s2 + $0x5c] sm:$0xf]
      %v1990 = vld [vmem:[%s2 + $0x60] sm:$0xf]
      %v1991 = vld [vmem:[%s2 + $0x64] sm:$0xf]
      %v1992 = vld [vmem:[%s2 + $0x68] sm:$0xf]
      %v1993 = vld [vmem:[%s2 + $0x6c] sm:$0xf]
      %v1994 = vld [vmem:[%s2 + $0x70] sm:$0xf]
      %v1995 = vld [vmem:[%s2 + $0x74] sm:$0xf]
      %v1996 = vld [vmem:[%s2 + $0x78] sm:$0xf]
      %v1997 = vld [vmem:[%s2 + $0x7c] sm:$0xf]
      %v1998 = vld [vmem:[%s2 + $0x80] sm:$0xf]
      %v1999 = vld [vmem:[%s2 + $0x84] sm:$0xf]
      %v2000 = vld [vmem:[%s2 + $0x88] sm:$0xf]
      %v2001 = vld [vmem:[%s2 + $0x8c] sm:$0xf]
      %v2002 = vld [vmem:[%s2 + $0x90] sm:$0xf]
      %v2003 = vld [vmem:[%s2 + $0x94] sm:$0xf]
      %v2004 = vld [vmem:[%s2 + $0x98] sm:$0xf]
      %v2005 = vld [vmem:[%s2 + $0x9c] sm:$0xf]
      %v2006 = vld [vmem:[%s2 + $0xa0] sm:$0xf]
      %v2007 = vld [vmem:[%s2 + $0xa4] sm:$0xf]
      %v2008 = vld [vmem:[%s2 + $0xa8] sm:$0xf]
      %v2009 = vld [vmem:[%s2 + $0xac] sm:$0xf]
      %v2010 = vld [vmem:[%s2 + $0xb0] sm:$0xf]
      %v2011 = vld [vmem:[%s2 + $0xb4] sm:$0xf]
      %v2012 = vld [vmem:[%s2 + $0xb8] sm:$0xf]
      %v2013 = vld [vmem:[%s2 + $0xbc] sm:$0xf]
      %v2014 = vld [vmem:[%s802] sm:$0xf]
      %v2015 = vld [vmem:[%s802 + $0x4] sm:$0xf]
      %v2016 = vld [vmem:[%s802 + $0xc] sm:$0xf]
      %v2017 = vld [vmem:[%s802 + $0x10] sm:$0xf]
      %v2018 = vld [vmem:[%s802 + $0x18] sm:$0xf]
      %v2019 = vld [vmem:[%s802 + $0x1c] sm:$0xf]
      %v2020 = vld [vmem:[%s802 + $0x24] sm:$0xf]
      %v2021 = vld [vmem:[%s802 + $0x28] sm:$0xf]
      %v2022 = vld [vmem:[%s802 + $0x30] sm:$0xf]
      %v2023 = vld [vmem:[%s802 + $0x34] sm:$0xf]
      %v2024 = vld [vmem:[%s802 + $0x3c] sm:$0xf]
      %v2025 = vld [vmem:[%s802 + $0x40] sm:$0xf]
      %v2026 = vld [vmem:[%s802 + $0x48] sm:$0xf]
      %v2027 = vld [vmem:[%s802 + $0x4c] sm:$0xf]
      %v2028 = vld [vmem:[%s802 + $0x54] sm:$0xf]
      %v2029 = vld [vmem:[%s802 + $0x58] sm:$0xf]
      %v2030 = vld [vmem:[%s802 + $0x60] sm:$0xf]
      %v2031 = vld [vmem:[%s802 + $0x64] sm:$0xf]
      %v2032 = vld [vmem:[%s802 + $0x6c] sm:$0xf]
      %v2033 = vld [vmem:[%s802 + $0x70] sm:$0xf]
      %v2034 = vld [vmem:[%s802 + $0x78] sm:$0xf]
      %v2035 = vld [vmem:[%s802 + $0x7c] sm:$0xf]
      %v2036 = vld [vmem:[%s802 + $0x84] sm:$0xf]
      %v2037 = vld [vmem:[%s802 + $0x88] sm:$0xf]
      %v2038 = vld [vmem:[%s802 + $0x90] sm:$0xf]
      %v2039 = vld [vmem:[%s802 + $0x94] sm:$0xf]
      %v2040 = vld [vmem:[%s802 + $0x9c] sm:$0xf]
      %v2041 = vld [vmem:[%s802 + $0xa0] sm:$0xf]
      %v2042 = vld [vmem:[%s802 + $0xa8] sm:$0xf]
      %v2043 = vld [vmem:[%s802 + $0xac] sm:$0xf]
      %v2044 = vld [vmem:[%s802 + $0xb4] sm:$0xf]
      %v2045 = vld [vmem:[%s802 + $0xb8] sm:$0xf]
      %v2046 = vld [vmem:[%s802 + $0x8] sm:$0x1]
      %v2047 = vld [vmem:[%s802 + $0x14] sm:$0x1]
      %v2048 = vld [vmem:[%s802 + $0x20] sm:$0x1]
      %v2049 = vld [vmem:[%s802 + $0x2c] sm:$0x1]
      %v2050 = vld [vmem:[%s802 + $0x38] sm:$0x1]
      %v2051 = vld [vmem:[%s802 + $0x44] sm:$0x1]
      %v2052 = vld [vmem:[%s802 + $0x50] sm:$0x1]
      %v2053 = vld [vmem:[%s802 + $0x5c] sm:$0x1]
      %v2054 = vld [vmem:[%s802 + $0x68] sm:$0x1]
      %v2055 = vld [vmem:[%s802 + $0x74] sm:$0x1]
      %v2056 = vld [vmem:[%s802 + $0x80] sm:$0x1]
      %v2057 = vld [vmem:[%s802 + $0x8c] sm:$0x1]
      %v2058 = vld [vmem:[%s802 + $0x98] sm:$0x1]
      %v2059 = vld [vmem:[%s802 + $0xa4] sm:$0x1]
      %v2060 = vld [vmem:[%s802 + $0xb0] sm:$0x1]
      %v2061 = vld [vmem:[%s802 + $0xbc] sm:$0x1]
      %v2062 = vld [vmem:[%s802] sm:$0xe]
      %v2063 = vld [vmem:[%s802 + $0xc] sm:$0xe]
      %v2064 = vld [vmem:[%s802 + $0x18] sm:$0xe]
      %v2065 = vld [vmem:[%s802 + $0x24] sm:$0xe]
      %v2066 = vld [vmem:[%s802 + $0x30] sm:$0xe]
      %v2067 = vld [vmem:[%s802 + $0x3c] sm:$0xe]
      %v2068 = vld [vmem:[%s802 + $0x48] sm:$0xe]
      %v2069 = vld [vmem:[%s802 + $0x54] sm:$0xe]
      %v2070 = vld [vmem:[%s802 + $0x60] sm:$0xe]
      %v2071 = vld [vmem:[%s802 + $0x6c] sm:$0xe]
      %v2072 = vld [vmem:[%s802 + $0x78] sm:$0xe]
      %v2073 = vld [vmem:[%s802 + $0x84] sm:$0xe]
      %v2074 = vld [vmem:[%s802 + $0x90] sm:$0xe]
      %v2075 = vld [vmem:[%s802 + $0x9c] sm:$0xe]
      %v2076 = vld [vmem:[%s802 + $0xa8] sm:$0xe]
      %v2077 = vld [vmem:[%s802 + $0xb4] sm:$0xe]
      %v2110 = vunpack.c.l.b16 %v2014
      %v2111 = vunpack.c.l.b16 %v2015
      %v2112 = vunpack.c.l.b16 %v2016
      %v2113 = vunpack.c.l.b16 %v2017
      %v2114 = vunpack.c.l.b16 %v2018
      %v2115 = vunpack.c.l.b16 %v2019
      %v2116 = vunpack.c.l.b16 %v2020
      %v2117 = vunpack.c.l.b16 %v2021
      %v2118 = vunpack.c.l.b16 %v2022
      %v2119 = vunpack.c.l.b16 %v2023
      %v2120 = vunpack.c.l.b16 %v2024
      %v2121 = vunpack.c.l.b16 %v2025
      %v2122 = vunpack.c.l.b16 %v2026
      %v2123 = vunpack.c.l.b16 %v2027
      %v2124 = vunpack.c.l.b16 %v2028
      %v2125 = vunpack.c.l.b16 %v2029
      %v2126 = vunpack.c.l.b16 %v2030
      %v2127 = vunpack.c.l.b16 %v2031
      %v2128 = vunpack.c.l.b16 %v2032
      %v2129 = vunpack.c.l.b16 %v2033
      %v2130 = vunpack.c.l.b16 %v2034
      %v2131 = vunpack.c.l.b16 %v2035
      %v2132 = vunpack.c.l.b16 %v2036
      %v2133 = vunpack.c.l.b16 %v2037
      %v2134 = vunpack.c.l.b16 %v2038
      %v2135 = vunpack.c.l.b16 %v2039
      %v2136 = vunpack.c.l.b16 %v2040
      %v2137 = vunpack.c.l.b16 %v2041
      %v2138 = vunpack.c.l.b16 %v2042
      %v2139 = vunpack.c.l.b16 %v2043
      %v2140 = vunpack.c.l.b16 %v2044
      %v2141 = vunpack.c.l.b16 %v2045
      %v2142 = vpack.c.b16 %v2111, %v2110
      %v2143 = vpack.c.b16 %v2113, %v2112
      %v2144 = vpack.c.b16 %v2115, %v2114
      %v2145 = vpack.c.b16 %v2117, %v2116
      %v2146 = vpack.c.b16 %v2119, %v2118
      %v2147 = vpack.c.b16 %v2121, %v2120
      %v2148 = vpack.c.b16 %v2123, %v2122
      %v2149 = vpack.c.b16 %v2125, %v2124
      %v2150 = vpack.c.b16 %v2127, %v2126
      %v2151 = vpack.c.b16 %v2129, %v2128
      %v2152 = vpack.c.b16 %v2131, %v2130
      %v2153 = vpack.c.b16 %v2133, %v2132
      %v2154 = vpack.c.b16 %v2135, %v2134
      %v2155 = vpack.c.b16 %v2137, %v2136
      %v2156 = vpack.c.b16 %v2139, %v2138
      %v2157 = vpack.c.b16 %v2141, %v2140
      %v2190 = vunpack.c.l.b16 %v2046
      %v2191 = vunpack.c.l.b16 %v2047
      %v2192 = vunpack.c.l.b16 %v2048
      %v2193 = vunpack.c.l.b16 %v2049
      %v2194 = vunpack.c.l.b16 %v2050
      %v2195 = vunpack.c.l.b16 %v2051
      %v2196 = vunpack.c.l.b16 %v2052
      %v2197 = vunpack.c.l.b16 %v2053
      %v2198 = vunpack.c.l.b16 %v2054
      %v2199 = vunpack.c.l.b16 %v2055
      %v2200 = vunpack.c.l.b16 %v2056
      %v2201 = vunpack.c.l.b16 %v2057
      %v2202 = vunpack.c.l.b16 %v2058
      %v2203 = vunpack.c.l.b16 %v2059
      %v2204 = vunpack.c.l.b16 %v2060
      %v2205 = vunpack.c.l.b16 %v2061
      %v2206 = vpack.c.b16 %v2190, %v2190
      %v2207 = vpack.c.b16 %v2191, %v2191
      %v2208 = vpack.c.b16 %v2192, %v2192
      %v2209 = vpack.c.b16 %v2193, %v2193
      %v2210 = vpack.c.b16 %v2194, %v2194
      %v2211 = vpack.c.b16 %v2195, %v2195
      %v2212 = vpack.c.b16 %v2196, %v2196
      %v2213 = vpack.c.b16 %v2197, %v2197
      %v2214 = vpack.c.b16 %v2198, %v2198
      %v2215 = vpack.c.b16 %v2199, %v2199
      %v2216 = vpack.c.b16 %v2200, %v2200
      %v2217 = vpack.c.b16 %v2201, %v2201
      %v2218 = vpack.c.b16 %v2202, %v2202
      %v2219 = vpack.c.b16 %v2203, %v2203
      %v2220 = vpack.c.b16 %v2204, %v2204
      %v2221 = vpack.c.b16 %v2205, %v2205
      %v2223 = vshrl.u32 %v2142, 16
      %v2225 = vshll.u32 %v2142, 16
      %v2227 = vrot.slane %v2225, 1
      %v2228 = vor.u32 %v2223, %v2227
      %v2230 = vshll.u32 %v2206, 16
      %v2232 = vrot.slane %v2230, 1
      %v2233 = vsel %vm1644, %v2228, %v2232
      %v2235 = vshrl.u32 %v2143, 16
      %v2237 = vshll.u32 %v2143, 16
      %v2239 = vrot.slane %v2237, 1
      %v2240 = vor.u32 %v2235, %v2239
      %v2242 = vshll.u32 %v2207, 16
      %v2244 = vrot.slane %v2242, 1
      %v2245 = vsel %vm1644, %v2240, %v2244
      %v2247 = vshrl.u32 %v2144, 16
      %v2249 = vshll.u32 %v2144, 16
      %v2251 = vrot.slane %v2249, 1
      %v2252 = vor.u32 %v2247, %v2251
      %v2254 = vshll.u32 %v2208, 16
      %v2256 = vrot.slane %v2254, 1
      %v2257 = vsel %vm1644, %v2252, %v2256
      %v2259 = vshrl.u32 %v2145, 16
      %v2261 = vshll.u32 %v2145, 16
      %v2263 = vrot.slane %v2261, 1
      %v2264 = vor.u32 %v2259, %v2263
      %v2266 = vshll.u32 %v2209, 16
      %v2268 = vrot.slane %v2266, 1
      %v2269 = vsel %vm1644, %v2264, %v2268
      %v2271 = vshrl.u32 %v2146, 16
      %v2273 = vshll.u32 %v2146, 16
      %v2275 = vrot.slane %v2273, 1
      %v2276 = vor.u32 %v2271, %v2275
      %v2278 = vshll.u32 %v2210, 16
      %v2280 = vrot.slane %v2278, 1
      %v2281 = vsel %vm1644, %v2276, %v2280
      %v2283 = vshrl.u32 %v2147, 16
      %v2285 = vshll.u32 %v2147, 16
      %v2287 = vrot.slane %v2285, 1
      %v2288 = vor.u32 %v2283, %v2287
      %v2290 = vshll.u32 %v2211, 16
      %v2292 = vrot.slane %v2290, 1
      %v2293 = vsel %vm1644, %v2288, %v2292
      %v2295 = vshrl.u32 %v2148, 16
      %v2297 = vshll.u32 %v2148, 16
      %v2299 = vrot.slane %v2297, 1
      %v2300 = vor.u32 %v2295, %v2299
      %v2302 = vshll.u32 %v2212, 16
      %v2304 = vrot.slane %v2302, 1
      %v2305 = vsel %vm1644, %v2300, %v2304
      %v2307 = vshrl.u32 %v2149, 16
      %v2309 = vshll.u32 %v2149, 16
      %v2311 = vrot.slane %v2309, 1
      %v2312 = vor.u32 %v2307, %v2311
      %v2314 = vshll.u32 %v2213, 16
      %v2316 = vrot.slane %v2314, 1
      %v2317 = vsel %vm1644, %v2312, %v2316
      %v2319 = vshrl.u32 %v2150, 16
      %v2321 = vshll.u32 %v2150, 16
      %v2323 = vrot.slane %v2321, 1
      %v2324 = vor.u32 %v2319, %v2323
      %v2326 = vshll.u32 %v2214, 16
      %v2328 = vrot.slane %v2326, 1
      %v2329 = vsel %vm1644, %v2324, %v2328
      %v2331 = vshrl.u32 %v2151, 16
      %v2333 = vshll.u32 %v2151, 16
      %v2335 = vrot.slane %v2333, 1
      %v2336 = vor.u32 %v2331, %v2335
      %v2338 = vshll.u32 %v2215, 16
      %v2340 = vrot.slane %v2338, 1
      %v2341 = vsel %vm1644, %v2336, %v2340
      %v2343 = vshrl.u32 %v2152, 16
      %v2345 = vshll.u32 %v2152, 16
      %v2347 = vrot.slane %v2345, 1
      %v2348 = vor.u32 %v2343, %v2347
      %v2350 = vshll.u32 %v2216, 16
      %v2352 = vrot.slane %v2350, 1
      %v2353 = vsel %vm1644, %v2348, %v2352
      %v2355 = vshrl.u32 %v2153, 16
      %v2357 = vshll.u32 %v2153, 16
      %v2359 = vrot.slane %v2357, 1
      %v2360 = vor.u32 %v2355, %v2359
      %v2362 = vshll.u32 %v2217, 16
      %v2364 = vrot.slane %v2362, 1
      %v2365 = vsel %vm1644, %v2360, %v2364
      %v2367 = vshrl.u32 %v2154, 16
      %v2369 = vshll.u32 %v2154, 16
      %v2371 = vrot.slane %v2369, 1
      %v2372 = vor.u32 %v2367, %v2371
      %v2374 = vshll.u32 %v2218, 16
      %v2376 = vrot.slane %v2374, 1
      %v2377 = vsel %vm1644, %v2372, %v2376
      %v2379 = vshrl.u32 %v2155, 16
      %v2381 = vshll.u32 %v2155, 16
      %v2383 = vrot.slane %v2381, 1
      %v2384 = vor.u32 %v2379, %v2383
      %v2386 = vshll.u32 %v2219, 16
      %v2388 = vrot.slane %v2386, 1
      %v2389 = vsel %vm1644, %v2384, %v2388
      %v2391 = vshrl.u32 %v2156, 16
      %v2393 = vshll.u32 %v2156, 16
      %v2395 = vrot.slane %v2393, 1
      %v2396 = vor.u32 %v2391, %v2395
      %v2398 = vshll.u32 %v2220, 16
      %v2400 = vrot.slane %v2398, 1
      %v2401 = vsel %vm1644, %v2396, %v2400
      %v2403 = vshrl.u32 %v2157, 16
      %v2405 = vshll.u32 %v2157, 16
      %v2407 = vrot.slane %v2405, 1
      %v2408 = vor.u32 %v2403, %v2407
      %v2410 = vshll.u32 %v2221, 16
      %v2412 = vrot.slane %v2410, 1
      %v2413 = vsel %vm1644, %v2408, %v2412
      %v2446 = vunpack.c.l.b16 %v2062
      %v2447 = vunpack.c.l.b16 %v2063
      %v2448 = vunpack.c.l.b16 %v2064
      %v2449 = vunpack.c.l.b16 %v2065
      %v2450 = vunpack.c.l.b16 %v2066
      %v2451 = vunpack.c.l.b16 %v2067
      %v2452 = vunpack.c.l.b16 %v2068
      %v2453 = vunpack.c.l.b16 %v2069
      %v2454 = vunpack.c.l.b16 %v2070
      %v2455 = vunpack.c.l.b16 %v2071
      %v2456 = vunpack.c.l.b16 %v2072
      %v2457 = vunpack.c.l.b16 %v2073
      %v2458 = vunpack.c.l.b16 %v2074
      %v2459 = vunpack.c.l.b16 %v2075
      %v2460 = vunpack.c.l.b16 %v2076
      %v2461 = vunpack.c.l.b16 %v2077
      %v2462 = vpack.c.b16 %v2111, %v2446
      %v2463 = vpack.c.b16 %v2113, %v2447
      %v2464 = vpack.c.b16 %v2115, %v2448
      %v2465 = vpack.c.b16 %v2117, %v2449
      %v2466 = vpack.c.b16 %v2119, %v2450
      %v2467 = vpack.c.b16 %v2121, %v2451
      %v2468 = vpack.c.b16 %v2123, %v2452
      %v2469 = vpack.c.b16 %v2125, %v2453
      %v2470 = vpack.c.b16 %v2127, %v2454
      %v2471 = vpack.c.b16 %v2129, %v2455
      %v2472 = vpack.c.b16 %v2131, %v2456
      %v2473 = vpack.c.b16 %v2133, %v2457
      %v2474 = vpack.c.b16 %v2135, %v2458
      %v2475 = vpack.c.b16 %v2137, %v2459
      %v2476 = vpack.c.b16 %v2139, %v2460
      %v2477 = vpack.c.b16 %v2141, %v2461
      %v2478 = vrot.slane %v2462, 1
      %v2479 = vrot.slane %v2206, 1
      %v2480 = vsel %vm1901, %v2478, %v2479
      %v2481 = vrot.slane %v2463, 1
      %v2482 = vrot.slane %v2207, 1
      %v2483 = vsel %vm1901, %v2481, %v2482
      %v2484 = vrot.slane %v2464, 1
      %v2485 = vrot.slane %v2208, 1
      %v2486 = vsel %vm1901, %v2484, %v2485
      %v2487 = vrot.slane %v2465, 1
      %v2488 = vrot.slane %v2209, 1
      %v2489 = vsel %vm1901, %v2487, %v2488
      %v2490 = vrot.slane %v2466, 1
      %v2491 = vrot.slane %v2210, 1
      %v2492 = vsel %vm1901, %v2490, %v2491
      %v2493 = vrot.slane %v2467, 1
      %v2494 = vrot.slane %v2211, 1
      %v2495 = vsel %vm1901, %v2493, %v2494
      %v2496 = vrot.slane %v2468, 1
      %v2497 = vrot.slane %v2212, 1
      %v2498 = vsel %vm1901, %v2496, %v2497
      %v2499 = vrot.slane %v2469, 1
      %v2500 = vrot.slane %v2213, 1
      %v2501 = vsel %vm1901, %v2499, %v2500
      %v2502 = vrot.slane %v2470, 1
      %v2503 = vrot.slane %v2214, 1
      %v2504 = vsel %vm1901, %v2502, %v2503
      %v2505 = vrot.slane %v2471, 1
      %v2506 = vrot.slane %v2215, 1
      %v2507 = vsel %vm1901, %v2505, %v2506
      %v2508 = vrot.slane %v2472, 1
      %v2509 = vrot.slane %v2216, 1
      %v2510 = vsel %vm1901, %v2508, %v2509
      %v2511 = vrot.slane %v2473, 1
      %v2512 = vrot.slane %v2217, 1
      %v2513 = vsel %vm1901, %v2511, %v2512
      %v2514 = vrot.slane %v2474, 1
      %v2515 = vrot.slane %v2218, 1
      %v2516 = vsel %vm1901, %v2514, %v2515
      %v2517 = vrot.slane %v2475, 1
      %v2518 = vrot.slane %v2219, 1
      %v2519 = vsel %vm1901, %v2517, %v2518
      %v2520 = vrot.slane %v2476, 1
      %v2521 = vrot.slane %v2220, 1
      %v2522 = vsel %vm1901, %v2520, %v2521
      %v2523 = vrot.slane %v2477, 1
      %v2524 = vrot.slane %v2221, 1
      %v2525 = vsel %vm1901, %v2523, %v2524
      %s2542 = scalar_lea.vmem %s2, 192
      %v2543 = vld [vmem:[%s2542] sm:$0xf]
      %v2544 = vld [vmem:[%s2542 + $0x4] sm:$0xf]
      %v2545 = vld [vmem:[%s2542 + $0x8] sm:$0xf]
      %v2546 = vld [vmem:[%s2542 + $0xc] sm:$0xf]
      %v2547 = vld [vmem:[%s2542 + $0x10] sm:$0xf]
      %v2548 = vld [vmem:[%s2542 + $0x14] sm:$0xf]
      %v2549 = vld [vmem:[%s2542 + $0x18] sm:$0xf]
      %v2550 = vld [vmem:[%s2542 + $0x1c] sm:$0xf]
      %v2551 = vld [vmem:[%s2542 + $0x20] sm:$0xf]
      %v2552 = vld [vmem:[%s2542 + $0x24] sm:$0xf]
      %v2553 = vld [vmem:[%s2542 + $0x28] sm:$0xf]
      %v2554 = vld [vmem:[%s2542 + $0x2c] sm:$0xf]
      %v2555 = vld [vmem:[%s2542 + $0x30] sm:$0xf]
      %v2556 = vld [vmem:[%s2542 + $0x34] sm:$0xf]
      %v2557 = vld [vmem:[%s2542 + $0x38] sm:$0xf]
      %v2558 = vld [vmem:[%s2542 + $0x3c] sm:$0xf]
      %v2559 = vld [vmem:[%s2542 + $0x40] sm:$0xf]
      %v2560 = vld [vmem:[%s2542 + $0x44] sm:$0xf]
      %v2561 = vld [vmem:[%s2542 + $0x48] sm:$0xf]
      %v2562 = vld [vmem:[%s2542 + $0x4c] sm:$0xf]
      %v2563 = vld [vmem:[%s2542 + $0x50] sm:$0xf]
      %v2564 = vld [vmem:[%s2542 + $0x54] sm:$0xf]
      %v2565 = vld [vmem:[%s2542 + $0x58] sm:$0xf]
      %v2566 = vld [vmem:[%s2542 + $0x5c] sm:$0xf]
      %v2567 = vld [vmem:[%s2542 + $0x60] sm:$0xf]
      %v2568 = vld [vmem:[%s2542 + $0x64] sm:$0xf]
      %v2569 = vld [vmem:[%s2542 + $0x68] sm:$0xf]
      %v2570 = vld [vmem:[%s2542 + $0x6c] sm:$0xf]
      %v2571 = vld [vmem:[%s2542 + $0x70] sm:$0xf]
      %v2572 = vld [vmem:[%s2542 + $0x74] sm:$0xf]
      %v2573 = vld [vmem:[%s2542 + $0x78] sm:$0xf]
      %v2574 = vld [vmem:[%s2542 + $0x7c] sm:$0xf]
      %v2575 = vld [vmem:[%s2542 + $0x80] sm:$0xf]
      %v2576 = vld [vmem:[%s2542 + $0x84] sm:$0xf]
      %v2577 = vld [vmem:[%s2542 + $0x88] sm:$0xf]
      %v2578 = vld [vmem:[%s2542 + $0x8c] sm:$0xf]
      %v2579 = vld [vmem:[%s2542 + $0x90] sm:$0xf]
      %v2580 = vld [vmem:[%s2542 + $0x94] sm:$0xf]
      %v2581 = vld [vmem:[%s2542 + $0x98] sm:$0xf]
      %v2582 = vld [vmem:[%s2542 + $0x9c] sm:$0xf]
      %v2583 = vld [vmem:[%s2542 + $0xa0] sm:$0xf]
      %v2584 = vld [vmem:[%s2542 + $0xa4] sm:$0xf]
      %v2585 = vld [vmem:[%s2542 + $0xa8] sm:$0xf]
      %v2586 = vld [vmem:[%s2542 + $0xac] sm:$0xf]
      %v2587 = vld [vmem:[%s2542 + $0xb0] sm:$0xf]
      %v2588 = vld [vmem:[%s2542 + $0xb4] sm:$0xf]
      %v2589 = vld [vmem:[%s2542 + $0xb8] sm:$0xf]
      %v2590 = vld [vmem:[%s2542 + $0xbc] sm:$0xf]
      %v2639 = vunpack.c.l.b16 %v2543
      %v2640 = vunpack.c.l.b16 %v2544
      %v2641 = vunpack.c.l.b16 %v2545
      %v2642 = vunpack.c.l.b16 %v2546
      %v2643 = vunpack.c.l.b16 %v2547
      %v2644 = vunpack.c.l.b16 %v2548
      %v2645 = vunpack.c.l.b16 %v2549
      %v2646 = vunpack.c.l.b16 %v2550
      %v2647 = vunpack.c.l.b16 %v2551
      %v2648 = vunpack.c.l.b16 %v2552
      %v2649 = vunpack.c.l.b16 %v2553
      %v2650 = vunpack.c.l.b16 %v2554
      %v2651 = vunpack.c.l.b16 %v2555
      %v2652 = vunpack.c.l.b16 %v2556
      %v2653 = vunpack.c.l.b16 %v2557
      %v2654 = vunpack.c.l.b16 %v2558
      %v2655 = vunpack.c.l.b16 %v2559
      %v2656 = vunpack.c.l.b16 %v2560
      %v2657 = vunpack.c.l.b16 %v2561
      %v2658 = vunpack.c.l.b16 %v2562
      %v2659 = vunpack.c.l.b16 %v2563
      %v2660 = vunpack.c.l.b16 %v2564
      %v2661 = vunpack.c.l.b16 %v2565
      %v2662 = vunpack.c.l.b16 %v2566
      %v2663 = vunpack.c.l.b16 %v2567
      %v2664 = vunpack.c.l.b16 %v2568
      %v2665 = vunpack.c.l.b16 %v2569
      %v2666 = vunpack.c.l.b16 %v2570
      %v2667 = vunpack.c.l.b16 %v2571
      %v2668 = vunpack.c.l.b16 %v2572
      %v2669 = vunpack.c.l.b16 %v2573
      %v2670 = vunpack.c.l.b16 %v2574
      %v2671 = vunpack.c.l.b16 %v2575
      %v2672 = vunpack.c.l.b16 %v2576
      %v2673 = vunpack.c.l.b16 %v2577
      %v2674 = vunpack.c.l.b16 %v2578
      %v2675 = vunpack.c.l.b16 %v2579
      %v2676 = vunpack.c.l.b16 %v2580
      %v2677 = vunpack.c.l.b16 %v2581
      %v2678 = vunpack.c.l.b16 %v2582
      %v2679 = vunpack.c.l.b16 %v2583
      %v2680 = vunpack.c.l.b16 %v2584
      %v2681 = vunpack.c.l.b16 %v2585
      %v2682 = vunpack.c.l.b16 %v2586
      %v2683 = vunpack.c.l.b16 %v2587
      %v2684 = vunpack.c.l.b16 %v2588
      %v2685 = vunpack.c.l.b16 %v2589
      %v2686 = vunpack.c.l.b16 %v2590
      %v2687 = vpack.c.b16 %v2640, %v2639
      %v2688 = vpack.c.b16 %v2642, %v2641
      %v2689 = vpack.c.b16 %v2644, %v2643
      %v2690 = vpack.c.b16 %v2646, %v2645
      %v2691 = vpack.c.b16 %v2648, %v2647
      %v2692 = vpack.c.b16 %v2650, %v2649
      %v2693 = vpack.c.b16 %v2652, %v2651
      %v2694 = vpack.c.b16 %v2654, %v2653
      %v2695 = vpack.c.b16 %v2656, %v2655
      %v2696 = vpack.c.b16 %v2658, %v2657
      %v2697 = vpack.c.b16 %v2660, %v2659
      %v2698 = vpack.c.b16 %v2662, %v2661
      %v2699 = vpack.c.b16 %v2664, %v2663
      %v2700 = vpack.c.b16 %v2666, %v2665
      %v2701 = vpack.c.b16 %v2668, %v2667
      %v2702 = vpack.c.b16 %v2670, %v2669
      %v2703 = vpack.c.b16 %v2672, %v2671
      %v2704 = vpack.c.b16 %v2674, %v2673
      %v2705 = vpack.c.b16 %v2676, %v2675
      %v2706 = vpack.c.b16 %v2678, %v2677
      %v2707 = vpack.c.b16 %v2680, %v2679
      %v2708 = vpack.c.b16 %v2682, %v2681
      %v2709 = vpack.c.b16 %v2684, %v2683
      %v2710 = vpack.c.b16 %v2686, %v2685
      %2735 = vmatprep.subr.bf16.mxu0 0
      %2736 = vmatpush1.bf16.msra.mxu0 %v2687
      %2737 = vmatprep.subr.bf16.mxu0 0
      %2738 = vmatpush1.bf16.msra.mxu0 %v2688
      %2739 = vmatprep.subr.bf16.mxu0 0
      %2740 = vmatpush1.bf16.msra.mxu0 %v2689
      %2741 = vmatprep.subr.bf16.mxu0 0
      %2742 = vmatpush1.bf16.msra.mxu0 %v2690
      %2743 = vmatprep.subr.bf16.mxu0 0
      %2744 = vmatpush1.bf16.msra.mxu0 %v2691
      %2745 = vmatprep.subr.bf16.mxu0 0
      %2746 = vmatpush1.bf16.msra.mxu0 %v2692
      %2747 = vmatprep.subr.bf16.mxu0 0
      %2748 = vmatpush1.bf16.msra.mxu0 %v2693
      %2749 = vmatprep.subr.bf16.mxu0 0
      %2750 = vmatpush1.bf16.msra.mxu0 %v2694
      %2751 = vmatprep.subr.bf16.mxu0 0
      %2752 = vmatpush1.bf16.msra.mxu0 %v2695
      %2753 = vmatprep.subr.bf16.mxu0 0
      %2754 = vmatpush1.bf16.msra.mxu0 %v2696
      %2755 = vmatprep.subr.bf16.mxu0 0
      %2756 = vmatpush1.bf16.msra.mxu0 %v2697
      %2757 = vmatprep.subr.bf16.mxu0 0
      %2758 = vmatpush1.bf16.msra.mxu0 %v2698
      %2759 = vmatprep.subr.bf16.mxu0 0
      %2760 = vmatpush1.bf16.msra.mxu0 %v2699
      %2761 = vmatprep.subr.bf16.mxu0 0
      %2762 = vmatpush1.bf16.msra.mxu0 %v2700
      %2763 = vmatprep.subr.bf16.mxu0 0
      %2764 = vmatpush1.bf16.msra.mxu0 %v2701
      %2765 = vmatprep.subr.bf16.mxu0 0
      %2766 = vmatpush1.bf16.msra.mxu0 %v2702
      %2767 = vmatprep.mubr.bf16.mxu0 %v2233
      %2768 = vmatmul.mubr.bf16.gmra.mrb[0].mxu0 %v2142
      %v2769 = vpop.f32.mrb[0].mxu0
      %v2770 = vadd.f32 0.0, %v2769
      %v2771 = vpop.f32.mrb[0].mxu0
      %v2772 = vpop.f32.mrb[0].mxu0
      %v2773 = vadd.f32 0.0, %v2772
      %v2774 = vpop.f32.mrb[0].mxu0
      %2775 = vmatprep.mubr.bf16.mxu0 %v2245
      %2776 = vmatmul.mubr.bf16.gmra.mrb[0].mxu0 %v2143
      %v2777 = vpop.f32.mrb[0].mxu0
      %v2778 = vadd.f32 0.0, %v2777
      %v2779 = vpop.f32.mrb[0].mxu0
      %v2780 = vpop.f32.mrb[0].mxu0
      %v2781 = vadd.f32 0.0, %v2780
      %v2782 = vpop.f32.mrb[0].mxu0
      %2783 = vmatprep.mubr.bf16.mxu0 %v2257
      %2784 = vmatmul.mubr.bf16.gmra.mrb[0].mxu0 %v2144
      %v2785 = vpop.f32.mrb[0].mxu0
      %v2786 = vadd.f32 0.0, %v2785
      %v2787 = vpop.f32.mrb[0].mxu0
      %v2788 = vpop.f32.mrb[0].mxu0
      %v2789 = vadd.f32 0.0, %v2788
      %v2790 = vpop.f32.mrb[0].mxu0
      %2791 = vmatprep.mubr.bf16.mxu0 %v2269
      %2792 = vmatmul.mubr.bf16.gmra.mrb[0].mxu0 %v2145
      %v2793 = vpop.f32.mrb[0].mxu0
      %v2794 = vadd.f32 0.0, %v2793
      %v2795 = vpop.f32.mrb[0].mxu0
      %v2796 = vpop.f32.mrb[0].mxu0
      %v2797 = vadd.f32 0.0, %v2796
      %v2798 = vpop.f32.mrb[0].mxu0
      %2799 = vmatprep.mubr.bf16.mxu0 %v2281
      %2800 = vmatmul.mubr.bf16.gmra.mrb[0].mxu0 %v2146
      %v2801 = vpop.f32.mrb[0].mxu0
      %v2802 = vadd.f32 0.0, %v2801
      %v2803 = vpop.f32.mrb[0].mxu0
      %v2804 = vpop.f32.mrb[0].mxu0
      %v2805 = vadd.f32 0.0, %v2804
      %v2806 = vpop.f32.mrb[0].mxu0
      %2807 = vmatprep.mubr.bf16.mxu0 %v2293
      %2808 = vmatmul.mubr.bf16.gmra.mrb[0].mxu0 %v2147
      %v2809 = vpop.f32.mrb[0].mxu0
      %v2810 = vadd.f32 0.0, %v2809
      %v2811 = vpop.f32.mrb[0].mxu0
      %v2812 = vpop.f32.mrb[0].mxu0
      %v2813 = vadd.f32 0.0, %v2812
      %v2814 = vpop.f32.mrb[0].mxu0
      %2815 = vmatprep.mubr.bf16.mxu0 %v2305
      %2816 = vmatmul.mubr.bf16.gmra.mrb[0].mxu0 %v2148
      %v2817 = vpop.f32.mrb[0].mxu0
      %v2818 = vadd.f32 0.0, %v2817
      %v2819 = vpop.f32.mrb[0].mxu0
      %v2820 = vpop.f32.mrb[0].mxu0
      %v2821 = vadd.f32 0.0, %v2820
      %v2822 = vpop.f32.mrb[0].mxu0
      %2823 = vmatprep.mubr.bf16.mxu0 %v2317
      %2824 = vmatmul.mubr.bf16.gmra.mrb[0].mxu0 %v2149
      %v2825 = vpop.f32.mrb[0].mxu0
      %v2826 = vadd.f32 0.0, %v2825
      %v2827 = vpop.f32.mrb[0].mxu0
      %v2828 = vpop.f32.mrb[0].mxu0
      %v2829 = vadd.f32 0.0, %v2828
      %v2830 = vpop.f32.mrb[0].mxu0
      %2831 = vmatprep.mubr.bf16.mxu0 %v2329
      %2832 = vmatmul.mubr.bf16.gmra.mrb[0].mxu0 %v2150
      %v2833 = vpop.f32.mrb[0].mxu0
      %v2834 = vadd.f32 0.0, %v2833
      %v2835 = vpop.f32.mrb[0].mxu0
      %v2836 = vpop.f32.mrb[0].mxu0
      %v2837 = vadd.f32 0.0, %v2836
      %v2838 = vpop.f32.mrb[0].mxu0
      %2839 = vmatprep.mubr.bf16.mxu0 %v2341
      %2840 = vmatmul.mubr.bf16.gmra.mrb[0].mxu0 %v2151
      %v2841 = vpop.f32.mrb[0].mxu0
      %v2842 = vadd.f32 0.0, %v2841
      %v2843 = vpop.f32.mrb[0].mxu0
      %v2844 = vpop.f32.mrb[0].mxu0
      %v2845 = vadd.f32 0.0, %v2844
      %v2846 = vpop.f32.mrb[0].mxu0
      %2847 = vmatprep.mubr.bf16.mxu0 %v2353
      %2848 = vmatmul.mubr.bf16.gmra.mrb[0].mxu0 %v2152
      %v2849 = vpop.f32.mrb[0].mxu0
      %v2850 = vadd.f32 0.0, %v2849
      %v2851 = vpop.f32.mrb[0].mxu0
      %v2852 = vpop.f32.mrb[0].mxu0
      %v2853 = vadd.f32 0.0, %v2852
      %v2854 = vpop.f32.mrb[0].mxu0
      %2855 = vmatprep.mubr.bf16.mxu0 %v2365
      %2856 = vmatmul.mubr.bf16.gmra.mrb[0].mxu0 %v2153
      %v2857 = vpop.f32.mrb[0].mxu0
      %v2858 = vadd.f32 0.0, %v2857
      %v2859 = vpop.f32.mrb[0].mxu0
      %v2860 = vpop.f32.mrb[0].mxu0
      %v2861 = vadd.f32 0.0, %v2860
      %v2862 = vpop.f32.mrb[0].mxu0
      %2863 = vmatprep.mubr.bf16.mxu0 %v2377
      %2864 = vmatmul.mubr.bf16.gmra.mrb[0].mxu0 %v2154
      %v2865 = vpop.f32.mrb[0].mxu0
      %v2866 = vadd.f32 0.0, %v2865
      %v2867 = vpop.f32.mrb[0].mxu0
      %v2868 = vpop.f32.mrb[0].mxu0
      %v2869 = vadd.f32 0.0, %v2868
      %v2870 = vpop.f32.mrb[0].mxu0
      %2871 = vmatprep.mubr.bf16.mxu0 %v2389
      %2872 = vmatmul.mubr.bf16.gmra.mrb[0].mxu0 %v2155
      %v2873 = vpop.f32.mrb[0].mxu0
      %v2874 = vadd.f32 0.0, %v2873
      %v2875 = vpop.f32.mrb[0].mxu0
      %v2876 = vpop.f32.mrb[0].mxu0
      %v2877 = vadd.f32 0.0, %v2876
      %v2878 = vpop.f32.mrb[0].mxu0
      %2879 = vmatprep.mubr.bf16.mxu0 %v2401
      %2880 = vmatmul.mubr.bf16.gmra.mrb[0].mxu0 %v2156
      %v2881 = vpop.f32.mrb[0].mxu0
      %v2882 = vadd.f32 0.0, %v2881
      %v2883 = vpop.f32.mrb[0].mxu0
      %v2884 = vpop.f32.mrb[0].mxu0
      %v2885 = vadd.f32 0.0, %v2884
      %v2886 = vpop.f32.mrb[0].mxu0
      %2887 = vmatprep.mubr.bf16.mxu0 %v2413
      %2888 = vmatmul.mubr.bf16.gmra.mrb[0].mxu0 %v2157
      %v2889 = vpop.f32.mrb[0].mxu0
      %v2890 = vadd.f32 0.0, %v2889
      %v2891 = vpop.f32.mrb[0].mxu0
      %v2892 = vpop.f32.mrb[0].mxu0
      %v2893 = vadd.f32 0.0, %v2892
      %v2894 = vpop.f32.mrb[0].mxu0
      %2895 = vdwg.mxu0
      %2896 = vmatprep.subr.bf16.mxu0 0
      %2897 = vmatpush1.bf16.msra.mxu0 %v2703
      %2898 = vmatprep.subr.bf16.mxu0 0
      %2899 = vmatpush1.bf16.msra.mxu0 %v2704
      %2900 = vmatprep.subr.bf16.mxu0 0
      %2901 = vmatpush1.bf16.msra.mxu0 %v2705
      %2902 = vmatprep.subr.bf16.mxu0 0
      %2903 = vmatpush1.bf16.msra.mxu0 %v2706
      %2904 = vmatprep.subr.bf16.mxu0 0
      %2905 = vmatpush1.bf16.msra.mxu0 %v2707
      %2906 = vmatprep.subr.bf16.mxu0 0
      %2907 = vmatpush1.bf16.msra.mxu0 %v2708
      %2908 = vmatprep.subr.bf16.mxu0 0
      %2909 = vmatpush1.bf16.msra.mxu0 %v2709
      %2910 = vmatprep.subr.bf16.mxu0 0
      %2911 = vmatpush1.bf16.msra.mxu0 %v2710
      %2912 = vmatprep.subr.bf16.mxu0 0
      %2913 = vmatpush1.bf16.msra.mxu0 0
      %2914 = vmatprep.subr.bf16.mxu0 0
      %2915 = vmatpush1.bf16.msra.mxu0 0
      %2916 = vmatprep.subr.bf16.mxu0 0
      %2917 = vmatpush1.bf16.msra.mxu0 0
      %2918 = vmatprep.subr.bf16.mxu0 0
      %2919 = vmatpush1.bf16.msra.mxu0 0
      %2920 = vmatprep.subr.bf16.mxu0 0
      %2921 = vmatpush1.bf16.msra.mxu0 0
      %2922 = vmatprep.subr.bf16.mxu0 0
      %2923 = vmatpush1.bf16.msra.mxu0 0
      %2924 = vmatprep.subr.bf16.mxu0 0
      %2925 = vmatpush1.bf16.msra.mxu0 0
      %2926 = vmatprep.subr.bf16.mxu0 0
      %2927 = vmatpush1.bf16.msra.mxu0 0
      %2928 = vmatprep.mubr.bf16.mxu0 0
      %2929 = vmatmul.mubr.bf16.gmra.mrb[0].mxu0 %v2480
      %v2930 = vpop.f32.mrb[0].mxu0
      %v2931 = vadd.f32 %v2770, %v2930
      %v2932 = vpop.f32.mrb[0].mxu0
      %v2933 = vpop.f32.mrb[0].mxu0
      %v2934 = vadd.f32 %v2773, %v2933
      %v2935 = vpop.f32.mrb[0].mxu0
      %2936 = vmatprep.mubr.bf16.mxu0 0
      %2937 = vmatmul.mubr.bf16.gmra.mrb[0].mxu0 %v2483
      %v2938 = vpop.f32.mrb[0].mxu0
      %v2939 = vadd.f32 %v2778, %v2938
      %v2940 = vpop.f32.mrb[0].mxu0
      %v2941 = vpop.f32.mrb[0].mxu0
      %v2942 = vadd.f32 %v2781, %v2941
      %v2943 = vpop.f32.mrb[0].mxu0
      %2944 = vmatprep.mubr.bf16.mxu0 0
      %2945 = vmatmul.mubr.bf16.gmra.mrb[0].mxu0 %v2486
      %v2946 = vpop.f32.mrb[0].mxu0
      %v2947 = vadd.f32 %v2786, %v2946
      %v2948 = vpop.f32.mrb[0].mxu0
      %v2949 = vpop.f32.mrb[0].mxu0
      %v2950 = vadd.f32 %v2789, %v2949
      %v2951 = vpop.f32.mrb[0].mxu0
      %2952 = vmatprep.mubr.bf16.mxu0 0
      %2953 = vmatmul.mubr.bf16.gmra.mrb[0].mxu0 %v2489
      %v2954 = vpop.f32.mrb[0].mxu0
      %v2955 = vadd.f32 %v2794, %v2954
      %v2956 = vpop.f32.mrb[0].mxu0
      %v2957 = vpop.f32.mrb[0].mxu0
      %v2958 = vadd.f32 %v2797, %v2957
      %v2959 = vpop.f32.mrb[0].mxu0
      %2960 = vmatprep.mubr.bf16.mxu0 0
      %2961 = vmatmul.mubr.bf16.gmra.mrb[0].mxu0 %v2492
      %v2962 = vpop.f32.mrb[0].mxu0
      %v2963 = vadd.f32 %v2802, %v2962
      %v2964 = vpop.f32.mrb[0].mxu0
      %v2965 = vpop.f32.mrb[0].mxu0
      %v2966 = vadd.f32 %v2805, %v2965
      %v2967 = vpop.f32.mrb[0].mxu0
      %2968 = vmatprep.mubr.bf16.mxu0 0
      %2969 = vmatmul.mubr.bf16.gmra.mrb[0].mxu0 %v2495
      %v2970 = vpop.f32.mrb[0].mxu0
      %v2971 = vadd.f32 %v2810, %v2970
      %v2972 = vpop.f32.mrb[0].mxu0
      %v2973 = vpop.f32.mrb[0].mxu0
      %v2974 = vadd.f32 %v2813, %v2973
      %v2975 = vpop.f32.mrb[0].mxu0
      %2976 = vmatprep.mubr.bf16.mxu0 0
      %2977 = vmatmul.mubr.bf16.gmra.mrb[0].mxu0 %v2498
      %v2978 = vpop.f32.mrb[0].mxu0
      %v2979 = vadd.f32 %v2818, %v2978
      %v2980 = vpop.f32.mrb[0].mxu0
      %v2981 = vpop.f32.mrb[0].mxu0
      %v2982 = vadd.f32 %v2821, %v2981
      %v2983 = vpop.f32.mrb[0].mxu0
      %2984 = vmatprep.mubr.bf16.mxu0 0
      %2985 = vmatmul.mubr.bf16.gmra.mrb[0].mxu0 %v2501
      %v2986 = vpop.f32.mrb[0].mxu0
      %v2987 = vadd.f32 %v2826, %v2986
      %v2988 = vpop.f32.mrb[0].mxu0
      %v2989 = vpop.f32.mrb[0].mxu0
      %v2990 = vadd.f32 %v2829, %v2989
      %v2991 = vpop.f32.mrb[0].mxu0
      %2992 = vmatprep.mubr.bf16.mxu0 0
      %2993 = vmatmul.mubr.bf16.gmra.mrb[0].mxu0 %v2504
      %v2994 = vpop.f32.mrb[0].mxu0
      %v2995 = vadd.f32 %v2834, %v2994
      %v2996 = vpop.f32.mrb[0].mxu0
      %v2997 = vpop.f32.mrb[0].mxu0
      %v2998 = vadd.f32 %v2837, %v2997
      %v2999 = vpop.f32.mrb[0].mxu0
      %3000 = vmatprep.mubr.bf16.mxu0 0
      %3001 = vmatmul.mubr.bf16.gmra.mrb[0].mxu0 %v2507
      %v3002 = vpop.f32.mrb[0].mxu0
      %v3003 = vadd.f32 %v2842, %v3002
      %v3004 = vpop.f32.mrb[0].mxu0
      %v3005 = vpop.f32.mrb[0].mxu0
      %v3006 = vadd.f32 %v2845, %v3005
      %v3007 = vpop.f32.mrb[0].mxu0
      %3008 = vmatprep.mubr.bf16.mxu0 0
      %3009 = vmatmul.mubr.bf16.gmra.mrb[0].mxu0 %v2510
      %v3010 = vpop.f32.mrb[0].mxu0
      %v3011 = vadd.f32 %v2850, %v3010
      %v3012 = vpop.f32.mrb[0].mxu0
      %v3013 = vpop.f32.mrb[0].mxu0
      %v3014 = vadd.f32 %v2853, %v3013
      %v3015 = vpop.f32.mrb[0].mxu0
      %3016 = vmatprep.mubr.bf16.mxu0 0
      %3017 = vmatmul.mubr.bf16.gmra.mrb[0].mxu0 %v2513
      %v3018 = vpop.f32.mrb[0].mxu0
      %v3019 = vadd.f32 %v2858, %v3018
      %v3020 = vpop.f32.mrb[0].mxu0
      %v3021 = vpop.f32.mrb[0].mxu0
      %v3022 = vadd.f32 %v2861, %v3021
      %v3023 = vpop.f32.mrb[0].mxu0
      %3024 = vmatprep.mubr.bf16.mxu0 0
      %3025 = vmatmul.mubr.bf16.gmra.mrb[0].mxu0 %v2516
      %v3026 = vpop.f32.mrb[0].mxu0
      %v3027 = vadd.f32 %v2866, %v3026
      %v3028 = vpop.f32.mrb[0].mxu0
      %v3029 = vpop.f32.mrb[0].mxu0
      %v3030 = vadd.f32 %v2869, %v3029
      %v3031 = vpop.f32.mrb[0].mxu0
      %3032 = vmatprep.mubr.bf16.mxu0 0
      %3033 = vmatmul.mubr.bf16.gmra.mrb[0].mxu0 %v2519
      %v3034 = vpop.f32.mrb[0].mxu0
      %v3035 = vadd.f32 %v2874, %v3034
      %v3036 = vpop.f32.mrb[0].mxu0
      %v3037 = vpop.f32.mrb[0].mxu0
      %v3038 = vadd.f32 %v2877, %v3037
      %v3039 = vpop.f32.mrb[0].mxu0
      %3040 = vmatprep.mubr.bf16.mxu0 0
      %3041 = vmatmul.mubr.bf16.gmra.mrb[0].mxu0 %v2522
      %v3042 = vpop.f32.mrb[0].mxu0
      %v3043 = vadd.f32 %v2882, %v3042
      %v3044 = vpop.f32.mrb[0].mxu0
      %v3045 = vpop.f32.mrb[0].mxu0
      %v3046 = vadd.f32 %v2885, %v3045
      %v3047 = vpop.f32.mrb[0].mxu0
      %3048 = vmatprep.mubr.bf16.mxu0 0
      %3049 = vmatmul.mubr.bf16.gmra.mrb[0].mxu0 %v2525
      %v3050 = vpop.f32.mrb[0].mxu0
      %v3051 = vadd.f32 %v2890, %v3050
      %v3052 = vpop.f32.mrb[0].mxu0
      %v3053 = vpop.f32.mrb[0].mxu0
      %v3054 = vadd.f32 %v2893, %v3053
      %v3055 = vpop.f32.mrb[0].mxu0
      %3056 = vdwg.mxu0
      %v3105 = vunpack.c.l.b16 %v1966
      %v3106 = vunpack.c.l.b16 %v1967
      %v3107 = vunpack.c.l.b16 %v1968
      %v3108 = vunpack.c.l.b16 %v1969
      %v3109 = vunpack.c.l.b16 %v1970
      %v3110 = vunpack.c.l.b16 %v1971
      %v3111 = vunpack.c.l.b16 %v1972
      %v3112 = vunpack.c.l.b16 %v1973
      %v3113 = vunpack.c.l.b16 %v1974
      %v3114 = vunpack.c.l.b16 %v1975
      %v3115 = vunpack.c.l.b16 %v1976
      %v3116 = vunpack.c.l.b16 %v1977
      %v3117 = vunpack.c.l.b16 %v1978
      %v3118 = vunpack.c.l.b16 %v1979
      %v3119 = vunpack.c.l.b16 %v1980
      %v3120 = vunpack.c.l.b16 %v1981
      %v3121 = vunpack.c.l.b16 %v1982
      %v3122 = vunpack.c.l.b16 %v1983
      %v3123 = vunpack.c.l.b16 %v1984
      %v3124 = vunpack.c.l.b16 %v1985
      %v3125 = vunpack.c.l.b16 %v1986
      %v3126 = vunpack.c.l.b16 %v1987
      %v3127 = vunpack.c.l.b16 %v1988
      %v3128 = vunpack.c.l.b16 %v1989
      %v3129 = vunpack.c.l.b16 %v1990
      %v3130 = vunpack.c.l.b16 %v1991
      %v3131 = vunpack.c.l.b16 %v1992
      %v3132 = vunpack.c.l.b16 %v1993
      %v3133 = vunpack.c.l.b16 %v1994
      %v3134 = vunpack.c.l.b16 %v1995
      %v3135 = vunpack.c.l.b16 %v1996
      %v3136 = vunpack.c.l.b16 %v1997
      %v3137 = vunpack.c.l.b16 %v1998
      %v3138 = vunpack.c.l.b16 %v1999
      %v3139 = vunpack.c.l.b16 %v2000
      %v3140 = vunpack.c.l.b16 %v2001
      %v3141 = vunpack.c.l.b16 %v2002
      %v3142 = vunpack.c.l.b16 %v2003
      %v3143 = vunpack.c.l.b16 %v2004
      %v3144 = vunpack.c.l.b16 %v2005
      %v3145 = vunpack.c.l.b16 %v2006
      %v3146 = vunpack.c.l.b16 %v2007
      %v3147 = vunpack.c.l.b16 %v2008
      %v3148 = vunpack.c.l.b16 %v2009
      %v3149 = vunpack.c.l.b16 %v2010
      %v3150 = vunpack.c.l.b16 %v2011
      %v3151 = vunpack.c.l.b16 %v2012
      %v3152 = vunpack.c.l.b16 %v2013
      %v3153 = vpack.c.b16 %v3106, %v3105
      %v3154 = vpack.c.b16 %v3108, %v3107
      %v3155 = vpack.c.b16 %v3110, %v3109
      %v3156 = vpack.c.b16 %v3112, %v3111
      %v3157 = vpack.c.b16 %v3114, %v3113
      %v3158 = vpack.c.b16 %v3116, %v3115
      %v3159 = vpack.c.b16 %v3118, %v3117
      %v3160 = vpack.c.b16 %v3120, %v3119
      %v3161 = vpack.c.b16 %v3122, %v3121
      %v3162 = vpack.c.b16 %v3124, %v3123
      %v3163 = vpack.c.b16 %v3126, %v3125
      %v3164 = vpack.c.b16 %v3128, %v3127
      %v3165 = vpack.c.b16 %v3130, %v3129
      %v3166 = vpack.c.b16 %v3132, %v3131
      %v3167 = vpack.c.b16 %v3134, %v3133
      %v3168 = vpack.c.b16 %v3136, %v3135
      %v3169 = vpack.c.b16 %v3138, %v3137
      %v3170 = vpack.c.b16 %v3140, %v3139
      %v3171 = vpack.c.b16 %v3142, %v3141
      %v3172 = vpack.c.b16 %v3144, %v3143
      %v3173 = vpack.c.b16 %v3146, %v3145
      %v3174 = vpack.c.b16 %v3148, %v3147
      %v3175 = vpack.c.b16 %v3150, %v3149
      %v3176 = vpack.c.b16 %v3152, %v3151
      %3201 = vmatprep.subr.bf16.mxu0 0
      %3202 = vmatpush1.bf16.msra.mxu0 %v3153
      %3203 = vmatprep.subr.bf16.mxu0 0
      %3204 = vmatpush1.bf16.msra.mxu0 %v3154
      %3205 = vmatprep.subr.bf16.mxu0 0
      %3206 = vmatpush1.bf16.msra.mxu0 %v3155
      %3207 = vmatprep.subr.bf16.mxu0 0
      %3208 = vmatpush1.bf16.msra.mxu0 %v3156
      %3209 = vmatprep.subr.bf16.mxu0 0
      %3210 = vmatpush1.bf16.msra.mxu0 %v3157
      %3211 = vmatprep.subr.bf16.mxu0 0
      %3212 = vmatpush1.bf16.msra.mxu0 %v3158
      %3213 = vmatprep.subr.bf16.mxu0 0
      %3214 = vmatpush1.bf16.msra.mxu0 %v3159
      %3215 = vmatprep.subr.bf16.mxu0 0
      %3216 = vmatpush1.bf16.msra.mxu0 %v3160
      %3217 = vmatprep.subr.bf16.mxu0 0
      %3218 = vmatpush1.bf16.msra.mxu0 %v3161
      %3219 = vmatprep.subr.bf16.mxu0 0
      %3220 = vmatpush1.bf16.msra.mxu0 %v3162
      %3221 = vmatprep.subr.bf16.mxu0 0
      %3222 = vmatpush1.bf16.msra.mxu0 %v3163
      %3223 = vmatprep.subr.bf16.mxu0 0
      %3224 = vmatpush1.bf16.msra.mxu0 %v3164
      %3225 = vmatprep.subr.bf16.mxu0 0
      %3226 = vmatpush1.bf16.msra.mxu0 %v3165
      %3227 = vmatprep.subr.bf16.mxu0 0
      %3228 = vmatpush1.bf16.msra.mxu0 %v3166
      %3229 = vmatprep.subr.bf16.mxu0 0
      %3230 = vmatpush1.bf16.msra.mxu0 %v3167
      %3231 = vmatprep.subr.bf16.mxu0 0
      %3232 = vmatpush1.bf16.msra.mxu0 %v3168
      %3233 = vmatprep.mubr.bf16.mxu0 %v1656
      %3234 = vmatmul.mubr.bf16.gmra.mrb[0].mxu0 %v1564
      %v3235 = vpop.f32.mrb[0].mxu0
      %v3236 = vadd.f32 %v2931, %v3235
      %v3237 = vpop.f32.mrb[0].mxu0
      %v3238 = vpop.f32.mrb[0].mxu0
      %v3239 = vadd.f32 %v2934, %v3238
      %v3240 = vpop.f32.mrb[0].mxu0
      %3241 = vmatprep.mubr.bf16.mxu0 %v1668
      %3242 = vmatmul.mubr.bf16.gmra.mrb[0].mxu0 %v1565
      %v3243 = vpop.f32.mrb[0].mxu0
      %v3244 = vadd.f32 %v2939, %v3243
      %v3245 = vpop.f32.mrb[0].mxu0
      %v3246 = vpop.f32.mrb[0].mxu0
      %v3247 = vadd.f32 %v2942, %v3246
      %v3248 = vpop.f32.mrb[0].mxu0
      %3249 = vmatprep.mubr.bf16.mxu0 %v1680
      %3250 = vmatmul.mubr.bf16.gmra.mrb[0].mxu0 %v1566
      %v3251 = vpop.f32.mrb[0].mxu0
      %v3252 = vadd.f32 %v2947, %v3251
      %v3253 = vpop.f32.mrb[0].mxu0
      %v3254 = vpop.f32.mrb[0].mxu0
      %v3255 = vadd.f32 %v2950, %v3254
      %v3256 = vpop.f32.mrb[0].mxu0
      %3257 = vmatprep.mubr.bf16.mxu0 %v1692
      %3258 = vmatmul.mubr.bf16.gmra.mrb[0].mxu0 %v1567
      %v3259 = vpop.f32.mrb[0].mxu0
      %v3260 = vadd.f32 %v2955, %v3259
      %v3261 = vpop.f32.mrb[0].mxu0
      %v3262 = vpop.f32.mrb[0].mxu0
      %v3263 = vadd.f32 %v2958, %v3262
      %v3264 = vpop.f32.mrb[0].mxu0
      %3265 = vmatprep.mubr.bf16.mxu0 %v1704
      %3266 = vmatmul.mubr.bf16.gmra.mrb[0].mxu0 %v1568
      %v3267 = vpop.f32.mrb[0].mxu0
      %v3268 = vadd.f32 %v2963, %v3267
      %v3269 = vpop.f32.mrb[0].mxu0
      %v3270 = vpop.f32.mrb[0].mxu0
      %v3271 = vadd.f32 %v2966, %v3270
      %v3272 = vpop.f32.mrb[0].mxu0
      %3273 = vmatprep.mubr.bf16.mxu0 %v1716
      %3274 = vmatmul.mubr.bf16.gmra.mrb[0].mxu0 %v1569
      %v3275 = vpop.f32.mrb[0].mxu0
      %v3276 = vadd.f32 %v2971, %v3275
      %v3277 = vpop.f32.mrb[0].mxu0
      %v3278 = vpop.f32.mrb[0].mxu0
      %v3279 = vadd.f32 %v2974, %v3278
      %v3280 = vpop.f32.mrb[0].mxu0
      %3281 = vmatprep.mubr.bf16.mxu0 %v1728
      %3282 = vmatmul.mubr.bf16.gmra.mrb[0].mxu0 %v1570
      %v3283 = vpop.f32.mrb[0].mxu0
      %v3284 = vadd.f32 %v2979, %v3283
      %v3285 = vpop.f32.mrb[0].mxu0
      %v3286 = vpop.f32.mrb[0].mxu0
      %v3287 = vadd.f32 %v2982, %v3286
      %v3288 = vpop.f32.mrb[0].mxu0
      %3289 = vmatprep.mubr.bf16.mxu0 %v1740
      %3290 = vmatmul.mubr.bf16.gmra.mrb[0].mxu0 %v1571
      %v3291 = vpop.f32.mrb[0].mxu0
      %v3292 = vadd.f32 %v2987, %v3291
      %v3293 = vpop.f32.mrb[0].mxu0
      %v3294 = vpop.f32.mrb[0].mxu0
      %v3295 = vadd.f32 %v2990, %v3294
      %v3296 = vpop.f32.mrb[0].mxu0
      %3297 = vmatprep.mubr.bf16.mxu0 %v1752
      %3298 = vmatmul.mubr.bf16.gmra.mrb[0].mxu0 %v1572
      %v3299 = vpop.f32.mrb[0].mxu0
      %v3300 = vadd.f32 %v2995, %v3299
      %v3301 = vpop.f32.mrb[0].mxu0
      %v3302 = vpop.f32.mrb[0].mxu0
      %v3303 = vadd.f32 %v2998, %v3302
      %v3304 = vpop.f32.mrb[0].mxu0
      %3305 = vmatprep.mubr.bf16.mxu0 %v1764
      %3306 = vmatmul.mubr.bf16.gmra.mrb[0].mxu0 %v1573
      %v3307 = vpop.f32.mrb[0].mxu0
      %v3308 = vadd.f32 %v3003, %v3307
      %v3309 = vpop.f32.mrb[0].mxu0
      %v3310 = vpop.f32.mrb[0].mxu0
      %v3311 = vadd.f32 %v3006, %v3310
      %v3312 = vpop.f32.mrb[0].mxu0
      %3313 = vmatprep.mubr.bf16.mxu0 %v1776
      %3314 = vmatmul.mubr.bf16.gmra.mrb[0].mxu0 %v1574
      %v3315 = vpop.f32.mrb[0].mxu0
      %v3316 = vadd.f32 %v3011, %v3315
      %v3317 = vpop.f32.mrb[0].mxu0
      %v3318 = vpop.f32.mrb[0].mxu0
      %v3319 = vadd.f32 %v3014, %v3318
      %v3320 = vpop.f32.mrb[0].mxu0
      %3321 = vmatprep.mubr.bf16.mxu0 %v1788
      %3322 = vmatmul.mubr.bf16.gmra.mrb[0].mxu0 %v1575
      %v3323 = vpop.f32.mrb[0].mxu0
      %v3324 = vadd.f32 %v3019, %v3323
      %v3325 = vpop.f32.mrb[0].mxu0
      %v3326 = vpop.f32.mrb[0].mxu0
      %v3327 = vadd.f32 %v3022, %v3326
      %v3328 = vpop.f32.mrb[0].mxu0
      %3329 = vmatprep.mubr.bf16.mxu0 %v1800
      %3330 = vmatmul.mubr.bf16.gmra.mrb[0].mxu0 %v1576
      %v3331 = vpop.f32.mrb[0].mxu0
      %v3332 = vadd.f32 %v3027, %v3331
      %v3333 = vpop.f32.mrb[0].mxu0
      %v3334 = vpop.f32.mrb[0].mxu0
      %v3335 = vadd.f32 %v3030, %v3334
      %v3336 = vpop.f32.mrb[0].mxu0
      %3337 = vmatprep.mubr.bf16.mxu0 %v1812
      %3338 = vmatmul.mubr.bf16.gmra.mrb[0].mxu0 %v1577
      %v3339 = vpop.f32.mrb[0].mxu0
      %v3340 = vadd.f32 %v3035, %v3339
      %v3341 = vpop.f32.mrb[0].mxu0
      %v3342 = vpop.f32.mrb[0].mxu0
      %v3343 = vadd.f32 %v3038, %v3342
      %v3344 = vpop.f32.mrb[0].mxu0
      %3345 = vmatprep.mubr.bf16.mxu0 %v1824
      %3346 = vmatmul.mubr.bf16.gmra.mrb[0].mxu0 %v1578
      %v3347 = vpop.f32.mrb[0].mxu0
      %v3348 = vadd.f32 %v3043, %v3347
      %v3349 = vpop.f32.mrb[0].mxu0
      %v3350 = vpop.f32.mrb[0].mxu0
      %v3351 = vadd.f32 %v3046, %v3350
      %v3352 = vpop.f32.mrb[0].mxu0
      %3353 = vmatprep.mubr.bf16.mxu0 %v1836
      %3354 = vmatmul.mubr.bf16.gmra.mrb[0].mxu0 %v1579
      %v3355 = vpop.f32.mrb[0].mxu0
      %v3356 = vadd.f32 %v3051, %v3355
      %v3357 = vpop.f32.mrb[0].mxu0
      %v3358 = vpop.f32.mrb[0].mxu0
      %v3359 = vadd.f32 %v3054, %v3358
      %v3360 = vpop.f32.mrb[0].mxu0
      %3361 = vdwg.mxu0
      %3362 = vmatprep.subr.bf16.mxu0 0
      %3363 = vmatpush1.bf16.msra.mxu0 %v3169
      %3364 = vmatprep.subr.bf16.mxu0 0
      %3365 = vmatpush1.bf16.msra.mxu0 %v3170
      %3366 = vmatprep.subr.bf16.mxu0 0
      %3367 = vmatpush1.bf16.msra.mxu0 %v3171
      %3368 = vmatprep.subr.bf16.mxu0 0
      %3369 = vmatpush1.bf16.msra.mxu0 %v3172
      %3370 = vmatprep.subr.bf16.mxu0 0
      %3371 = vmatpush1.bf16.msra.mxu0 %v3173
      %3372 = vmatprep.subr.bf16.mxu0 0
      %3373 = vmatpush1.bf16.msra.mxu0 %v3174
      %3374 = vmatprep.subr.bf16.mxu0 0
      %3375 = vmatpush1.bf16.msra.mxu0 %v3175
      %3376 = vmatprep.subr.bf16.mxu0 0
      %3377 = vmatpush1.bf16.msra.mxu0 %v3176
      %3378 = vmatprep.subr.bf16.mxu0 0
      %3379 = vmatpush1.bf16.msra.mxu0 0
      %3380 = vmatprep.subr.bf16.mxu0 0
      %3381 = vmatpush1.bf16.msra.mxu0 0
      %3382 = vmatprep.subr.bf16.mxu0 0
      %3383 = vmatpush1.bf16.msra.mxu0 0
      %3384 = vmatprep.subr.bf16.mxu0 0
      %3385 = vmatpush1.bf16.msra.mxu0 0
      %3386 = vmatprep.subr.bf16.mxu0 0
      %3387 = vmatpush1.bf16.msra.mxu0 0
      %3388 = vmatprep.subr.bf16.mxu0 0
      %3389 = vmatpush1.bf16.msra.mxu0 0
      %3390 = vmatprep.subr.bf16.mxu0 0
      %3391 = vmatpush1.bf16.msra.mxu0 0
      %3392 = vmatprep.subr.bf16.mxu0 0
      %3393 = vmatpush1.bf16.msra.mxu0 0
      %3394 = vmatprep.mubr.bf16.mxu0 0
      %3395 = vmatmul.mubr.bf16.gmra.mrb[0].mxu0 %v1904
      %v3396 = vpop.f32.mrb[0].mxu0
      %v3397 = vadd.f32 %v3236, %v3396
      %v3398 = vpop.f32.mrb[0].mxu0
      %v3399 = vpop.f32.mrb[0].mxu0
      %v3400 = vadd.f32 %v3239, %v3399
      %v3401 = vpop.f32.mrb[0].mxu0
      %3402 = vmatprep.mubr.bf16.mxu0 0
      %3403 = vmatmul.mubr.bf16.gmra.mrb[0].mxu0 %v1907
      %v3404 = vpop.f32.mrb[0].mxu0
      %v3405 = vadd.f32 %v3244, %v3404
      %v3406 = vpop.f32.mrb[0].mxu0
      %v3407 = vpop.f32.mrb[0].mxu0
      %v3408 = vadd.f32 %v3247, %v3407
      %v3409 = vpop.f32.mrb[0].mxu0
      %3410 = vmatprep.mubr.bf16.mxu0 0
      %3411 = vmatmul.mubr.bf16.gmra.mrb[0].mxu0 %v1910
      %v3412 = vpop.f32.mrb[0].mxu0
      %v3413 = vadd.f32 %v3252, %v3412
      %v3414 = vpop.f32.mrb[0].mxu0
      %v3415 = vpop.f32.mrb[0].mxu0
      %v3416 = vadd.f32 %v3255, %v3415
      %v3417 = vpop.f32.mrb[0].mxu0
      %3418 = vmatprep.mubr.bf16.mxu0 0
      %3419 = vmatmul.mubr.bf16.gmra.mrb[0].mxu0 %v1913
      %v3420 = vpop.f32.mrb[0].mxu0
      %v3421 = vadd.f32 %v3260, %v3420
      %v3422 = vpop.f32.mrb[0].mxu0
      %v3423 = vpop.f32.mrb[0].mxu0
      %v3424 = vadd.f32 %v3263, %v3423
      %v3425 = vpop.f32.mrb[0].mxu0
      %3426 = vmatprep.mubr.bf16.mxu0 0
      %3427 = vmatmul.mubr.bf16.gmra.mrb[0].mxu0 %v1916
      %v3428 = vpop.f32.mrb[0].mxu0
      %v3429 = vadd.f32 %v3268, %v3428
      %v3430 = vpop.f32.mrb[0].mxu0
      %v3431 = vpop.f32.mrb[0].mxu0
      %v3432 = vadd.f32 %v3271, %v3431
      %v3433 = vpop.f32.mrb[0].mxu0
      %3434 = vmatprep.mubr.bf16.mxu0 0
      %3435 = vmatmul.mubr.bf16.gmra.mrb[0].mxu0 %v1919
      %v3436 = vpop.f32.mrb[0].mxu0
      %v3437 = vadd.f32 %v3276, %v3436
      %v3438 = vpop.f32.mrb[0].mxu0
      %v3439 = vpop.f32.mrb[0].mxu0
      %v3440 = vadd.f32 %v3279, %v3439
      %v3441 = vpop.f32.mrb[0].mxu0
      %3442 = vmatprep.mubr.bf16.mxu0 0
      %3443 = vmatmul.mubr.bf16.gmra.mrb[0].mxu0 %v1922
      %v3444 = vpop.f32.mrb[0].mxu0
      %v3445 = vadd.f32 %v3284, %v3444
      %v3446 = vpop.f32.mrb[0].mxu0
      %v3447 = vpop.f32.mrb[0].mxu0
      %v3448 = vadd.f32 %v3287, %v3447
      %v3449 = vpop.f32.mrb[0].mxu0
      %3450 = vmatprep.mubr.bf16.mxu0 0
      %3451 = vmatmul.mubr.bf16.gmra.mrb[0].mxu0 %v1925
      %v3452 = vpop.f32.mrb[0].mxu0
      %v3453 = vadd.f32 %v3292, %v3452
      %v3454 = vpop.f32.mrb[0].mxu0
      %v3455 = vpop.f32.mrb[0].mxu0
      %v3456 = vadd.f32 %v3295, %v3455
      %v3457 = vpop.f32.mrb[0].mxu0
      %3458 = vmatprep.mubr.bf16.mxu0 0
      %3459 = vmatmul.mubr.bf16.gmra.mrb[0].mxu0 %v1928
      %v3460 = vpop.f32.mrb[0].mxu0
      %v3461 = vadd.f32 %v3300, %v3460
      %v3462 = vpop.f32.mrb[0].mxu0
      %v3463 = vpop.f32.mrb[0].mxu0
      %v3464 = vadd.f32 %v3303, %v3463
      %v3465 = vpop.f32.mrb[0].mxu0
      %3466 = vmatprep.mubr.bf16.mxu0 0
      %3467 = vmatmul.mubr.bf16.gmra.mrb[0].mxu0 %v1931
      %v3468 = vpop.f32.mrb[0].mxu0
      %v3469 = vadd.f32 %v3308, %v3468
      %v3470 = vpop.f32.mrb[0].mxu0
      %v3471 = vpop.f32.mrb[0].mxu0
      %v3472 = vadd.f32 %v3311, %v3471
      %v3473 = vpop.f32.mrb[0].mxu0
      %3474 = vmatprep.mubr.bf16.mxu0 0
      %3475 = vmatmul.mubr.bf16.gmra.mrb[0].mxu0 %v1934
      %v3476 = vpop.f32.mrb[0].mxu0
      %v3477 = vadd.f32 %v3316, %v3476
      %v3478 = vpop.f32.mrb[0].mxu0
      %v3479 = vpop.f32.mrb[0].mxu0
      %v3480 = vadd.f32 %v3319, %v3479
      %v3481 = vpop.f32.mrb[0].mxu0
      %3482 = vmatprep.mubr.bf16.mxu0 0
      %3483 = vmatmul.mubr.bf16.gmra.mrb[0].mxu0 %v1937
      %v3484 = vpop.f32.mrb[0].mxu0
      %v3485 = vadd.f32 %v3324, %v3484
      %v3486 = vpop.f32.mrb[0].mxu0
      %v3487 = vpop.f32.mrb[0].mxu0
      %v3488 = vadd.f32 %v3327, %v3487
      %v3489 = vpop.f32.mrb[0].mxu0
      %3490 = vmatprep.mubr.bf16.mxu0 0
      %3491 = vmatmul.mubr.bf16.gmra.mrb[0].mxu0 %v1940
      %v3492 = vpop.f32.mrb[0].mxu0
      %v3493 = vadd.f32 %v3332, %v3492
      %v3494 = vpop.f32.mrb[0].mxu0
      %v3495 = vpop.f32.mrb[0].mxu0
      %v3496 = vadd.f32 %v3335, %v3495
      %v3497 = vpop.f32.mrb[0].mxu0
      %3498 = vmatprep.mubr.bf16.mxu0 0
      %3499 = vmatmul.mubr.bf16.gmra.mrb[0].mxu0 %v1943
      %v3500 = vpop.f32.mrb[0].mxu0
      %v3501 = vadd.f32 %v3340, %v3500
      %v3502 = vpop.f32.mrb[0].mxu0
      %v3503 = vpop.f32.mrb[0].mxu0
      %v3504 = vadd.f32 %v3343, %v3503
      %v3505 = vpop.f32.mrb[0].mxu0
      %3506 = vmatprep.mubr.bf16.mxu0 0
      %3507 = vmatmul.mubr.bf16.gmra.mrb[0].mxu0 %v1946
      %v3508 = vpop.f32.mrb[0].mxu0
      %v3509 = vadd.f32 %v3348, %v3508
      %v3510 = vpop.f32.mrb[0].mxu0
      %v3511 = vpop.f32.mrb[0].mxu0
      %v3512 = vadd.f32 %v3351, %v3511
      %v3513 = vpop.f32.mrb[0].mxu0
      %3514 = vmatprep.mubr.bf16.mxu0 0
      %3515 = vmatmul.mubr.bf16.gmra.mrb[0].mxu0 %v1949
      %v3516 = vpop.f32.mrb[0].mxu0
      %v3517 = vadd.f32 %v3356, %v3516
      %v3518 = vpop.f32.mrb[0].mxu0
      %v3519 = vpop.f32.mrb[0].mxu0
      %v3520 = vadd.f32 %v3359, %v3519
      %v3521 = vpop.f32.mrb[0].mxu0
      %3522 = vdwg.mxu0
      %s3523 = scalar_lea.vmem [#allocation2], 24
      %v3524 = vld [vmem:[%s3523] sm:$0xf]
      %v3525 = vld [vmem:[%s3523 + $0x4] sm:$0xf]
      %v3526 = vld [vmem:[%s3523 + $0xc] sm:$0xf]
      %v3527 = vld [vmem:[%s3523 + $0x10] sm:$0xf]
      %v3528 = vld [vmem:[%s3523 + $0x18] sm:$0xf]
      %v3529 = vld [vmem:[%s3523 + $0x1c] sm:$0xf]
      %v3530 = vld [vmem:[%s3523 + $0x24] sm:$0xf]
      %v3531 = vld [vmem:[%s3523 + $0x28] sm:$0xf]
      %v3532 = vld [vmem:[%s3523 + $0x30] sm:$0xf]
      %v3533 = vld [vmem:[%s3523 + $0x34] sm:$0xf]
      %v3534 = vld [vmem:[%s3523 + $0x3c] sm:$0xf]
      %v3535 = vld [vmem:[%s3523 + $0x40] sm:$0xf]
      %v3536 = vld [vmem:[%s3523 + $0x48] sm:$0xf]
      %v3537 = vld [vmem:[%s3523 + $0x4c] sm:$0xf]
      %v3538 = vld [vmem:[%s3523 + $0x54] sm:$0xf]
      %v3539 = vld [vmem:[%s3523 + $0x58] sm:$0xf]
      %v3540 = vld [vmem:[%s3523 + $0x60] sm:$0xf]
      %v3541 = vld [vmem:[%s3523 + $0x64] sm:$0xf]
      %v3542 = vld [vmem:[%s3523 + $0x6c] sm:$0xf]
      %v3543 = vld [vmem:[%s3523 + $0x70] sm:$0xf]
      %v3544 = vld [vmem:[%s3523 + $0x78] sm:$0xf]
      %v3545 = vld [vmem:[%s3523 + $0x7c] sm:$0xf]
      %v3546 = vld [vmem:[%s3523 + $0x84] sm:$0xf]
      %v3547 = vld [vmem:[%s3523 + $0x88] sm:$0xf]
      %v3548 = vld [vmem:[%s3523 + $0x90] sm:$0xf]
      %v3549 = vld [vmem:[%s3523 + $0x94] sm:$0xf]
      %v3550 = vld [vmem:[%s3523 + $0x9c] sm:$0xf]
      %v3551 = vld [vmem:[%s3523 + $0xa0] sm:$0xf]
      %v3552 = vld [vmem:[%s3523 + $0xa8] sm:$0xf]
      %v3553 = vld [vmem:[%s3523 + $0xac] sm:$0xf]
      %v3554 = vld [vmem:[%s3523 + $0xb4] sm:$0xf]
      %v3555 = vld [vmem:[%s3523 + $0xb8] sm:$0xf]
      %v3556 = vld [vmem:[%s3523 + $0x8] sm:$0x1]
      %v3557 = vld [vmem:[%s3523 + $0x14] sm:$0x1]
      %v3558 = vld [vmem:[%s3523 + $0x20] sm:$0x1]
      %v3559 = vld [vmem:[%s3523 + $0x2c] sm:$0x1]
      %v3560 = vld [vmem:[%s3523 + $0x38] sm:$0x1]
      %v3561 = vld [vmem:[%s3523 + $0x44] sm:$0x1]
      %v3562 = vld [vmem:[%s3523 + $0x50] sm:$0x1]
      %v3563 = vld [vmem:[%s3523 + $0x5c] sm:$0x1]
      %v3564 = vld [vmem:[%s3523 + $0x68] sm:$0x1]
      %v3565 = vld [vmem:[%s3523 + $0x74] sm:$0x1]
      %v3566 = vld [vmem:[%s3523 + $0x80] sm:$0x1]
      %v3567 = vld [vmem:[%s3523 + $0x8c] sm:$0x1]
      %v3568 = vld [vmem:[%s3523 + $0x98] sm:$0x1]
      %v3569 = vld [vmem:[%s3523 + $0xa4] sm:$0x1]
      %v3570 = vld [vmem:[%s3523 + $0xb0] sm:$0x1]
      %v3571 = vld [vmem:[%s3523 + $0xbc] sm:$0x1]
      %v3572 = vld [vmem:[%s3523] sm:$0xe]
      %v3573 = vld [vmem:[%s3523 + $0xc] sm:$0xe]
      %v3574 = vld [vmem:[%s3523 + $0x18] sm:$0xe]
      %v3575 = vld [vmem:[%s3523 + $0x24] sm:$0xe]
      %v3576 = vld [vmem:[%s3523 + $0x30] sm:$0xe]
      %v3577 = vld [vmem:[%s3523 + $0x3c] sm:$0xe]
      %v3578 = vld [vmem:[%s3523 + $0x48] sm:$0xe]
      %v3579 = vld [vmem:[%s3523 + $0x54] sm:$0xe]
      %v3580 = vld [vmem:[%s3523 + $0x60] sm:$0xe]
      %v3581 = vld [vmem:[%s3523 + $0x6c] sm:$0xe]
      %v3582 = vld [vmem:[%s3523 + $0x78] sm:$0xe]
      %v3583 = vld [vmem:[%s3523 + $0x84] sm:$0xe]
      %v3584 = vld [vmem:[%s3523 + $0x90] sm:$0xe]
      %v3585 = vld [vmem:[%s3523 + $0x9c] sm:$0xe]
      %v3586 = vld [vmem:[%s3523 + $0xa8] sm:$0xe]
      %v3587 = vld [vmem:[%s3523 + $0xb4] sm:$0xe]
      %v3620 = vunpack.c.l.b16 %v3524
      %v3621 = vunpack.c.l.b16 %v3525
      %v3622 = vunpack.c.l.b16 %v3526
      %v3623 = vunpack.c.l.b16 %v3527
      %v3624 = vunpack.c.l.b16 %v3528
      %v3625 = vunpack.c.l.b16 %v3529
      %v3626 = vunpack.c.l.b16 %v3530
      %v3627 = vunpack.c.l.b16 %v3531
      %v3628 = vunpack.c.l.b16 %v3532
      %v3629 = vunpack.c.l.b16 %v3533
      %v3630 = vunpack.c.l.b16 %v3534
      %v3631 = vunpack.c.l.b16 %v3535
      %v3632 = vunpack.c.l.b16 %v3536
      %v3633 = vunpack.c.l.b16 %v3537
      %v3634 = vunpack.c.l.b16 %v3538
      %v3635 = vunpack.c.l.b16 %v3539
      %v3636 = vunpack.c.l.b16 %v3540
      %v3637 = vunpack.c.l.b16 %v3541
      %v3638 = vunpack.c.l.b16 %v3542
      %v3639 = vunpack.c.l.b16 %v3543
      %v3640 = vunpack.c.l.b16 %v3544
      %v3641 = vunpack.c.l.b16 %v3545
      %v3642 = vunpack.c.l.b16 %v3546
      %v3643 = vunpack.c.l.b16 %v3547
      %v3644 = vunpack.c.l.b16 %v3548
      %v3645 = vunpack.c.l.b16 %v3549
      %v3646 = vunpack.c.l.b16 %v3550
      %v3647 = vunpack.c.l.b16 %v3551
      %v3648 = vunpack.c.l.b16 %v3552
      %v3649 = vunpack.c.l.b16 %v3553
      %v3650 = vunpack.c.l.b16 %v3554
      %v3651 = vunpack.c.l.b16 %v3555
      %v3652 = vpack.c.b16 %v3621, %v3620
      %v3653 = vpack.c.b16 %v3623, %v3622
      %v3654 = vpack.c.b16 %v3625, %v3624
      %v3655 = vpack.c.b16 %v3627, %v3626
      %v3656 = vpack.c.b16 %v3629, %v3628
      %v3657 = vpack.c.b16 %v3631, %v3630
      %v3658 = vpack.c.b16 %v3633, %v3632
      %v3659 = vpack.c.b16 %v3635, %v3634
      %v3660 = vpack.c.b16 %v3637, %v3636
      %v3661 = vpack.c.b16 %v3639, %v3638
      %v3662 = vpack.c.b16 %v3641, %v3640
      %v3663 = vpack.c.b16 %v3643, %v3642
      %v3664 = vpack.c.b16 %v3645, %v3644
      %v3665 = vpack.c.b16 %v3647, %v3646
      %v3666 = vpack.c.b16 %v3649, %v3648
      %v3667 = vpack.c.b16 %v3651, %v3650
      %v3700 = vunpack.c.l.b16 %v3556
      %v3701 = vunpack.c.l.b16 %v3557
      %v3702 = vunpack.c.l.b16 %v3558
      %v3703 = vunpack.c.l.b16 %v3559
      %v3704 = vunpack.c.l.b16 %v3560
      %v3705 = vunpack.c.l.b16 %v3561
      %v3706 = vunpack.c.l.b16 %v3562
      %v3707 = vunpack.c.l.b16 %v3563
      %v3708 = vunpack.c.l.b16 %v3564
      %v3709 = vunpack.c.l.b16 %v3565
      %v3710 = vunpack.c.l.b16 %v3566
      %v3711 = vunpack.c.l.b16 %v3567
      %v3712 = vunpack.c.l.b16 %v3568
      %v3713 = vunpack.c.l.b16 %v3569
      %v3714 = vunpack.c.l.b16 %v3570
      %v3715 = vunpack.c.l.b16 %v3571
      %v3716 = vpack.c.b16 %v3700, %v3700
      %v3717 = vpack.c.b16 %v3701, %v3701
      %v3718 = vpack.c.b16 %v3702, %v3702
      %v3719 = vpack.c.b16 %v3703, %v3703
      %v3720 = vpack.c.b16 %v3704, %v3704
      %v3721 = vpack.c.b16 %v3705, %v3705
      %v3722 = vpack.c.b16 %v3706, %v3706
      %v3723 = vpack.c.b16 %v3707, %v3707
      %v3724 = vpack.c.b16 %v3708, %v3708
      %v3725 = vpack.c.b16 %v3709, %v3709
      %v3726 = vpack.c.b16 %v3710, %v3710
      %v3727 = vpack.c.b16 %v3711, %v3711
      %v3728 = vpack.c.b16 %v3712, %v3712
      %v3729 = vpack.c.b16 %v3713, %v3713
      %v3730 = vpack.c.b16 %v3714, %v3714
      %v3731 = vpack.c.b16 %v3715, %v3715
      %v3733 = vshrl.u32 %v3652, 16
      %v3735 = vshll.u32 %v3652, 16
      %v3737 = vrot.slane %v3735, 1
      %v3738 = vor.u32 %v3733, %v3737
      %v3740 = vshll.u32 %v3716, 16
      %v3742 = vrot.slane %v3740, 1
      %v3743 = vsel %vm1644, %v3738, %v3742
      %v3745 = vshrl.u32 %v3653, 16
      %v3747 = vshll.u32 %v3653, 16
      %v3749 = vrot.slane %v3747, 1
      %v3750 = vor.u32 %v3745, %v3749
      %v3752 = vshll.u32 %v3717, 16
      %v3754 = vrot.slane %v3752, 1
      %v3755 = vsel %vm1644, %v3750, %v3754
      %v3757 = vshrl.u32 %v3654, 16
      %v3759 = vshll.u32 %v3654, 16
      %v3761 = vrot.slane %v3759, 1
      %v3762 = vor.u32 %v3757, %v3761
      %v3764 = vshll.u32 %v3718, 16
      %v3766 = vrot.slane %v3764, 1
      %v3767 = vsel %vm1644, %v3762, %v3766
      %v3769 = vshrl.u32 %v3655, 16
      %v3771 = vshll.u32 %v3655, 16
      %v3773 = vrot.slane %v3771, 1
      %v3774 = vor.u32 %v3769, %v3773
      %v3776 = vshll.u32 %v3719, 16
      %v3778 = vrot.slane %v3776, 1
      %v3779 = vsel %vm1644, %v3774, %v3778
      %v3781 = vshrl.u32 %v3656, 16
      %v3783 = vshll.u32 %v3656, 16
      %v3785 = vrot.slane %v3783, 1
      %v3786 = vor.u32 %v3781, %v3785
      %v3788 = vshll.u32 %v3720, 16
      %v3790 = vrot.slane %v3788, 1
      %v3791 = vsel %vm1644, %v3786, %v3790
      %v3793 = vshrl.u32 %v3657, 16
      %v3795 = vshll.u32 %v3657, 16
      %v3797 = vrot.slane %v3795, 1
      %v3798 = vor.u32 %v3793, %v3797
      %v3800 = vshll.u32 %v3721, 16
      %v3802 = vrot.slane %v3800, 1
      %v3803 = vsel %vm1644, %v3798, %v3802
      %v3805 = vshrl.u32 %v3658, 16
      %v3807 = vshll.u32 %v3658, 16
      %v3809 = vrot.slane %v3807, 1
      %v3810 = vor.u32 %v3805, %v3809
      %v3812 = vshll.u32 %v3722, 16
      %v3814 = vrot.slane %v3812, 1
      %v3815 = vsel %vm1644, %v3810, %v3814
      %v3817 = vshrl.u32 %v3659, 16
      %v3819 = vshll.u32 %v3659, 16
      %v3821 = vrot.slane %v3819, 1
      %v3822 = vor.u32 %v3817, %v3821
      %v3824 = vshll.u32 %v3723, 16
      %v3826 = vrot.slane %v3824, 1
      %v3827 = vsel %vm1644, %v3822, %v3826
      %v3829 = vshrl.u32 %v3660, 16
      %v3831 = vshll.u32 %v3660, 16
      %v3833 = vrot.slane %v3831, 1
      %v3834 = vor.u32 %v3829, %v3833
      %v3836 = vshll.u32 %v3724, 16
      %v3838 = vrot.slane %v3836, 1
      %v3839 = vsel %vm1644, %v3834, %v3838
      %v3841 = vshrl.u32 %v3661, 16
      %v3843 = vshll.u32 %v3661, 16
      %v3845 = vrot.slane %v3843, 1
      %v3846 = vor.u32 %v3841, %v3845
      %v3848 = vshll.u32 %v3725, 16
      %v3850 = vrot.slane %v3848, 1
      %v3851 = vsel %vm1644, %v3846, %v3850
      %v3853 = vshrl.u32 %v3662, 16
      %v3855 = vshll.u32 %v3662, 16
      %v3857 = vrot.slane %v3855, 1
      %v3858 = vor.u32 %v3853, %v3857
      %v3860 = vshll.u32 %v3726, 16
      %v3862 = vrot.slane %v3860, 1
      %v3863 = vsel %vm1644, %v3858, %v3862
      %v3865 = vshrl.u32 %v3663, 16
      %v3867 = vshll.u32 %v3663, 16
      %v3869 = vrot.slane %v3867, 1
      %v3870 = vor.u32 %v3865, %v3869
      %v3872 = vshll.u32 %v3727, 16
      %v3874 = vrot.slane %v3872, 1
      %v3875 = vsel %vm1644, %v3870, %v3874
      %v3877 = vshrl.u32 %v3664, 16
      %v3879 = vshll.u32 %v3664, 16
      %v3881 = vrot.slane %v3879, 1
      %v3882 = vor.u32 %v3877, %v3881
      %v3884 = vshll.u32 %v3728, 16
      %v3886 = vrot.slane %v3884, 1
      %v3887 = vsel %vm1644, %v3882, %v3886
      %v3889 = vshrl.u32 %v3665, 16
      %v3891 = vshll.u32 %v3665, 16
      %v3893 = vrot.slane %v3891, 1
      %v3894 = vor.u32 %v3889, %v3893
      %v3896 = vshll.u32 %v3729, 16
      %v3898 = vrot.slane %v3896, 1
      %v3899 = vsel %vm1644, %v3894, %v3898
      %v3901 = vshrl.u32 %v3666, 16
      %v3903 = vshll.u32 %v3666, 16
      %v3905 = vrot.slane %v3903, 1
      %v3906 = vor.u32 %v3901, %v3905
      %v3908 = vshll.u32 %v3730, 16
      %v3910 = vrot.slane %v3908, 1
      %v3911 = vsel %vm1644, %v3906, %v3910
      %v3913 = vshrl.u32 %v3667, 16
      %v3915 = vshll.u32 %v3667, 16
      %v3917 = vrot.slane %v3915, 1
      %v3918 = vor.u32 %v3913, %v3917
      %v3920 = vshll.u32 %v3731, 16
      %v3922 = vrot.slane %v3920, 1
      %v3923 = vsel %vm1644, %v3918, %v3922
      %v3956 = vunpack.c.l.b16 %v3572
      %v3957 = vunpack.c.l.b16 %v3573
      %v3958 = vunpack.c.l.b16 %v3574
      %v3959 = vunpack.c.l.b16 %v3575
      %v3960 = vunpack.c.l.b16 %v3576
      %v3961 = vunpack.c.l.b16 %v3577
      %v3962 = vunpack.c.l.b16 %v3578
      %v3963 = vunpack.c.l.b16 %v3579
      %v3964 = vunpack.c.l.b16 %v3580
      %v3965 = vunpack.c.l.b16 %v3581
      %v3966 = vunpack.c.l.b16 %v3582
      %v3967 = vunpack.c.l.b16 %v3583
      %v3968 = vunpack.c.l.b16 %v3584
      %v3969 = vunpack.c.l.b16 %v3585
      %v3970 = vunpack.c.l.b16 %v3586
      %v3971 = vunpack.c.l.b16 %v3587
      %v3972 = vpack.c.b16 %v3621, %v3956
      %v3973 = vpack.c.b16 %v3623, %v3957
      %v3974 = vpack.c.b16 %v3625, %v3958
      %v3975 = vpack.c.b16 %v3627, %v3959
      %v3976 = vpack.c.b16 %v3629, %v3960
      %v3977 = vpack.c.b16 %v3631, %v3961
      %v3978 = vpack.c.b16 %v3633, %v3962
      %v3979 = vpack.c.b16 %v3635, %v3963
      %v3980 = vpack.c.b16 %v3637, %v3964
      %v3981 = vpack.c.b16 %v3639, %v3965
      %v3982 = vpack.c.b16 %v3641, %v3966
      %v3983 = vpack.c.b16 %v3643, %v3967
      %v3984 = vpack.c.b16 %v3645, %v3968
      %v3985 = vpack.c.b16 %v3647, %v3969
      %v3986 = vpack.c.b16 %v3649, %v3970
      %v3987 = vpack.c.b16 %v3651, %v3971
      %v3988 = vrot.slane %v3972, 1
      %v3989 = vrot.slane %v3716, 1
      %v3990 = vsel %vm1901, %v3988, %v3989
      %v3991 = vrot.slane %v3973, 1
      %v3992 = vrot.slane %v3717, 1
      %v3993 = vsel %vm1901, %v3991, %v3992
      %v3994 = vrot.slane %v3974, 1
      %v3995 = vrot.slane %v3718, 1
      %v3996 = vsel %vm1901, %v3994, %v3995
      %v3997 = vrot.slane %v3975, 1
      %v3998 = vrot.slane %v3719, 1
      %v3999 = vsel %vm1901, %v3997, %v3998
      %v4000 = vrot.slane %v3976, 1
      %v4001 = vrot.slane %v3720, 1
      %v4002 = vsel %vm1901, %v4000, %v4001
      %v4003 = vrot.slane %v3977, 1
      %v4004 = vrot.slane %v3721, 1
      %v4005 = vsel %vm1901, %v4003, %v4004
      %v4006 = vrot.slane %v3978, 1
      %v4007 = vrot.slane %v3722, 1
      %v4008 = vsel %vm1901, %v4006, %v4007
      %v4009 = vrot.slane %v3979, 1
      %v4010 = vrot.slane %v3723, 1
      %v4011 = vsel %vm1901, %v4009, %v4010
      %v4012 = vrot.slane %v3980, 1
      %v4013 = vrot.slane %v3724, 1
      %v4014 = vsel %vm1901, %v4012, %v4013
      %v4015 = vrot.slane %v3981, 1
      %v4016 = vrot.slane %v3725, 1
      %v4017 = vsel %vm1901, %v4015, %v4016
      %v4018 = vrot.slane %v3982, 1
      %v4019 = vrot.slane %v3726, 1
      %v4020 = vsel %vm1901, %v4018, %v4019
      %v4021 = vrot.slane %v3983, 1
      %v4022 = vrot.slane %v3727, 1
      %v4023 = vsel %vm1901, %v4021, %v4022
      %v4024 = vrot.slane %v3984, 1
      %v4025 = vrot.slane %v3728, 1
      %v4026 = vsel %vm1901, %v4024, %v4025
      %v4027 = vrot.slane %v3985, 1
      %v4028 = vrot.slane %v3729, 1
      %v4029 = vsel %vm1901, %v4027, %v4028
      %v4030 = vrot.slane %v3986, 1
      %v4031 = vrot.slane %v3730, 1
      %v4032 = vsel %vm1901, %v4030, %v4031
      %v4033 = vrot.slane %v3987, 1
      %v4034 = vrot.slane %v3731, 1
      %v4035 = vsel %vm1901, %v4033, %v4034
      %s4052 = scalar_lea.vmem %s2, 384
      %v4053 = vld [vmem:[%s4052] sm:$0xf]
      %v4054 = vld [vmem:[%s4052 + $0x4] sm:$0xf]
      %v4055 = vld [vmem:[%s4052 + $0x8] sm:$0xf]
      %v4056 = vld [vmem:[%s4052 + $0xc] sm:$0xf]
      %v4057 = vld [vmem:[%s4052 + $0x10] sm:$0xf]
      %v4058 = vld [vmem:[%s4052 + $0x14] sm:$0xf]
      %v4059 = vld [vmem:[%s4052 + $0x18] sm:$0xf]
      %v4060 = vld [vmem:[%s4052 + $0x1c] sm:$0xf]
      %v4061 = vld [vmem:[%s4052 + $0x20] sm:$0xf]
      %v4062 = vld [vmem:[%s4052 + $0x24] sm:$0xf]
      %v4063 = vld [vmem:[%s4052 + $0x28] sm:$0xf]
      %v4064 = vld [vmem:[%s4052 + $0x2c] sm:$0xf]
      %v4065 = vld [vmem:[%s4052 + $0x30] sm:$0xf]
      %v4066 = vld [vmem:[%s4052 + $0x34] sm:$0xf]
      %v4067 = vld [vmem:[%s4052 + $0x38] sm:$0xf]
      %v4068 = vld [vmem:[%s4052 + $0x3c] sm:$0xf]
      %v4069 = vld [vmem:[%s4052 + $0x40] sm:$0xf]
      %v4070 = vld [vmem:[%s4052 + $0x44] sm:$0xf]
      %v4071 = vld [vmem:[%s4052 + $0x48] sm:$0xf]
      %v4072 = vld [vmem:[%s4052 + $0x4c] sm:$0xf]
      %v4073 = vld [vmem:[%s4052 + $0x50] sm:$0xf]
      %v4074 = vld [vmem:[%s4052 + $0x54] sm:$0xf]
      %v4075 = vld [vmem:[%s4052 + $0x58] sm:$0xf]
      %v4076 = vld [vmem:[%s4052 + $0x5c] sm:$0xf]
      %v4077 = vld [vmem:[%s4052 + $0x60] sm:$0xf]
      %v4078 = vld [vmem:[%s4052 + $0x64] sm:$0xf]
      %v4079 = vld [vmem:[%s4052 + $0x68] sm:$0xf]
      %v4080 = vld [vmem:[%s4052 + $0x6c] sm:$0xf]
      %v4081 = vld [vmem:[%s4052 + $0x70] sm:$0xf]
      %v4082 = vld [vmem:[%s4052 + $0x74] sm:$0xf]
      %v4083 = vld [vmem:[%s4052 + $0x78] sm:$0xf]
      %v4084 = vld [vmem:[%s4052 + $0x7c] sm:$0xf]
      %v4085 = vld [vmem:[%s4052 + $0x80] sm:$0xf]
      %v4086 = vld [vmem:[%s4052 + $0x84] sm:$0xf]
      %v4087 = vld [vmem:[%s4052 + $0x88] sm:$0xf]
      %v4088 = vld [vmem:[%s4052 + $0x8c] sm:$0xf]
      %v4089 = vld [vmem:[%s4052 + $0x90] sm:$0xf]
      %v4090 = vld [vmem:[%s4052 + $0x94] sm:$0xf]
      %v4091 = vld [vmem:[%s4052 + $0x98] sm:$0xf]
      %v4092 = vld [vmem:[%s4052 + $0x9c] sm:$0xf]
      %v4093 = vld [vmem:[%s4052 + $0xa0] sm:$0xf]
      %v4094 = vld [vmem:[%s4052 + $0xa4] sm:$0xf]
      %v4095 = vld [vmem:[%s4052 + $0xa8] sm:$0xf]
      %v4096 = vld [vmem:[%s4052 + $0xac] sm:$0xf]
      %v4097 = vld [vmem:[%s4052 + $0xb0] sm:$0xf]
      %v4098 = vld [vmem:[%s4052 + $0xb4] sm:$0xf]
      %v4099 = vld [vmem:[%s4052 + $0xb8] sm:$0xf]
      %v4100 = vld [vmem:[%s4052 + $0xbc] sm:$0xf]
      %v4149 = vunpack.c.l.b16 %v4053
      %v4150 = vunpack.c.l.b16 %v4054
      %v4151 = vunpack.c.l.b16 %v4055
      %v4152 = vunpack.c.l.b16 %v4056
      %v4153 = vunpack.c.l.b16 %v4057
      %v4154 = vunpack.c.l.b16 %v4058
      %v4155 = vunpack.c.l.b16 %v4059
      %v4156 = vunpack.c.l.b16 %v4060
      %v4157 = vunpack.c.l.b16 %v4061
      %v4158 = vunpack.c.l.b16 %v4062
      %v4159 = vunpack.c.l.b16 %v4063
      %v4160 = vunpack.c.l.b16 %v4064
      %v4161 = vunpack.c.l.b16 %v4065
      %v4162 = vunpack.c.l.b16 %v4066
      %v4163 = vunpack.c.l.b16 %v4067
      %v4164 = vunpack.c.l.b16 %v4068
      %v4165 = vunpack.c.l.b16 %v4069
      %v4166 = vunpack.c.l.b16 %v4070
      %v4167 = vunpack.c.l.b16 %v4071
      %v4168 = vunpack.c.l.b16 %v4072
      %v4169 = vunpack.c.l.b16 %v4073
      %v4170 = vunpack.c.l.b16 %v4074
      %v4171 = vunpack.c.l.b16 %v4075
      %v4172 = vunpack.c.l.b16 %v4076
      %v4173 = vunpack.c.l.b16 %v4077
      %v4174 = vunpack.c.l.b16 %v4078
      %v4175 = vunpack.c.l.b16 %v4079
      %v4176 = vunpack.c.l.b16 %v4080
      %v4177 = vunpack.c.l.b16 %v4081
      %v4178 = vunpack.c.l.b16 %v4082
      %v4179 = vunpack.c.l.b16 %v4083
      %v4180 = vunpack.c.l.b16 %v4084
      %v4181 = vunpack.c.l.b16 %v4085
      %v4182 = vunpack.c.l.b16 %v4086
      %v4183 = vunpack.c.l.b16 %v4087
      %v4184 = vunpack.c.l.b16 %v4088
      %v4185 = vunpack.c.l.b16 %v4089
      %v4186 = vunpack.c.l.b16 %v4090
      %v4187 = vunpack.c.l.b16 %v4091
      %v4188 = vunpack.c.l.b16 %v4092
      %v4189 = vunpack.c.l.b16 %v4093
      %v4190 = vunpack.c.l.b16 %v4094
      %v4191 = vunpack.c.l.b16 %v4095
      %v4192 = vunpack.c.l.b16 %v4096
      %v4193 = vunpack.c.l.b16 %v4097
      %v4194 = vunpack.c.l.b16 %v4098
      %v4195 = vunpack.c.l.b16 %v4099
      %v4196 = vunpack.c.l.b16 %v4100
      %v4197 = vpack.c.b16 %v4150, %v4149
      %v4198 = vpack.c.b16 %v4152, %v4151
      %v4199 = vpack.c.b16 %v4154, %v4153
      %v4200 = vpack.c.b16 %v4156, %v4155
      %v4201 = vpack.c.b16 %v4158, %v4157
      %v4202 = vpack.c.b16 %v4160, %v4159
      %v4203 = vpack.c.b16 %v4162, %v4161
      %v4204 = vpack.c.b16 %v4164, %v4163
      %v4205 = vpack.c.b16 %v4166, %v4165
      %v4206 = vpack.c.b16 %v4168, %v4167
      %v4207 = vpack.c.b16 %v4170, %v4169
      %v4208 = vpack.c.b16 %v4172, %v4171
      %v4209 = vpack.c.b16 %v4174, %v4173
      %v4210 = vpack.c.b16 %v4176, %v4175
      %v4211 = vpack.c.b16 %v4178, %v4177
      %v4212 = vpack.c.b16 %v4180, %v4179
      %v4213 = vpack.c.b16 %v4182, %v4181
      %v4214 = vpack.c.b16 %v4184, %v4183
      %v4215 = vpack.c.b16 %v4186, %v4185
      %v4216 = vpack.c.b16 %v4188, %v4187
      %v4217 = vpack.c.b16 %v4190, %v4189
      %v4218 = vpack.c.b16 %v4192, %v4191
      %v4219 = vpack.c.b16 %v4194, %v4193
      %v4220 = vpack.c.b16 %v4196, %v4195
      %4245 = vmatprep.subr.bf16.mxu0 0
      %4246 = vmatpush1.bf16.msra.mxu0 %v4197
      %4247 = vmatprep.subr.bf16.mxu0 0
      %4248 = vmatpush1.bf16.msra.mxu0 %v4198
      %4249 = vmatprep.subr.bf16.mxu0 0
      %4250 = vmatpush1.bf16.msra.mxu0 %v4199
      %4251 = vmatprep.subr.bf16.mxu0 0
      %4252 = vmatpush1.bf16.msra.mxu0 %v4200
      %4253 = vmatprep.subr.bf16.mxu0 0
      %4254 = vmatpush1.bf16.msra.mxu0 %v4201
      %4255 = vmatprep.subr.bf16.mxu0 0
      %4256 = vmatpush1.bf16.msra.mxu0 %v4202
      %4257 = vmatprep.subr.bf16.mxu0 0
      %4258 = vmatpush1.bf16.msra.mxu0 %v4203
      %4259 = vmatprep.subr.bf16.mxu0 0
      %4260 = vmatpush1.bf16.msra.mxu0 %v4204
      %4261 = vmatprep.subr.bf16.mxu0 0
      %4262 = vmatpush1.bf16.msra.mxu0 %v4205
      %4263 = vmatprep.subr.bf16.mxu0 0
      %4264 = vmatpush1.bf16.msra.mxu0 %v4206
      %4265 = vmatprep.subr.bf16.mxu0 0
      %4266 = vmatpush1.bf16.msra.mxu0 %v4207
      %4267 = vmatprep.subr.bf16.mxu0 0
      %4268 = vmatpush1.bf16.msra.mxu0 %v4208
      %4269 = vmatprep.subr.bf16.mxu0 0
      %4270 = vmatpush1.bf16.msra.mxu0 %v4209
      %4271 = vmatprep.subr.bf16.mxu0 0
      %4272 = vmatpush1.bf16.msra.mxu0 %v4210
      %4273 = vmatprep.subr.bf16.mxu0 0
      %4274 = vmatpush1.bf16.msra.mxu0 %v4211
      %4275 = vmatprep.subr.bf16.mxu0 0
      %4276 = vmatpush1.bf16.msra.mxu0 %v4212
      %4277 = vmatprep.mubr.bf16.mxu0 %v3743
      %4278 = vmatmul.mubr.bf16.gmra.mrb[0].mxu0 %v3652
      %v4279 = vpop.f32.mrb[0].mxu0
      %v4280 = vadd.f32 0.0, %v4279
      %v4281 = vpop.f32.mrb[0].mxu0
      %v4282 = vpop.f32.mrb[0].mxu0
      %v4283 = vadd.f32 0.0, %v4282
      %v4284 = vpop.f32.mrb[0].mxu0
      %4285 = vmatprep.mubr.bf16.mxu0 %v3755
      %4286 = vmatmul.mubr.bf16.gmra.mrb[0].mxu0 %v3653
      %v4287 = vpop.f32.mrb[0].mxu0
      %v4288 = vadd.f32 0.0, %v4287
      %v4289 = vpop.f32.mrb[0].mxu0
      %v4290 = vpop.f32.mrb[0].mxu0
      %v4291 = vadd.f32 0.0, %v4290
      %v4292 = vpop.f32.mrb[0].mxu0
      %4293 = vmatprep.mubr.bf16.mxu0 %v3767
      %4294 = vmatmul.mubr.bf16.gmra.mrb[0].mxu0 %v3654
      %v4295 = vpop.f32.mrb[0].mxu0
      %v4296 = vadd.f32 0.0, %v4295
      %v4297 = vpop.f32.mrb[0].mxu0
      %v4298 = vpop.f32.mrb[0].mxu0
      %v4299 = vadd.f32 0.0, %v4298
      %v4300 = vpop.f32.mrb[0].mxu0
      %4301 = vmatprep.mubr.bf16.mxu0 %v3779
      %4302 = vmatmul.mubr.bf16.gmra.mrb[0].mxu0 %v3655
      %v4303 = vpop.f32.mrb[0].mxu0
      %v4304 = vadd.f32 0.0, %v4303
      %v4305 = vpop.f32.mrb[0].mxu0
      %v4306 = vpop.f32.mrb[0].mxu0
      %v4307 = vadd.f32 0.0, %v4306
      %v4308 = vpop.f32.mrb[0].mxu0
      %4309 = vmatprep.mubr.bf16.mxu0 %v3791
      %4310 = vmatmul.mubr.bf16.gmra.mrb[0].mxu0 %v3656
      %v4311 = vpop.f32.mrb[0].mxu0
      %v4312 = vadd.f32 0.0, %v4311
      %v4313 = vpop.f32.mrb[0].mxu0
      %v4314 = vpop.f32.mrb[0].mxu0
      %v4315 = vadd.f32 0.0, %v4314
      %v4316 = vpop.f32.mrb[0].mxu0
      %4317 = vmatprep.mubr.bf16.mxu0 %v3803
      %4318 = vmatmul.mubr.bf16.gmra.mrb[0].mxu0 %v3657
      %v4319 = vpop.f32.mrb[0].mxu0
      %v4320 = vadd.f32 0.0, %v4319
      %v4321 = vpop.f32.mrb[0].mxu0
      %v4322 = vpop.f32.mrb[0].mxu0
      %v4323 = vadd.f32 0.0, %v4322
      %v4324 = vpop.f32.mrb[0].mxu0
      %4325 = vmatprep.mubr.bf16.mxu0 %v3815
      %4326 = vmatmul.mubr.bf16.gmra.mrb[0].mxu0 %v3658
      %v4327 = vpop.f32.mrb[0].mxu0
      %v4328 = vadd.f32 0.0, %v4327
      %v4329 = vpop.f32.mrb[0].mxu0
      %v4330 = vpop.f32.mrb[0].mxu0
      %v4331 = vadd.f32 0.0, %v4330
      %v4332 = vpop.f32.mrb[0].mxu0
      %4333 = vmatprep.mubr.bf16.mxu0 %v3827
      %4334 = vmatmul.mubr.bf16.gmra.mrb[0].mxu0 %v3659
      %v4335 = vpop.f32.mrb[0].mxu0
      %v4336 = vadd.f32 0.0, %v4335
      %v4337 = vpop.f32.mrb[0].mxu0
      %v4338 = vpop.f32.mrb[0].mxu0
      %v4339 = vadd.f32 0.0, %v4338
      %v4340 = vpop.f32.mrb[0].mxu0
      %4341 = vmatprep.mubr.bf16.mxu0 %v3839
      %4342 = vmatmul.mubr.bf16.gmra.mrb[0].mxu0 %v3660
      %v4343 = vpop.f32.mrb[0].mxu0
      %v4344 = vadd.f32 0.0, %v4343
      %v4345 = vpop.f32.mrb[0].mxu0
      %v4346 = vpop.f32.mrb[0].mxu0
      %v4347 = vadd.f32 0.0, %v4346
      %v4348 = vpop.f32.mrb[0].mxu0
      %4349 = vmatprep.mubr.bf16.mxu0 %v3851
      %4350 = vmatmul.mubr.bf16.gmra.mrb[0].mxu0 %v3661
      %v4351 = vpop.f32.mrb[0].mxu0
      %v4352 = vadd.f32 0.0, %v4351
      %v4353 = vpop.f32.mrb[0].mxu0
      %v4354 = vpop.f32.mrb[0].mxu0
      %v4355 = vadd.f32 0.0, %v4354
      %v4356 = vpop.f32.mrb[0].mxu0
      %4357 = vmatprep.mubr.bf16.mxu0 %v3863
      %4358 = vmatmul.mubr.bf16.gmra.mrb[0].mxu0 %v3662
      %v4359 = vpop.f32.mrb[0].mxu0
      %v4360 = vadd.f32 0.0, %v4359
      %v4361 = vpop.f32.mrb[0].mxu0
      %v4362 = vpop.f32.mrb[0].mxu0
      %v4363 = vadd.f32 0.0, %v4362
      %v4364 = vpop.f32.mrb[0].mxu0
      %4365 = vmatprep.mubr.bf16.mxu0 %v3875
      %4366 = vmatmul.mubr.bf16.gmra.mrb[0].mxu0 %v3663
      %v4367 = vpop.f32.mrb[0].mxu0
      %v4368 = vadd.f32 0.0, %v4367
      %v4369 = vpop.f32.mrb[0].mxu0
      %v4370 = vpop.f32.mrb[0].mxu0
      %v4371 = vadd.f32 0.0, %v4370
      %v4372 = vpop.f32.mrb[0].mxu0
      %4373 = vmatprep.mubr.bf16.mxu0 %v3887
      %4374 = vmatmul.mubr.bf16.gmra.mrb[0].mxu0 %v3664
      %v4375 = vpop.f32.mrb[0].mxu0
      %v4376 = vadd.f32 0.0, %v4375
      %v4377 = vpop.f32.mrb[0].mxu0
      %v4378 = vpop.f32.mrb[0].mxu0
      %v4379 = vadd.f32 0.0, %v4378
      %v4380 = vpop.f32.mrb[0].mxu0
      %4381 = vmatprep.mubr.bf16.mxu0 %v3899
      %4382 = vmatmul.mubr.bf16.gmra.mrb[0].mxu0 %v3665
      %v4383 = vpop.f32.mrb[0].mxu0
      %v4384 = vadd.f32 0.0, %v4383
      %v4385 = vpop.f32.mrb[0].mxu0
      %v4386 = vpop.f32.mrb[0].mxu0
      %v4387 = vadd.f32 0.0, %v4386
      %v4388 = vpop.f32.mrb[0].mxu0
      %4389 = vmatprep.mubr.bf16.mxu0 %v3911
      %4390 = vmatmul.mubr.bf16.gmra.mrb[0].mxu0 %v3666
      %v4391 = vpop.f32.mrb[0].mxu0
      %v4392 = vadd.f32 0.0, %v4391
      %v4393 = vpop.f32.mrb[0].mxu0
      %v4394 = vpop.f32.mrb[0].mxu0
      %v4395 = vadd.f32 0.0, %v4394
      %v4396 = vpop.f32.mrb[0].mxu0
      %4397 = vmatprep.mubr.bf16.mxu0 %v3923
      %4398 = vmatmul.mubr.bf16.gmra.mrb[0].mxu0 %v3667
      %v4399 = vpop.f32.mrb[0].mxu0
      %v4400 = vadd.f32 0.0, %v4399
      %v4401 = vpop.f32.mrb[0].mxu0
      %v4402 = vpop.f32.mrb[0].mxu0
      %v4403 = vadd.f32 0.0, %v4402
      %v4404 = vpop.f32.mrb[0].mxu0
      %4405 = vdwg.mxu0
      %4406 = vmatprep.subr.bf16.mxu0 0
      %4407 = vmatpush1.bf16.msra.mxu0 %v4213
      %4408 = vmatprep.subr.bf16.mxu0 0
      %4409 = vmatpush1.bf16.msra.mxu0 %v4214
      %4410 = vmatprep.subr.bf16.mxu0 0
      %4411 = vmatpush1.bf16.msra.mxu0 %v4215
      %4412 = vmatprep.subr.bf16.mxu0 0
      %4413 = vmatpush1.bf16.msra.mxu0 %v4216
      %4414 = vmatprep.subr.bf16.mxu0 0
      %4415 = vmatpush1.bf16.msra.mxu0 %v4217
      %4416 = vmatprep.subr.bf16.mxu0 0
      %4417 = vmatpush1.bf16.msra.mxu0 %v4218
      %4418 = vmatprep.subr.bf16.mxu0 0
      %4419 = vmatpush1.bf16.msra.mxu0 %v4219
      %4420 = vmatprep.subr.bf16.mxu0 0
      %4421 = vmatpush1.bf16.msra.mxu0 %v4220
      %4422 = vmatprep.subr.bf16.mxu0 0
      %4423 = vmatpush1.bf16.msra.mxu0 0
      %4424 = vmatprep.subr.bf16.mxu0 0
      %4425 = vmatpush1.bf16.msra.mxu0 0
      %4426 = vmatprep.subr.bf16.mxu0 0
      %4427 = vmatpush1.bf16.msra.mxu0 0
      %4428 = vmatprep.subr.bf16.mxu0 0
      %4429 = vmatpush1.bf16.msra.mxu0 0
      %4430 = vmatprep.subr.bf16.mxu0 0
      %4431 = vmatpush1.bf16.msra.mxu0 0
      %4432 = vmatprep.subr.bf16.mxu0 0
      %4433 = vmatpush1.bf16.msra.mxu0 0
      %4434 = vmatprep.subr.bf16.mxu0 0
      %4435 = vmatpush1.bf16.msra.mxu0 0
      %4436 = vmatprep.subr.bf16.mxu0 0
      %4437 = vmatpush1.bf16.msra.mxu0 0
      %4438 = vmatprep.mubr.bf16.mxu0 0
      %4439 = vmatmul.mubr.bf16.gmra.mrb[0].mxu0 %v3990
      %v4440 = vpop.f32.mrb[0].mxu0
      %v4441 = vadd.f32 %v4280, %v4440
      %v4442 = vpop.f32.mrb[0].mxu0
      %v4443 = vpop.f32.mrb[0].mxu0
      %v4444 = vadd.f32 %v4283, %v4443
      %v4445 = vpop.f32.mrb[0].mxu0
      %4446 = vmatprep.mubr.bf16.mxu0 0
      %4447 = vmatmul.mubr.bf16.gmra.mrb[0].mxu0 %v3993
      %v4448 = vpop.f32.mrb[0].mxu0
      %v4449 = vadd.f32 %v4288, %v4448
      %v4450 = vpop.f32.mrb[0].mxu0
      %v4451 = vpop.f32.mrb[0].mxu0
      %v4452 = vadd.f32 %v4291, %v4451
      %v4453 = vpop.f32.mrb[0].mxu0
      %4454 = vmatprep.mubr.bf16.mxu0 0
      %4455 = vmatmul.mubr.bf16.gmra.mrb[0].mxu0 %v3996
      %v4456 = vpop.f32.mrb[0].mxu0
      %v4457 = vadd.f32 %v4296, %v4456
      %v4458 = vpop.f32.mrb[0].mxu0
      %v4459 = vpop.f32.mrb[0].mxu0
      %v4460 = vadd.f32 %v4299, %v4459
      %v4461 = vpop.f32.mrb[0].mxu0
      %4462 = vmatprep.mubr.bf16.mxu0 0
      %4463 = vmatmul.mubr.bf16.gmra.mrb[0].mxu0 %v3999
      %v4464 = vpop.f32.mrb[0].mxu0
      %v4465 = vadd.f32 %v4304, %v4464
      %v4466 = vpop.f32.mrb[0].mxu0
      %v4467 = vpop.f32.mrb[0].mxu0
      %v4468 = vadd.f32 %v4307, %v4467
      %v4469 = vpop.f32.mrb[0].mxu0
      %4470 = vmatprep.mubr.bf16.mxu0 0
      %4471 = vmatmul.mubr.bf16.gmra.mrb[0].mxu0 %v4002
      %v4472 = vpop.f32.mrb[0].mxu0
      %v4473 = vadd.f32 %v4312, %v4472
      %v4474 = vpop.f32.mrb[0].mxu0
      %v4475 = vpop.f32.mrb[0].mxu0
      %v4476 = vadd.f32 %v4315, %v4475
      %v4477 = vpop.f32.mrb[0].mxu0
      %4478 = vmatprep.mubr.bf16.mxu0 0
      %4479 = vmatmul.mubr.bf16.gmra.mrb[0].mxu0 %v4005
      %v4480 = vpop.f32.mrb[0].mxu0
      %v4481 = vadd.f32 %v4320, %v4480
      %v4482 = vpop.f32.mrb[0].mxu0
      %v4483 = vpop.f32.mrb[0].mxu0
      %v4484 = vadd.f32 %v4323, %v4483
      %v4485 = vpop.f32.mrb[0].mxu0
      %4486 = vmatprep.mubr.bf16.mxu0 0
      %4487 = vmatmul.mubr.bf16.gmra.mrb[0].mxu0 %v4008
      %v4488 = vpop.f32.mrb[0].mxu0
      %v4489 = vadd.f32 %v4328, %v4488
      %v4490 = vpop.f32.mrb[0].mxu0
      %v4491 = vpop.f32.mrb[0].mxu0
      %v4492 = vadd.f32 %v4331, %v4491
      %v4493 = vpop.f32.mrb[0].mxu0
      %4494 = vmatprep.mubr.bf16.mxu0 0
      %4495 = vmatmul.mubr.bf16.gmra.mrb[0].mxu0 %v4011
      %v4496 = vpop.f32.mrb[0].mxu0
      %v4497 = vadd.f32 %v4336, %v4496
      %v4498 = vpop.f32.mrb[0].mxu0
      %v4499 = vpop.f32.mrb[0].mxu0
      %v4500 = vadd.f32 %v4339, %v4499
      %v4501 = vpop.f32.mrb[0].mxu0
      %4502 = vmatprep.mubr.bf16.mxu0 0
      %4503 = vmatmul.mubr.bf16.gmra.mrb[0].mxu0 %v4014
      %v4504 = vpop.f32.mrb[0].mxu0
      %v4505 = vadd.f32 %v4344, %v4504
      %v4506 = vpop.f32.mrb[0].mxu0
      %v4507 = vpop.f32.mrb[0].mxu0
      %v4508 = vadd.f32 %v4347, %v4507
      %v4509 = vpop.f32.mrb[0].mxu0
      %4510 = vmatprep.mubr.bf16.mxu0 0
      %4511 = vmatmul.mubr.bf16.gmra.mrb[0].mxu0 %v4017
      %v4512 = vpop.f32.mrb[0].mxu0
      %v4513 = vadd.f32 %v4352, %v4512
      %v4514 = vpop.f32.mrb[0].mxu0
      %v4515 = vpop.f32.mrb[0].mxu0
      %v4516 = vadd.f32 %v4355, %v4515
      %v4517 = vpop.f32.mrb[0].mxu0
      %4518 = vmatprep.mubr.bf16.mxu0 0
      %4519 = vmatmul.mubr.bf16.gmra.mrb[0].mxu0 %v4020
      %v4520 = vpop.f32.mrb[0].mxu0
      %v4521 = vadd.f32 %v4360, %v4520
      %v4522 = vpop.f32.mrb[0].mxu0
      %v4523 = vpop.f32.mrb[0].mxu0
      %v4524 = vadd.f32 %v4363, %v4523
      %v4525 = vpop.f32.mrb[0].mxu0
      %4526 = vmatprep.mubr.bf16.mxu0 0
      %4527 = vmatmul.mubr.bf16.gmra.mrb[0].mxu0 %v4023
      %v4528 = vpop.f32.mrb[0].mxu0
      %v4529 = vadd.f32 %v4368, %v4528
      %v4530 = vpop.f32.mrb[0].mxu0
      %v4531 = vpop.f32.mrb[0].mxu0
      %v4532 = vadd.f32 %v4371, %v4531
      %v4533 = vpop.f32.mrb[0].mxu0
      %4534 = vmatprep.mubr.bf16.mxu0 0
      %4535 = vmatmul.mubr.bf16.gmra.mrb[0].mxu0 %v4026
      %v4536 = vpop.f32.mrb[0].mxu0
      %v4537 = vadd.f32 %v4376, %v4536
      %v4538 = vpop.f32.mrb[0].mxu0
      %v4539 = vpop.f32.mrb[0].mxu0
      %v4540 = vadd.f32 %v4379, %v4539
      %v4541 = vpop.f32.mrb[0].mxu0
      %4542 = vmatprep.mubr.bf16.mxu0 0
      %4543 = vmatmul.mubr.bf16.gmra.mrb[0].mxu0 %v4029
      %v4544 = vpop.f32.mrb[0].mxu0
      %v4545 = vadd.f32 %v4384, %v4544
      %v4546 = vpop.f32.mrb[0].mxu0
      %v4547 = vpop.f32.mrb[0].mxu0
      %v4548 = vadd.f32 %v4387, %v4547
      %v4549 = vpop.f32.mrb[0].mxu0
      %4550 = vmatprep.mubr.bf16.mxu0 0
      %4551 = vmatmul.mubr.bf16.gmra.mrb[0].mxu0 %v4032
      %v4552 = vpop.f32.mrb[0].mxu0
      %v4553 = vadd.f32 %v4392, %v4552
      %v4554 = vpop.f32.mrb[0].mxu0
      %v4555 = vpop.f32.mrb[0].mxu0
      %v4556 = vadd.f32 %v4395, %v4555
      %v4557 = vpop.f32.mrb[0].mxu0
      %4558 = vmatprep.mubr.bf16.mxu0 0
      %4559 = vmatmul.mubr.bf16.gmra.mrb[0].mxu0 %v4035
      %v4560 = vpop.f32.mrb[0].mxu0
      %v4561 = vadd.f32 %v4400, %v4560
      %v4562 = vpop.f32.mrb[0].mxu0
      %v4563 = vpop.f32.mrb[0].mxu0
      %v4564 = vadd.f32 %v4403, %v4563
      %v4565 = vpop.f32.mrb[0].mxu0
      %4566 = vdwg.mxu0
      %v4567 = vadd.f32 %v3397, %v4441
      %v4568 = vadd.f32 %v3400, %v4444
      %v4569 = vadd.f32 %v3405, %v4449
      %v4570 = vadd.f32 %v3408, %v4452
      %v4571 = vadd.f32 %v3413, %v4457
      %v4572 = vadd.f32 %v3416, %v4460
      %v4573 = vadd.f32 %v3421, %v4465
      %v4574 = vadd.f32 %v3424, %v4468
      %v4575 = vadd.f32 %v3429, %v4473
      %v4576 = vadd.f32 %v3432, %v4476
      %v4577 = vadd.f32 %v3437, %v4481
      %v4578 = vadd.f32 %v3440, %v4484
      %v4579 = vadd.f32 %v3445, %v4489
      %v4580 = vadd.f32 %v3448, %v4492
      %v4581 = vadd.f32 %v3453, %v4497
      %v4582 = vadd.f32 %v3456, %v4500
      %v4583 = vadd.f32 %v3461, %v4505
      %v4584 = vadd.f32 %v3464, %v4508
      %v4585 = vadd.f32 %v3469, %v4513
      %v4586 = vadd.f32 %v3472, %v4516
      %v4587 = vadd.f32 %v3477, %v4521
      %v4588 = vadd.f32 %v3480, %v4524
      %v4589 = vadd.f32 %v3485, %v4529
      %v4590 = vadd.f32 %v3488, %v4532
      %v4591 = vadd.f32 %v3493, %v4537
      %v4592 = vadd.f32 %v3496, %v4540
      %v4593 = vadd.f32 %v3501, %v4545
      %v4594 = vadd.f32 %v3504, %v4548
      %v4595 = vadd.f32 %v3509, %v4553
      %v4596 = vadd.f32 %v3512, %v4556
      %v4597 = vadd.f32 %v3517, %v4561
      %v4598 = vadd.f32 %v3520, %v4564
      %v4599 = vld [vmem:[%s7] sm:$0x1]
      %v4601 = vlaneseq
      %v4602 = vshrl.u32 %v4601, 7
      %v4603 = vsub.s32 0, %v4602
      %v4604 = vrot.slane %v4599, %v4603
      %v4606 = vadd.f32 %v4567, %v4604
      %v4607 = vadd.f32 %v4568, %v4604
      %v4608 = vadd.f32 %v4569, %v4604
      %v4609 = vadd.f32 %v4570, %v4604
      %v4610 = vadd.f32 %v4571, %v4604
      %v4611 = vadd.f32 %v4572, %v4604
      %v4612 = vadd.f32 %v4573, %v4604
      %v4613 = vadd.f32 %v4574, %v4604
      %v4614 = vadd.f32 %v4575, %v4604
      %v4615 = vadd.f32 %v4576, %v4604
      %v4616 = vadd.f32 %v4577, %v4604
      %v4617 = vadd.f32 %v4578, %v4604
      %v4618 = vadd.f32 %v4579, %v4604
      %v4619 = vadd.f32 %v4580, %v4604
      %v4620 = vadd.f32 %v4581, %v4604
      %v4621 = vadd.f32 %v4582, %v4604
      %v4622 = vadd.f32 %v4583, %v4604
      %v4623 = vadd.f32 %v4584, %v4604
      %v4624 = vadd.f32 %v4585, %v4604
      %v4625 = vadd.f32 %v4586, %v4604
      %v4626 = vadd.f32 %v4587, %v4604
      %v4627 = vadd.f32 %v4588, %v4604
      %v4628 = vadd.f32 %v4589, %v4604
      %v4629 = vadd.f32 %v4590, %v4604
      %v4630 = vadd.f32 %v4591, %v4604
      %v4631 = vadd.f32 %v4592, %v4604
      %v4632 = vadd.f32 %v4593, %v4604
      %v4633 = vadd.f32 %v4594, %v4604
      %v4634 = vadd.f32 %v4595, %v4604
      %v4635 = vadd.f32 %v4596, %v4604
      %v4636 = vadd.f32 %v4597, %v4604
      %v4637 = vadd.f32 %v4598, %v4604
      %v4638 = vmax.f32 %v4606, 0.0
      %v4639 = vmax.f32 %v4607, 0.0
      %v4640 = vmax.f32 %v4608, 0.0
      %v4641 = vmax.f32 %v4609, 0.0
      %v4642 = vmax.f32 %v4610, 0.0
      %v4643 = vmax.f32 %v4611, 0.0
      %v4644 = vmax.f32 %v4612, 0.0
      %v4645 = vmax.f32 %v4613, 0.0
      %v4646 = vmax.f32 %v4614, 0.0
      %v4647 = vmax.f32 %v4615, 0.0
      %v4648 = vmax.f32 %v4616, 0.0
      %v4649 = vmax.f32 %v4617, 0.0
      %v4650 = vmax.f32 %v4618, 0.0
      %v4651 = vmax.f32 %v4619, 0.0
      %v4652 = vmax.f32 %v4620, 0.0
      %v4653 = vmax.f32 %v4621, 0.0
      %v4654 = vmax.f32 %v4622, 0.0
      %v4655 = vmax.f32 %v4623, 0.0
      %v4656 = vmax.f32 %v4624, 0.0
      %v4657 = vmax.f32 %v4625, 0.0
      %v4658 = vmax.f32 %v4626, 0.0
      %v4659 = vmax.f32 %v4627, 0.0
      %v4660 = vmax.f32 %v4628, 0.0
      %v4661 = vmax.f32 %v4629, 0.0
      %v4662 = vmax.f32 %v4630, 0.0
      %v4663 = vmax.f32 %v4631, 0.0
      %v4664 = vmax.f32 %v4632, 0.0
      %v4665 = vmax.f32 %v4633, 0.0
      %v4666 = vmax.f32 %v4634, 0.0
      %v4667 = vmax.f32 %v4635, 0.0
      %v4668 = vmax.f32 %v4636, 0.0
      %v4669 = vmax.f32 %v4637, 0.0
      %v4670 = vpack.c.bf16 %v4639, %v4638
      %v4671 = vpack.c.bf16 %v4641, %v4640
      %v4672 = vpack.c.bf16 %v4643, %v4642
      %v4673 = vpack.c.bf16 %v4645, %v4644
      %v4674 = vpack.c.bf16 %v4647, %v4646
      %v4675 = vpack.c.bf16 %v4649, %v4648
      %v4676 = vpack.c.bf16 %v4651, %v4650
      %v4677 = vpack.c.bf16 %v4653, %v4652
      %v4678 = vpack.c.bf16 %v4655, %v4654
      %v4679 = vpack.c.bf16 %v4657, %v4656
      %v4680 = vpack.c.bf16 %v4659, %v4658
      %v4681 = vpack.c.bf16 %v4661, %v4660
      %v4682 = vpack.c.bf16 %v4663, %v4662
      %v4683 = vpack.c.bf16 %v4665, %v4664
      %v4684 = vpack.c.bf16 %v4667, %v4666
      %v4685 = vpack.c.bf16 %v4669, %v4668
      %v4686 = vld [vmem:[%s3] sm:$0xf]
      %v4687 = vld [vmem:[%s3 + $0x4] sm:$0xf]
      %v4688 = vld [vmem:[%s3 + $0x8] sm:$0xf]
      %v4689 = vld [vmem:[%s3 + $0xc] sm:$0xf]
      %v4690 = vld [vmem:[%s3 + $0x10] sm:$0xf]
      %v4691 = vld [vmem:[%s3 + $0x14] sm:$0xf]
      %v4692 = vld [vmem:[%s3 + $0x18] sm:$0xf]
      %v4693 = vld [vmem:[%s3 + $0x1c] sm:$0xf]
      %v4694 = vld [vmem:[%s3 + $0x20] sm:$0xf]
      %v4695 = vld [vmem:[%s3 + $0x24] sm:$0xf]
      %v4696 = vld [vmem:[%s3 + $0x28] sm:$0xf]
      %v4697 = vld [vmem:[%s3 + $0x2c] sm:$0xf]
      %v4698 = vld [vmem:[%s3 + $0x30] sm:$0xf]
      %v4699 = vld [vmem:[%s3 + $0x34] sm:$0xf]
      %v4700 = vld [vmem:[%s3 + $0x38] sm:$0xf]
      %v4701 = vld [vmem:[%s3 + $0x3c] sm:$0xf]
      %v4718 = vunpack.c.l.b16 %v4686
      %v4719 = vunpack.c.l.b16 %v4687
      %v4720 = vunpack.c.l.b16 %v4688
      %v4721 = vunpack.c.l.b16 %v4689
      %v4722 = vunpack.c.l.b16 %v4690
      %v4723 = vunpack.c.l.b16 %v4691
      %v4724 = vunpack.c.l.b16 %v4692
      %v4725 = vunpack.c.l.b16 %v4693
      %v4726 = vunpack.c.l.b16 %v4694
      %v4727 = vunpack.c.l.b16 %v4695
      %v4728 = vunpack.c.l.b16 %v4696
      %v4729 = vunpack.c.l.b16 %v4697
      %v4730 = vunpack.c.l.b16 %v4698
      %v4731 = vunpack.c.l.b16 %v4699
      %v4732 = vunpack.c.l.b16 %v4700
      %v4733 = vunpack.c.l.b16 %v4701
      %v4734 = vpack.c.b16 %v4719, %v4718
      %v4735 = vpack.c.b16 %v4721, %v4720
      %v4736 = vpack.c.b16 %v4723, %v4722
      %v4737 = vpack.c.b16 %v4725, %v4724
      %v4738 = vpack.c.b16 %v4727, %v4726
      %v4739 = vpack.c.b16 %v4729, %v4728
      %v4740 = vpack.c.b16 %v4731, %v4730
      %v4741 = vpack.c.b16 %v4733, %v4732
      %4750 = vmatprep.subr.bf16.mxu0 0
      %4751 = vmatpush1.bf16.msra.mxu0 %v4734
      %4752 = vmatprep.subr.bf16.mxu0 0
      %4753 = vmatpush1.bf16.msra.mxu0 %v4735
      %4754 = vmatprep.subr.bf16.mxu0 0
      %4755 = vmatpush1.bf16.msra.mxu0 %v4736
      %4756 = vmatprep.subr.bf16.mxu0 0
      %4757 = vmatpush1.bf16.msra.mxu0 %v4737
      %4758 = vmatprep.subr.bf16.mxu0 0
      %4759 = vmatpush1.bf16.msra.mxu0 %v4738
      %4760 = vmatprep.subr.bf16.mxu0 0
      %4761 = vmatpush1.bf16.msra.mxu0 %v4739
      %4762 = vmatprep.subr.bf16.mxu0 0
      %4763 = vmatpush1.bf16.msra.mxu0 %v4740
      %4764 = vmatprep.subr.bf16.mxu0 0
      %4765 = vmatpush1.bf16.msra.mxu0 %v4741
      %4766 = vmatprep.subr.bf16.mxu0 0
      %4767 = vmatpush1.bf16.msra.mxu0 0
      %4768 = vmatprep.subr.bf16.mxu0 0
      %4769 = vmatpush1.bf16.msra.mxu0 0
      %4770 = vmatprep.subr.bf16.mxu0 0
      %4771 = vmatpush1.bf16.msra.mxu0 0
      %4772 = vmatprep.subr.bf16.mxu0 0
      %4773 = vmatpush1.bf16.msra.mxu0 0
      %4774 = vmatprep.subr.bf16.mxu0 0
      %4775 = vmatpush1.bf16.msra.mxu0 0
      %4776 = vmatprep.subr.bf16.mxu0 0
      %4777 = vmatpush1.bf16.msra.mxu0 0
      %4778 = vmatprep.subr.bf16.mxu0 0
      %4779 = vmatpush1.bf16.msra.mxu0 0
      %4780 = vmatprep.subr.bf16.mxu0 0
      %4781 = vmatpush1.bf16.msra.mxu0 0
      %4782 = vmatprep.mubr.bf16.mxu0 0
      %4783 = vmatmul.mubr.bf16.gmra.mrb[0].mxu0 %v4670
      %v4784 = vpop.f32.mrb[0].mxu0
      %v4785 = vadd.f32 %v568, %v4784
      %v4786 = vpop.f32.mrb[0].mxu0
      %v4787 = vpop.f32.mrb[0].mxu0
      %v4788 = vadd.f32 %v572, %v4787
      %v4789 = vpop.f32.mrb[0].mxu0
      %4790 = vmatprep.mubr.bf16.mxu0 0
      %4791 = vmatmul.mubr.bf16.gmra.mrb[0].mxu0 %v4671
      %v4792 = vpop.f32.mrb[0].mxu0
      %v4793 = vadd.f32 %v578, %v4792
      %v4794 = vpop.f32.mrb[0].mxu0
      %v4795 = vpop.f32.mrb[0].mxu0
      %v4796 = vadd.f32 %v582, %v4795
      %v4797 = vpop.f32.mrb[0].mxu0
      %4798 = vmatprep.mubr.bf16.mxu0 0
      %4799 = vmatmul.mubr.bf16.gmra.mrb[0].mxu0 %v4672
      %v4800 = vpop.f32.mrb[0].mxu0
      %v4801 = vadd.f32 %v588, %v4800
      %v4802 = vpop.f32.mrb[0].mxu0
      %v4803 = vpop.f32.mrb[0].mxu0
      %v4804 = vadd.f32 %v592, %v4803
      %v4805 = vpop.f32.mrb[0].mxu0
      %4806 = vmatprep.mubr.bf16.mxu0 0
      %4807 = vmatmul.mubr.bf16.gmra.mrb[0].mxu0 %v4673
      %v4808 = vpop.f32.mrb[0].mxu0
      %v4809 = vadd.f32 %v598, %v4808
      %v4810 = vpop.f32.mrb[0].mxu0
      %v4811 = vpop.f32.mrb[0].mxu0
      %v4812 = vadd.f32 %v602, %v4811
      %v4813 = vpop.f32.mrb[0].mxu0
      %4814 = vmatprep.mubr.bf16.mxu0 0
      %4815 = vmatmul.mubr.bf16.gmra.mrb[0].mxu0 %v4674
      %v4816 = vpop.f32.mrb[0].mxu0
      %v4817 = vadd.f32 %v608, %v4816
      %v4818 = vpop.f32.mrb[0].mxu0
      %v4819 = vpop.f32.mrb[0].mxu0
      %v4820 = vadd.f32 %v612, %v4819
      %v4821 = vpop.f32.mrb[0].mxu0
      %4822 = vmatprep.mubr.bf16.mxu0 0
      %4823 = vmatmul.mubr.bf16.gmra.mrb[0].mxu0 %v4675
      %v4824 = vpop.f32.mrb[0].mxu0
      %v4825 = vadd.f32 %v618, %v4824
      %v4826 = vpop.f32.mrb[0].mxu0
      %v4827 = vpop.f32.mrb[0].mxu0
      %v4828 = vadd.f32 %v622, %v4827
      %v4829 = vpop.f32.mrb[0].mxu0
      %4830 = vmatprep.mubr.bf16.mxu0 0
      %4831 = vmatmul.mubr.bf16.gmra.mrb[0].mxu0 %v4676
      %v4832 = vpop.f32.mrb[0].mxu0
      %v4833 = vadd.f32 %v628, %v4832
      %v4834 = vpop.f32.mrb[0].mxu0
      %v4835 = vpop.f32.mrb[0].mxu0
      %v4836 = vadd.f32 %v632, %v4835
      %v4837 = vpop.f32.mrb[0].mxu0
      %4838 = vmatprep.mubr.bf16.mxu0 0
      %4839 = vmatmul.mubr.bf16.gmra.mrb[0].mxu0 %v4677
      %v4840 = vpop.f32.mrb[0].mxu0
      %v4841 = vadd.f32 %v638, %v4840
      %v4842 = vpop.f32.mrb[0].mxu0
      %v4843 = vpop.f32.mrb[0].mxu0
      %v4844 = vadd.f32 %v642, %v4843
      %v4845 = vpop.f32.mrb[0].mxu0
      %4846 = vmatprep.mubr.bf16.mxu0 0
      %4847 = vmatmul.mubr.bf16.gmra.mrb[0].mxu0 %v4678
      %v4848 = vpop.f32.mrb[0].mxu0
      %v4849 = vadd.f32 %v648, %v4848
      %v4850 = vpop.f32.mrb[0].mxu0
      %v4851 = vpop.f32.mrb[0].mxu0
      %v4852 = vadd.f32 %v652, %v4851
      %v4853 = vpop.f32.mrb[0].mxu0
      %4854 = vmatprep.mubr.bf16.mxu0 0
      %4855 = vmatmul.mubr.bf16.gmra.mrb[0].mxu0 %v4679
      %v4856 = vpop.f32.mrb[0].mxu0
      %v4857 = vadd.f32 %v658, %v4856
      %v4858 = vpop.f32.mrb[0].mxu0
      %v4859 = vpop.f32.mrb[0].mxu0
      %v4860 = vadd.f32 %v662, %v4859
      %v4861 = vpop.f32.mrb[0].mxu0
      %4862 = vmatprep.mubr.bf16.mxu0 0
      %4863 = vmatmul.mubr.bf16.gmra.mrb[0].mxu0 %v4680
      %v4864 = vpop.f32.mrb[0].mxu0
      %v4865 = vadd.f32 %v668, %v4864
      %v4866 = vpop.f32.mrb[0].mxu0
      %v4867 = vpop.f32.mrb[0].mxu0
      %v4868 = vadd.f32 %v672, %v4867
      %v4869 = vpop.f32.mrb[0].mxu0
      %4870 = vmatprep.mubr.bf16.mxu0 0
      %4871 = vmatmul.mubr.bf16.gmra.mrb[0].mxu0 %v4681
      %v4872 = vpop.f32.mrb[0].mxu0
      %v4873 = vadd.f32 %v678, %v4872
      %v4874 = vpop.f32.mrb[0].mxu0
      %v4875 = vpop.f32.mrb[0].mxu0
      %v4876 = vadd.f32 %v682, %v4875
      %v4877 = vpop.f32.mrb[0].mxu0
      %4878 = vmatprep.mubr.bf16.mxu0 0
      %4879 = vmatmul.mubr.bf16.gmra.mrb[0].mxu0 %v4682
      %v4880 = vpop.f32.mrb[0].mxu0
      %v4881 = vadd.f32 %v688, %v4880
      %v4882 = vpop.f32.mrb[0].mxu0
      %v4883 = vpop.f32.mrb[0].mxu0
      %v4884 = vadd.f32 %v692, %v4883
      %v4885 = vpop.f32.mrb[0].mxu0
      %4886 = vmatprep.mubr.bf16.mxu0 0
      %4887 = vmatmul.mubr.bf16.gmra.mrb[0].mxu0 %v4683
      %v4888 = vpop.f32.mrb[0].mxu0
      %v4889 = vadd.f32 %v698, %v4888
      %v4890 = vpop.f32.mrb[0].mxu0
      %v4891 = vpop.f32.mrb[0].mxu0
      %v4892 = vadd.f32 %v702, %v4891
      %v4893 = vpop.f32.mrb[0].mxu0
      %4894 = vmatprep.mubr.bf16.mxu0 0
      %4895 = vmatmul.mubr.bf16.gmra.mrb[0].mxu0 %v4684
      %v4896 = vpop.f32.mrb[0].mxu0
      %v4897 = vadd.f32 %v708, %v4896
      %v4898 = vpop.f32.mrb[0].mxu0
      %v4899 = vpop.f32.mrb[0].mxu0
      %v4900 = vadd.f32 %v712, %v4899
      %v4901 = vpop.f32.mrb[0].mxu0
      %4902 = vmatprep.mubr.bf16.mxu0 0
      %4903 = vmatmul.mubr.bf16.gmra.mrb[0].mxu0 %v4685
      %v4904 = vpop.f32.mrb[0].mxu0
      %v4905 = vadd.f32 %v718, %v4904
      %v4906 = vpop.f32.mrb[0].mxu0
      %v4907 = vpop.f32.mrb[0].mxu0
      %v4908 = vadd.f32 %v722, %v4907
      %v4909 = vpop.f32.mrb[0].mxu0
      %4910 = vdwg.mxu0
      %4911 = vst [vmem:[%s305] sm:$0xff] %v4785
      %4912 = vst [vmem:[%s305 + $0x8] sm:$0xff] %v4788
      %4913 = vst [vmem:[%s305 + $0x10] sm:$0xff] %v4793
      %4914 = vst [vmem:[%s305 + $0x18] sm:$0xff] %v4796
      %4915 = vst [vmem:[%s305 + $0x20] sm:$0xff] %v4801
      %4916 = vst [vmem:[%s305 + $0x28] sm:$0xff] %v4804
      %4917 = vst [vmem:[%s305 + $0x30] sm:$0xff] %v4809
      %4918 = vst [vmem:[%s305 + $0x38] sm:$0xff] %v4812
      %4919 = vst [vmem:[%s305 + $0x40] sm:$0xff] %v4817
      %4920 = vst [vmem:[%s305 + $0x48] sm:$0xff] %v4820
      %4921 = vst [vmem:[%s305 + $0x50] sm:$0xff] %v4825
      %4922 = vst [vmem:[%s305 + $0x58] sm:$0xff] %v4828
      %4923 = vst [vmem:[%s305 + $0x60] sm:$0xff] %v4833
      %4924 = vst [vmem:[%s305 + $0x68] sm:$0xff] %v4836
      %4925 = vst [vmem:[%s305 + $0x70] sm:$0xff] %v4841
      %4926 = vst [vmem:[%s305 + $0x78] sm:$0xff] %v4844
      %4927 = vst [vmem:[%s305 + $0x80] sm:$0xff] %v4849
      %4928 = vst [vmem:[%s305 + $0x88] sm:$0xff] %v4852
      %4929 = vst [vmem:[%s305 + $0x90] sm:$0xff] %v4857
      %4930 = vst [vmem:[%s305 + $0x98] sm:$0xff] %v4860
      %4931 = vst [vmem:[%s305 + $0xa0] sm:$0xff] %v4865
      %4932 = vst [vmem:[%s305 + $0xa8] sm:$0xff] %v4868
      %4933 = vst [vmem:[%s305 + $0xb0] sm:$0xff] %v4873
      %4934 = vst [vmem:[%s305 + $0xb8] sm:$0xff] %v4876
      %4935 = vst [vmem:[%s305 + $0xc0] sm:$0xff] %v4881
      %4936 = vst [vmem:[%s305 + $0xc8] sm:$0xff] %v4884
      %4937 = vst [vmem:[%s305 + $0xd0] sm:$0xff] %v4889
      %4938 = vst [vmem:[%s305 + $0xd8] sm:$0xff] %v4892
      %4939 = vst [vmem:[%s305 + $0xe0] sm:$0xff] %v4897
      %4940 = vst [vmem:[%s305 + $0xe8] sm:$0xff] %v4900
      %4941 = vst [vmem:[%s305 + $0xf0] sm:$0xff] %v4905
      %4942 = vst [vmem:[%s305 + $0xf8] sm:$0xff] %v4908
      %p4943 = scmp.lt.s32.totalorder %s19, 1
      %s4944 = scalar_select %p4943, %s19, 1
      %s4945 = smul.addr %s4944, 32
      %s4946 = smul.addr %s4945, 8
      %s4947 = scalar_lea.vmem %s8, %s4946
      // Predicated region
      $region53: #{preact_bottleneck_forward.1} parent=51 // pred_check
        %p4948 = pneg %p210
      $region54: #{preact_bottleneck_forward.1} parent=51 // pred_check_branch
        %4950 = sbr.rel (%p4948) target = $region56
      $region55: #{preact_bottleneck_forward.1} parent=51 // pred_region
        _
      $region56: #{preact_bottleneck_forward.1} parent=51 // pred_fallthru
        _
    $region52: #{preact_bottleneck_forward.1} parent=5 // pred_fallthru
      _
    %p4951 = scmp.le.s32.totalorder 2, %s14
    // Predicated region
    $region57: #{preact_bottleneck_forward.1} parent=5 // pred_check
      %p4952 = pneg %p4951
    $region58: #{preact_bottleneck_forward.1} parent=5 // pred_check_branch
      %4954 = sbr.rel (%p4952) target = $region60
    $region59: #{preact_bottleneck_forward.1} parent=5 // pred_region
      %s4955 = ssub.s32 %s14, 2
      // Predicated region
      $region61: #{preact_bottleneck_forward.1} parent=59 // pred_check
        %p4956 = pneg %p216
      $region62: #{preact_bottleneck_forward.1} parent=59 // pred_check_branch
        %4958 = sbr.rel (%p4956) target = $region64
      $region63: #{preact_bottleneck_forward.1} parent=59 // pred_region
        %p4959 = scmp.lt.s32.totalorder %s20, 1
        %s4960 = scalar_select %p4959, %s20, 1
        %s4961 = smul.addr %s4960, 32
        %s4962 = smul.addr %s4961, 8
        %s4963 = scalar_lea.vmem %s8, %s4962
      $region64: #{preact_bottleneck_forward.1} parent=59 // pred_fallthru
        _
    $region60: #{preact_bottleneck_forward.1} parent=5 // pred_fallthru
      _
  $region6: #{preact_bottleneck_forward.1} parent=0 // loop_footer
    %s18 = sadd.s32 1, %s14
  $region7: #{preact_bottleneck_forward.1} parent=0 // loop_footer_branch
    %13 = sbr.rel target = $region3
  $region8: #{preact_bottleneck_forward.1} parent=0 // loop_exit
    _

</llo_original>
